<compile_context>
chip_gen: v5e
topology: v5e:2x2
jax: 0.10.0
libtpu: 0.0.40
codegen_flags: <defaults>
</compile_context>

<pallas_src>
import functools

import jax
import jax.numpy as jnp
from jax import lax
from jax.experimental import pallas as pl
from jax.experimental.pallas import tpu as pltpu

NEG_INF = -1e9  # additive mask value; all mask math stays in f32


def _make_block_kernel(Bt, B, S, H, NH, F):
    HD = H // NH

    def layer_norm(h, g_ref, b_ref):
        # statistics in f32 (accuracy; v5e has no bf16 VPU/EUP)
        mu = jnp.mean(h, axis=-1, keepdims=True)
        var = jnp.mean(jnp.square(h - mu), axis=-1, keepdims=True)
        return (h - mu) * lax.rsqrt(var + 1e-5) * g_ref[0] + b_ref[0]

    def kernel(x_ref, keybias_ref, sel_ref, causal_ref,
               ln1g_ref, ln1b_ref, wqkv_ref, bqkv_ref, wo_ref, bo_ref,
               ln2g_ref, ln2b_ref, w1_ref, b1_ref, w2_ref, b2_ref,
               lnfg_ref, lnfb_ref, o_ref, attn_scratch):
        # Flattened residual stream over the whole batch tile: (Bt*S, H), f32.
        x = x_ref[...].reshape(Bt * S, H).astype(jnp.float32)
        causal = causal_ref[...]                     # (S, S) f32, shared constant
        sel = sel_ref[...]                           # (B, S) f32 one-hot selector

        # ---- self-attention: QKV projection shared across all rows ----
        h1 = layer_norm(x, ln1g_ref, ln1b_ref)
        qkv = jnp.dot(h1.astype(jnp.bfloat16), wqkv_ref[...],
                      preferred_element_type=jnp.float32) + bqkv_ref[0]  # (Bt*S, 3H)
        qkv_b = qkv.astype(jnp.bfloat16)

        # Per-(row, head) attention (softmax is per example; 1/sqrt(HD) is
        # already folded into the Q weight columns).
        for r in range(Bt):                          # small static unroll
            bias_r = causal + keybias_ref[r]         # (S,S) + (1,S) -> (S,S)
            base = r * S
            for hh in range(NH):                     # static 128-lane slices
                q = qkv_b[base:base + S, hh * HD:(hh + 1) * HD]
                k = qkv_b[base:base + S, H + hh * HD:H + (hh + 1) * HD]
                v = qkv_b[base:base + S, 2 * H + hh * HD:2 * H + (hh + 1) * HD]
                s = jnp.einsum('qd,kd->qk', q, k,
                               preferred_element_type=jnp.float32) + bias_r
                m = jnp.max(s, axis=-1, keepdims=True)
                p = jnp.exp(s - m)
                l = jnp.sum(p, axis=-1, keepdims=True)
                probs = p * pl.reciprocal(l, approx=True)       # EUP, not VALU
                attn_scratch[pl.ds(base, S), pl.ds(hh * HD, HD)] = jnp.dot(
                    probs.astype(jnp.bfloat16), v,
                    preferred_element_type=jnp.float32)

        attn = attn_scratch[...]                     # (Bt*S, H) f32
        attn_out = jnp.dot(attn.astype(jnp.bfloat16), wo_ref[...],
                           preferred_element_type=jnp.float32) + bo_ref[0]
        x = x + attn_out

        # ---- MLP over all rows at once ----
        h2 = layer_norm(x, ln2g_ref, ln2b_ref)
        ff = jnp.dot(h2.astype(jnp.bfloat16), w1_ref[...],
                     preferred_element_type=jnp.float32) + b1_ref[0]
        ff = jax.nn.gelu(ff, approximate=True)       # GPT2 gelu_new (tanh approx)
        ff = jnp.dot(ff.astype(jnp.bfloat16), w2_ref[...],
                     preferred_element_type=jnp.float32) + b2_ref[0]
        x = x + ff

        # ---- final layernorm (GPT2 ln_f) ----
        final = layer_norm(x, lnfg_ref, lnfb_ref)    # (Bt*S, H) f32

        # ---- fused GPT2/CodeGen pooling: hidden[:, sequence_lengths, :] ----
        # Exact PyTorch advanced-indexing semantics -> (B, B, H); one-hot MXU
        # gather per row of the tile: (B,S) @ (S,H) -> (B,H).
        for r in range(Bt):
            o_ref[r] = jnp.dot(sel, final[r * S:(r + 1) * S, :],
                               preferred_element_type=jnp.float32
                               ).astype(o_ref.dtype)

    return kernel


def _pick_block_batch(B, S, H, F, budget_bytes=40 << 20):
    """Largest divisor of B with >=2 grid steps that fits the VMEM budget.

    Counts everything that is actually resident per step: double-buffered
    streamed inputs/output, single-buffered weights, and the f32 in-kernel
    intermediates.  Prefers an even grid-step count (v7x 2-TC balance).
    The 40 MiB default is conservative for v7x (64 MiB physical); on
    v5e/v6e (128 MiB VMEM) it can be raised to get fatter steps.
    """
    def est(bt):
        toks = bt * S
        x_buf = 2 * toks * H * 2                      # bf16 embeddings, 2 bufs
        kb_buf = 2 * bt * S * 4                       # key-pad bias, 2 bufs
        out_buf = 2 * bt * B * H * 4                  # pooled (Bt,B,H) f32, 2 bufs
        weights = (B * S * 4 + S * S * 4              # sel, causal
                   + H * 3 * H * 2 + 3 * H * 4        # wqkv, bqkv
                   + H * H * 2 + H * 4                # wo, bo
                   + H * F * 2 + F * 4                # w1, b1
                   + F * H * 2 + H * 4                # w2, b2
                   + 6 * H * 4)                       # LN gamma/beta
        # f32 intermediates: residual/attn-scratch/LN, qkv, ff, scores
        live = 3 * toks * H * 4 + toks * 3 * H * 4 + toks * F * 4 + 2 * S * S * 4
        return x_buf + kb_buf + out_buf + weights + live

    max_bt = B // 2 if B >= 2 else 1
    candidates = [d for d in range(1, max_bt + 1)
                  if B % d == 0 and est(d) <= budget_bytes]
    if not candidates:
        return 1
    even = [d for d in candidates if (B // d) % 2 == 0]
    pool = even if even else candidates
    return max(pool)


def feature_extractor_forward(input_ids, attention_mask, params, pad_token_id,
                              block_batch=None):
    """Reproduces FeatureExtractor.forward for the GPT2/CodeGen config branch."""
    B, S = input_ids.shape
    H = params['wte'].shape[-1]
    NH = params['num_heads']
    F = params['w1'].shape[-1]
    HD = H // NH
    assert H % 128 == 0, "hidden dim must be lane-dense (multiple of 128)"
    assert H % NH == 0
    # TODO(synk): support HD < 128 (real GPT-2: HD=64) by processing head
    # pairs together so lane slices stay 128-aligned.
    assert HD % 128 == 0

    Bt = _pick_block_batch(B, S, H, F) if block_batch is None else block_batch
    assert B % Bt == 0

    # ---- wrapper glue: embeddings, split masks, pooling selector ----
    # TODO(synk): fuse the wte gather into the kernel (scalar-prefetch the
    # token ids + manual DMA row gather from HBM) to avoid this (B,S,H)
    # bf16 HBM roundtrip.
    pos = jnp.arange(S, dtype=jnp.int32)
    x_emb = (params['wte'][input_ids] + params['wpe'][pos][None, :, :]
             ).astype(jnp.bfloat16)                                   # (B,S,H) bf16

    # key-padding bias per row, (B,1,S) f32; causal bias shared, (S,S) f32.
    key_bias = ((1.0 - attention_mask.astype(jnp.float32)) * NEG_INF)[:, None, :]
    causal = jnp.where(pos[None, :] <= pos[:, None], 0.0, NEG_INF
                       ).astype(jnp.float32)                          # (S,S)

    # Pooling selector.  Note: an all-pad row yields seq_len = -1 and an
    # all-zero selector (PyTorch's index -1 would take the last position).
    seq_len = jnp.sum((input_ids != pad_token_id).astype(jnp.int32), axis=-1) - 1
    sel = (pos[None, :] == seq_len[:, None]).astype(jnp.float32)      # (B,S)

    # Fold the attention scale into the Q columns of the QKV projection.
    scale = 1.0 / (HD ** 0.5)
    wqkv = params['wqkv'].at[:, :H].multiply(scale)
    bqkv = params['bqkv'].at[:, :H].multiply(scale)

    # bf16 matmul weights, f32 norms/biases
    weight_list = [
        params['ln1_g'], params['ln1_b'],
        wqkv.astype(jnp.bfloat16), bqkv,
        params['wo'].astype(jnp.bfloat16), params['bo'],
        params['ln2_g'], params['ln2_b'],
        params['w1'].astype(jnp.bfloat16), params['b1'],
        params['w2'].astype(jnp.bfloat16), params['b2'],
        params['lnf_g'], params['lnf_b'],
    ]

    def _const_spec(arr):
        # constant index map -> DMA'd once; single-buffer to halve weight VMEM
        return pl.BlockSpec(arr.shape, lambda b, n=arr.ndim: (0,) * n,
                            pipeline_mode=pl.Buffered(1))

    in_specs = [
        pl.BlockSpec((Bt, S, H), lambda b: (b, 0, 0)),   # x_emb (bf16), depth-2
        pl.BlockSpec((Bt, 1, S), lambda b: (b, 0, 0)),   # key-pad bias (f32)
        _const_spec(sel),                                # pooling selector
        _const_spec(causal),                             # causal bias (shared)
    ] + [_const_spec(w) for w in weight_list]

    kernel = _make_block_kernel(Bt, B, S, H, NH, F)

    out = pl.pallas_call(
        kernel,
        out_shape=jax.ShapeDtypeStruct((B, B, H), jnp.float32),
        grid_spec=pltpu.PrefetchScalarGridSpec(
            num_scalar_prefetch=0,
            grid=(B // Bt,),
            in_specs=in_specs,
            out_specs=pl.BlockSpec((Bt, B, H), lambda b: (b, 0, 0)),
            scratch_shapes=[pltpu.VMEM((Bt * S, H), jnp.float32)],
        ),
        compiler_params=pltpu.CompilerParams(
            dimension_semantics=("parallel",),
            # Safe under v7x's 64 MiB physical VMEM; raise toward ~96 MiB on
            # v5e/v6e (128 MiB) together with a larger _pick_block_batch budget.
            vmem_limit_bytes=48 * 1024 * 1024),
    )(x_emb, key_bias, sel, causal, *weight_list)

    # Exact semantics of `outputs.last_hidden_state[:, sequence_lengths, :]`
    # (advanced indexing on dim 1) -> (B, B, H), already fused in-kernel.
    return out
    # TODO(synk): RoBERTa / T5 / PLBart pooling branches and the OpenAI
    # embedding-API path are not representable as on-device kernels.


if __name__ == "__main__":
    B, S, H, NH, F, V = 4, 8, 256, 2, 1024, 50   # HD = 128 (lane-aligned heads)
    PAD_ID = 0

    key = jax.random.PRNGKey(0)
    ks = jax.random.split(key, 8)

    def init(k, shape, scale=0.02):
        return scale * jax.random.normal(k, shape, dtype=jnp.float32)

    params = {
        'num_heads': NH,
        'wte': init(ks[0], (V, H)),
        'wpe': init(ks[1], (S, H)),
        'ln1_g': jnp.ones((1, H), jnp.float32),
        'ln1_b': jnp.zeros((1, H), jnp.float32),
        'wqkv': init(ks[2], (H, 3 * H)),
        'bqkv': jnp.zeros((1, 3 * H), jnp.float32),
        'wo': init(ks[3], (H, H)),
        'bo': jnp.zeros((1, H), jnp.float32),
        'ln2_g': jnp.ones((1, H), jnp.float32),
        'ln2_b': jnp.zeros((1, H), jnp.float32),
        'w1': init(ks[4], (H, F)),
        'b1': jnp.zeros((1, F), jnp.float32),
        'w2': init(ks[5], (F, H)),
        'b2': jnp.zeros((1, H), jnp.float32),
        'lnf_g': jnp.ones((1, H), jnp.float32),
        'lnf_b': jnp.zeros((1, H), jnp.float32),
    }

    # Deterministic tokenized batch with right padding (pad_token_id = 0).
    lens = jnp.array([5, 7, 3, 8], dtype=jnp.int32)
    raw_ids = jax.random.randint(ks[6], (B, S), 1, V, dtype=jnp.int32)
    pos = jnp.arange(S, dtype=jnp.int32)[None, :]
    input_ids = jnp.where(pos < lens[:, None], raw_ids, PAD_ID)
    attention_mask = (pos < lens[:, None]).astype(jnp.int32)

    fwd = jax.jit(functools.partial(feature_extractor_forward,
                                    params=params, pad_token_id=PAD_ID))
    out = fwd(input_ids, attention_mask)
    jax.block_until_ready(out)
    assert out.shape == (B, B, H) and out.dtype == jnp.float32
    assert bool(jnp.all(jnp.isfinite(out)))
    print("KERNEL_OK")
</pallas_src>

<mosaic_0001>
module attributes {stable_mosaic.version = 11 : i64} {
  func.func @kernel(%arg0: i32, %arg1: memref<2x8x256xbf16, #tpu.memory_space<vmem>>, %arg2: memref<2x1x8xf32, #tpu.memory_space<vmem>>, %arg3: memref<4x8xf32, #tpu.memory_space<vmem>>, %arg4: memref<8x8xf32, #tpu.memory_space<vmem>>, %arg5: memref<1x256xf32, #tpu.memory_space<vmem>>, %arg6: memref<1x256xf32, #tpu.memory_space<vmem>>, %arg7: memref<256x768xbf16, #tpu.memory_space<vmem>>, %arg8: memref<1x768xf32, #tpu.memory_space<vmem>>, %arg9: memref<256x256xbf16, #tpu.memory_space<vmem>>, %arg10: memref<1x256xf32, #tpu.memory_space<vmem>>, %arg11: memref<1x256xf32, #tpu.memory_space<vmem>>, %arg12: memref<1x256xf32, #tpu.memory_space<vmem>>, %arg13: memref<256x1024xbf16, #tpu.memory_space<vmem>>, %arg14: memref<1x1024xf32, #tpu.memory_space<vmem>>, %arg15: memref<1024x256xbf16, #tpu.memory_space<vmem>>, %arg16: memref<1x256xf32, #tpu.memory_space<vmem>>, %arg17: memref<1x256xf32, #tpu.memory_space<vmem>>, %arg18: memref<1x256xf32, #tpu.memory_space<vmem>>, %arg19: memref<2x4x256xf32, #tpu.memory_space<vmem>>, %arg20: memref<16x256xf32, #tpu.memory_space<vmem>>) attributes {dimension_semantics = [#tpu.dimension_semantics<parallel>], iteration_bounds = array<i64: 2>, scalar_prefetch = 0 : i64, scratch_operands = 1 : i64, tpu.core_type = #tpu.core_type<tc>, window_params = [{transform_indices = @transform_0, window_bounds = array<i64: 2, 8, 256>}, {transform_indices = @transform_1, window_bounds = array<i64: 2, 1, 8>}, {pipeline_mode = #tpu.pipeline_mode<synchronous>, transform_indices = @transform_2, window_bounds = array<i64: 4, 8>}, {pipeline_mode = #tpu.pipeline_mode<synchronous>, transform_indices = @transform_3, window_bounds = array<i64: 8, 8>}, {pipeline_mode = #tpu.pipeline_mode<synchronous>, transform_indices = @transform_4, window_bounds = array<i64: 1, 256>}, {pipeline_mode = #tpu.pipeline_mode<synchronous>, transform_indices = @transform_5, window_bounds = array<i64: 1, 256>}, {pipeline_mode = #tpu.pipeline_mode<synchronous>, transform_indices = @transform_6, window_bounds = array<i64: 256, 768>}, {pipeline_mode = #tpu.pipeline_mode<synchronous>, transform_indices = @transform_7, window_bounds = array<i64: 1, 768>}, {pipeline_mode = #tpu.pipeline_mode<synchronous>, transform_indices = @transform_8, window_bounds = array<i64: 256, 256>}, {pipeline_mode = #tpu.pipeline_mode<synchronous>, transform_indices = @transform_9, window_bounds = array<i64: 1, 256>}, {pipeline_mode = #tpu.pipeline_mode<synchronous>, transform_indices = @transform_10, window_bounds = array<i64: 1, 256>}, {pipeline_mode = #tpu.pipeline_mode<synchronous>, transform_indices = @transform_11, window_bounds = array<i64: 1, 256>}, {pipeline_mode = #tpu.pipeline_mode<synchronous>, transform_indices = @transform_12, window_bounds = array<i64: 256, 1024>}, {pipeline_mode = #tpu.pipeline_mode<synchronous>, transform_indices = @transform_13, window_bounds = array<i64: 1, 1024>}, {pipeline_mode = #tpu.pipeline_mode<synchronous>, transform_indices = @transform_14, window_bounds = array<i64: 1024, 256>}, {pipeline_mode = #tpu.pipeline_mode<synchronous>, transform_indices = @transform_15, window_bounds = array<i64: 1, 256>}, {pipeline_mode = #tpu.pipeline_mode<synchronous>, transform_indices = @transform_16, window_bounds = array<i64: 1, 256>}, {pipeline_mode = #tpu.pipeline_mode<synchronous>, transform_indices = @transform_17, window_bounds = array<i64: 1, 256>}, {transform_indices = @transform_18, window_bounds = array<i64: 2, 4, 256>}]} {
    %c0 = arith.constant 0 : index
    %c0_0 = arith.constant 0 : index
    %c0_1 = arith.constant 0 : index
    %0 = vector.load %arg1[%c0, %c0_0, %c0_1] : memref<2x8x256xbf16, #tpu.memory_space<vmem>>, vector<2x8x256xbf16>
    %1 = vector.shape_cast %0 : vector<2x8x256xbf16> to vector<16x256xbf16>
    %2 = arith.extf %1 : vector<16x256xbf16> to vector<16x256xf32>
    %c0_2 = arith.constant 0 : index
    %c0_3 = arith.constant 0 : index
    %3 = vector.load %arg4[%c0_2, %c0_3] : memref<8x8xf32, #tpu.memory_space<vmem>>, vector<8x8xf32>
    %c0_4 = arith.constant 0 : index
    %c0_5 = arith.constant 0 : index
    %4 = vector.load %arg3[%c0_4, %c0_5] : memref<4x8xf32, #tpu.memory_space<vmem>>, vector<4x8xf32>
    %cst = arith.constant dense<0.000000e+00> : vector<16xf32>
    %5 = vector.multi_reduction <add>, %2, %cst [1] : vector<16x256xf32> to vector<16xf32>
    %6 = vector.shape_cast %5 : vector<16xf32> to vector<16x1xf32>
    %cst_6 = arith.constant 2.560000e+02 : f32
    %7 = vector.broadcast %cst_6 : f32 to vector<16x1xf32>
    %8 = arith.divf %6, %7 : vector<16x1xf32>
    %9 = vector.broadcast %8 : vector<16x1xf32> to vector<16x256xf32>
    %10 = arith.subf %2, %9 : vector<16x256xf32>
    %11 = arith.mulf %10, %10 : vector<16x256xf32>
    %cst_7 = arith.constant dense<0.000000e+00> : vector<16xf32>
    %12 = vector.multi_reduction <add>, %11, %cst_7 [1] : vector<16x256xf32> to vector<16xf32>
    %13 = vector.shape_cast %12 : vector<16xf32> to vector<16x1xf32>
    %cst_8 = arith.constant 2.560000e+02 : f32
    %14 = vector.broadcast %cst_8 : f32 to vector<16x1xf32>
    %15 = arith.divf %13, %14 : vector<16x1xf32>
    %16 = vector.broadcast %8 : vector<16x1xf32> to vector<16x256xf32>
    %17 = arith.subf %2, %16 : vector<16x256xf32>
    %cst_9 = arith.constant 9.99999974E-6 : f32
    %18 = vector.broadcast %cst_9 : f32 to vector<16x1xf32>
    %19 = arith.addf %15, %18 : vector<16x1xf32>
    %20 = math.rsqrt %19 : vector<16x1xf32>
    %21 = vector.broadcast %20 : vector<16x1xf32> to vector<16x256xf32>
    %22 = arith.mulf %17, %21 : vector<16x256xf32>
    %c0_10 = arith.constant 0 : index
    %c0_11 = arith.constant 0 : index
    %23 = vector.load %arg5[%c0_10, %c0_11] : memref<1x256xf32, #tpu.memory_space<vmem>>, vector<1x256xf32>
    %24 = vector.shape_cast %23 : vector<1x256xf32> to vector<256xf32>
    %25 = vector.shape_cast %24 : vector<256xf32> to vector<1x256xf32>
    %26 = vector.broadcast %25 : vector<1x256xf32> to vector<16x256xf32>
    %27 = arith.mulf %22, %26 : vector<16x256xf32>
    %c0_12 = arith.constant 0 : index
    %c0_13 = arith.constant 0 : index
    %28 = vector.load %arg6[%c0_12, %c0_13] : memref<1x256xf32, #tpu.memory_space<vmem>>, vector<1x256xf32>
    %29 = vector.shape_cast %28 : vector<1x256xf32> to vector<256xf32>
    %30 = vector.shape_cast %29 : vector<256xf32> to vector<1x256xf32>
    %31 = vector.broadcast %30 : vector<1x256xf32> to vector<16x256xf32>
    %32 = arith.addf %27, %31 : vector<16x256xf32>
    %33 = arith.truncf %32 : vector<16x256xf32> to vector<16x256xbf16>
    %c0_14 = arith.constant 0 : index
    %c0_15 = arith.constant 0 : index
    %34 = vector.load %arg7[%c0_14, %c0_15] : memref<256x768xbf16, #tpu.memory_space<vmem>>, vector<256x768xbf16>
    %cst_16 = arith.constant dense<0.000000e+00> : vector<16x768xf32>
    %35 = tpu.matmul %33, %34, %cst_16 {dimension_numbers = #tpu.dot_dimension_numbers<[1], [0], [0], [1], [0, 0, 1, 1], [], []>} : vector<16x256xbf16>, vector<256x768xbf16>, vector<16x768xf32> -> vector<16x768xf32>
    %c0_17 = arith.constant 0 : index
    %c0_18 = arith.constant 0 : index
    %36 = vector.load %arg8[%c0_17, %c0_18] : memref<1x768xf32, #tpu.memory_space<vmem>>, vector<1x768xf32>
    %37 = vector.shape_cast %36 : vector<1x768xf32> to vector<768xf32>
    %38 = vector.shape_cast %37 : vector<768xf32> to vector<1x768xf32>
    %39 = vector.broadcast %38 : vector<1x768xf32> to vector<16x768xf32>
    %40 = arith.addf %35, %39 : vector<16x768xf32>
    %41 = arith.truncf %40 : vector<16x768xf32> to vector<16x768xbf16>
    %c0_19 = arith.constant 0 : index
    %c0_20 = arith.constant 0 : index
    %c0_21 = arith.constant 0 : index
    %42 = vector.load %arg2[%c0_19, %c0_20, %c0_21] : memref<2x1x8xf32, #tpu.memory_space<vmem>>, vector<1x1x8xf32>
    %43 = vector.shape_cast %42 : vector<1x1x8xf32> to vector<1x8xf32>
    %44 = vector.broadcast %43 : vector<1x8xf32> to vector<8x8xf32>
    %45 = arith.addf %3, %44 : vector<8x8xf32>
    %46 = vector.extract_strided_slice %41 {offsets = [0, 0], sizes = [8, 128], strides = [1, 1]} : vector<16x768xbf16> to vector<8x128xbf16>
    %47 = vector.extract_strided_slice %41 {offsets = [0, 256], sizes = [8, 128], strides = [1, 1]} : vector<16x768xbf16> to vector<8x128xbf16>
    %48 = vector.extract_strided_slice %41 {offsets = [0, 512], sizes = [8, 128], strides = [1, 1]} : vector<16x768xbf16> to vector<8x128xbf16>
    "tpu.trace_start"() <{level = 10 : i32, message = "qd,kd->qk"}> : () -> ()
    %cst_22 = arith.constant dense<0.000000e+00> : vector<8x8xf32>
    %49 = tpu.matmul %46, %47, %cst_22 {dimension_numbers = #tpu.dot_dimension_numbers<[1], [1], [0], [0], [0, 0, 1, 0], [], []>} : vector<8x128xbf16>, vector<8x128xbf16>, vector<8x8xf32> -> vector<8x8xf32>
    "tpu.trace_stop"() : () -> ()
    %50 = arith.addf %49, %45 : vector<8x8xf32>
    %cst_23 = arith.constant dense<0xFF800000> : vector<8xf32>
    %51 = vector.multi_reduction <maximumf>, %50, %cst_23 [1] : vector<8x8xf32> to vector<8xf32>
    %52 = vector.shape_cast %51 : vector<8xf32> to vector<8x1xf32>
    %53 = vector.broadcast %52 : vector<8x1xf32> to vector<8x8xf32>
    %54 = arith.subf %50, %53 : vector<8x8xf32>
    %55 = math.exp %54 : vector<8x8xf32>
    %cst_24 = arith.constant dense<0.000000e+00> : vector<8xf32>
    %56 = vector.multi_reduction <add>, %55, %cst_24 [1] : vector<8x8xf32> to vector<8xf32>
    %57 = vector.shape_cast %56 : vector<8xf32> to vector<8x1xf32>
    %58 = tpu.reciprocal %57 {approx = true} : vector<8x1xf32> -> vector<8x1xf32>
    %59 = vector.broadcast %58 : vector<8x1xf32> to vector<8x8xf32>
    %60 = arith.mulf %55, %59 : vector<8x8xf32>
    %61 = arith.truncf %60 : vector<8x8xf32> to vector<8x8xbf16>
    %cst_25 = arith.constant dense<0.000000e+00> : vector<8x128xf32>
    %62 = tpu.matmul %61, %48, %cst_25 {dimension_numbers = #tpu.dot_dimension_numbers<[1], [0], [0], [1], [0, 0, 1, 1], [], []>} : vector<8x8xbf16>, vector<8x128xbf16>, vector<8x128xf32> -> vector<8x128xf32>
    %c0_26 = arith.constant 0 : index
    %c0_27 = arith.constant 0 : index
    %63 = vector.load %arg20[%c0_26, %c0_27] : memref<16x256xf32, #tpu.memory_space<vmem>>, vector<8x128xf32>
    tpu.vector_store %arg20[%c0_26, %c0_27], %62 {strides = array<i32>} : memref<16x256xf32, #tpu.memory_space<vmem>>, vector<8x128xf32>,
    %64 = vector.extract_strided_slice %41 {offsets = [0, 128], sizes = [8, 128], strides = [1, 1]} : vector<16x768xbf16> to vector<8x128xbf16>
    %65 = vector.extract_strided_slice %41 {offsets = [0, 384], sizes = [8, 128], strides = [1, 1]} : vector<16x768xbf16> to vector<8x128xbf16>
    %66 = vector.extract_strided_slice %41 {offsets = [0, 640], sizes = [8, 128], strides = [1, 1]} : vector<16x768xbf16> to vector<8x128xbf16>
    "tpu.trace_start"() <{level = 10 : i32, message = "qd,kd->qk"}> : () -> ()
    %cst_28 = arith.constant dense<0.000000e+00> : vector<8x8xf32>
    %67 = tpu.matmul %64, %65, %cst_28 {dimension_numbers = #tpu.dot_dimension_numbers<[1], [1], [0], [0], [0, 0, 1, 0], [], []>} : vector<8x128xbf16>, vector<8x128xbf16>, vector<8x8xf32> -> vector<8x8xf32>
    "tpu.trace_stop"() : () -> ()
    %68 = arith.addf %67, %45 : vector<8x8xf32>
    %cst_29 = arith.constant dense<0xFF800000> : vector<8xf32>
    %69 = vector.multi_reduction <maximumf>, %68, %cst_29 [1] : vector<8x8xf32> to vector<8xf32>
    %70 = vector.shape_cast %69 : vector<8xf32> to vector<8x1xf32>
    %71 = vector.broadcast %70 : vector<8x1xf32> to vector<8x8xf32>
    %72 = arith.subf %68, %71 : vector<8x8xf32>
    %73 = math.exp %72 : vector<8x8xf32>
    %cst_30 = arith.constant dense<0.000000e+00> : vector<8xf32>
    %74 = vector.multi_reduction <add>, %73, %cst_30 [1] : vector<8x8xf32> to vector<8xf32>
    %75 = vector.shape_cast %74 : vector<8xf32> to vector<8x1xf32>
    %76 = tpu.reciprocal %75 {approx = true} : vector<8x1xf32> -> vector<8x1xf32>
    %77 = vector.broadcast %76 : vector<8x1xf32> to vector<8x8xf32>
    %78 = arith.mulf %73, %77 : vector<8x8xf32>
    %79 = arith.truncf %78 : vector<8x8xf32> to vector<8x8xbf16>
    %cst_31 = arith.constant dense<0.000000e+00> : vector<8x128xf32>
    %80 = tpu.matmul %79, %66, %cst_31 {dimension_numbers = #tpu.dot_dimension_numbers<[1], [0], [0], [1], [0, 0, 1, 1], [], []>} : vector<8x8xbf16>, vector<8x128xbf16>, vector<8x128xf32> -> vector<8x128xf32>
    %c0_32 = arith.constant 0 : index
    %c128 = arith.constant 128 : index
    %81 = vector.load %arg20[%c0_32, %c128] : memref<16x256xf32, #tpu.memory_space<vmem>>, vector<8x128xf32>
    tpu.vector_store %arg20[%c0_32, %c128], %80 {strides = array<i32>} : memref<16x256xf32, #tpu.memory_space<vmem>>, vector<8x128xf32>,
    %c1 = arith.constant 1 : index
    %c0_33 = arith.constant 0 : index
    %c0_34 = arith.constant 0 : index
    %82 = vector.load %arg2[%c1, %c0_33, %c0_34] : memref<2x1x8xf32, #tpu.memory_space<vmem>>, vector<1x1x8xf32>
    %83 = vector.shape_cast %82 : vector<1x1x8xf32> to vector<1x8xf32>
    %84 = vector.broadcast %83 : vector<1x8xf32> to vector<8x8xf32>
    %85 = arith.addf %3, %84 : vector<8x8xf32>
    %86 = vector.extract_strided_slice %41 {offsets = [8, 0], sizes = [8, 128], strides = [1, 1]} : vector<16x768xbf16> to vector<8x128xbf16>
    %87 = vector.extract_strided_slice %41 {offsets = [8, 256], sizes = [8, 128], strides = [1, 1]} : vector<16x768xbf16> to vector<8x128xbf16>
    %88 = vector.extract_strided_slice %41 {offsets = [8, 512], sizes = [8, 128], strides = [1, 1]} : vector<16x768xbf16> to vector<8x128xbf16>
    "tpu.trace_start"() <{level = 10 : i32, message = "qd,kd->qk"}> : () -> ()
    %cst_35 = arith.constant dense<0.000000e+00> : vector<8x8xf32>
    %89 = tpu.matmul %86, %87, %cst_35 {dimension_numbers = #tpu.dot_dimension_numbers<[1], [1], [0], [0], [0, 0, 1, 0], [], []>} : vector<8x128xbf16>, vector<8x128xbf16>, vector<8x8xf32> -> vector<8x8xf32>
    "tpu.trace_stop"() : () -> ()
    %90 = arith.addf %89, %85 : vector<8x8xf32>
    %cst_36 = arith.constant dense<0xFF800000> : vector<8xf32>
    %91 = vector.multi_reduction <maximumf>, %90, %cst_36 [1] : vector<8x8xf32> to vector<8xf32>
    %92 = vector.shape_cast %91 : vector<8xf32> to vector<8x1xf32>
    %93 = vector.broadcast %92 : vector<8x1xf32> to vector<8x8xf32>
    %94 = arith.subf %90, %93 : vector<8x8xf32>
    %95 = math.exp %94 : vector<8x8xf32>
    %cst_37 = arith.constant dense<0.000000e+00> : vector<8xf32>
    %96 = vector.multi_reduction <add>, %95, %cst_37 [1] : vector<8x8xf32> to vector<8xf32>
    %97 = vector.shape_cast %96 : vector<8xf32> to vector<8x1xf32>
    %98 = tpu.reciprocal %97 {approx = true} : vector<8x1xf32> -> vector<8x1xf32>
    %99 = vector.broadcast %98 : vector<8x1xf32> to vector<8x8xf32>
    %100 = arith.mulf %95, %99 : vector<8x8xf32>
    %101 = arith.truncf %100 : vector<8x8xf32> to vector<8x8xbf16>
    %cst_38 = arith.constant dense<0.000000e+00> : vector<8x128xf32>
    %102 = tpu.matmul %101, %88, %cst_38 {dimension_numbers = #tpu.dot_dimension_numbers<[1], [0], [0], [1], [0, 0, 1, 1], [], []>} : vector<8x8xbf16>, vector<8x128xbf16>, vector<8x128xf32> -> vector<8x128xf32>
    %c8 = arith.constant 8 : index
    %c0_39 = arith.constant 0 : index
    %103 = vector.load %arg20[%c8, %c0_39] : memref<16x256xf32, #tpu.memory_space<vmem>>, vector<8x128xf32>
    tpu.vector_store %arg20[%c8, %c0_39], %102 {strides = array<i32>} : memref<16x256xf32, #tpu.memory_space<vmem>>, vector<8x128xf32>,
    %104 = vector.extract_strided_slice %41 {offsets = [8, 128], sizes = [8, 128], strides = [1, 1]} : vector<16x768xbf16> to vector<8x128xbf16>
    %105 = vector.extract_strided_slice %41 {offsets = [8, 384], sizes = [8, 128], strides = [1, 1]} : vector<16x768xbf16> to vector<8x128xbf16>
    %106 = vector.extract_strided_slice %41 {offsets = [8, 640], sizes = [8, 128], strides = [1, 1]} : vector<16x768xbf16> to vector<8x128xbf16>
    "tpu.trace_start"() <{level = 10 : i32, message = "qd,kd->qk"}> : () -> ()
    %cst_40 = arith.constant dense<0.000000e+00> : vector<8x8xf32>
    %107 = tpu.matmul %104, %105, %cst_40 {dimension_numbers = #tpu.dot_dimension_numbers<[1], [1], [0], [0], [0, 0, 1, 0], [], []>} : vector<8x128xbf16>, vector<8x128xbf16>, vector<8x8xf32> -> vector<8x8xf32>
    "tpu.trace_stop"() : () -> ()
    %108 = arith.addf %107, %85 : vector<8x8xf32>
    %cst_41 = arith.constant dense<0xFF800000> : vector<8xf32>
    %109 = vector.multi_reduction <maximumf>, %108, %cst_41 [1] : vector<8x8xf32> to vector<8xf32>
    %110 = vector.shape_cast %109 : vector<8xf32> to vector<8x1xf32>
    %111 = vector.broadcast %110 : vector<8x1xf32> to vector<8x8xf32>
    %112 = arith.subf %108, %111 : vector<8x8xf32>
    %113 = math.exp %112 : vector<8x8xf32>
    %cst_42 = arith.constant dense<0.000000e+00> : vector<8xf32>
    %114 = vector.multi_reduction <add>, %113, %cst_42 [1] : vector<8x8xf32> to vector<8xf32>
    %115 = vector.shape_cast %114 : vector<8xf32> to vector<8x1xf32>
    %116 = tpu.reciprocal %115 {approx = true} : vector<8x1xf32> -> vector<8x1xf32>
    %117 = vector.broadcast %116 : vector<8x1xf32> to vector<8x8xf32>
    %118 = arith.mulf %113, %117 : vector<8x8xf32>
    %119 = arith.truncf %118 : vector<8x8xf32> to vector<8x8xbf16>
    %cst_43 = arith.constant dense<0.000000e+00> : vector<8x128xf32>
    %120 = tpu.matmul %119, %106, %cst_43 {dimension_numbers = #tpu.dot_dimension_numbers<[1], [0], [0], [1], [0, 0, 1, 1], [], []>} : vector<8x8xbf16>, vector<8x128xbf16>, vector<8x128xf32> -> vector<8x128xf32>
    %c8_44 = arith.constant 8 : index
    %c128_45 = arith.constant 128 : index
    %121 = vector.load %arg20[%c8_44, %c128_45] : memref<16x256xf32, #tpu.memory_space<vmem>>, vector<8x128xf32>
    tpu.vector_store %arg20[%c8_44, %c128_45], %120 {strides = array<i32>} : memref<16x256xf32, #tpu.memory_space<vmem>>, vector<8x128xf32>,
    %c0_46 = arith.constant 0 : index
    %c0_47 = arith.constant 0 : index
    %122 = vector.load %arg20[%c0_46, %c0_47] : memref<16x256xf32, #tpu.memory_space<vmem>>, vector<16x256xf32>
    %123 = arith.truncf %122 : vector<16x256xf32> to vector<16x256xbf16>
    %c0_48 = arith.constant 0 : index
    %c0_49 = arith.constant 0 : index
    %124 = vector.load %arg9[%c0_48, %c0_49] : memref<256x256xbf16, #tpu.memory_space<vmem>>, vector<256x256xbf16>
    %cst_50 = arith.constant dense<0.000000e+00> : vector<16x256xf32>
    %125 = tpu.matmul %123, %124, %cst_50 {dimension_numbers = #tpu.dot_dimension_numbers<[1], [0], [0], [1], [0, 0, 1, 1], [], []>} : vector<16x256xbf16>, vector<256x256xbf16>, vector<16x256xf32> -> vector<16x256xf32>
    %c0_51 = arith.constant 0 : index
    %c0_52 = arith.constant 0 : index
    %126 = vector.load %arg10[%c0_51, %c0_52] : memref<1x256xf32, #tpu.memory_space<vmem>>, vector<1x256xf32>
    %127 = vector.shape_cast %126 : vector<1x256xf32> to vector<256xf32>
    %128 = vector.shape_cast %127 : vector<256xf32> to vector<1x256xf32>
    %129 = vector.broadcast %128 : vector<1x256xf32> to vector<16x256xf32>
    %130 = arith.addf %125, %129 : vector<16x256xf32>
    %131 = arith.addf %2, %130 : vector<16x256xf32>
    %cst_53 = arith.constant dense<0.000000e+00> : vector<16xf32>
    %132 = vector.multi_reduction <add>, %131, %cst_53 [1] : vector<16x256xf32> to vector<16xf32>
    %133 = vector.shape_cast %132 : vector<16xf32> to vector<16x1xf32>
    %cst_54 = arith.constant 2.560000e+02 : f32
    %134 = vector.broadcast %cst_54 : f32 to vector<16x1xf32>
    %135 = arith.divf %133, %134 : vector<16x1xf32>
    %136 = vector.broadcast %135 : vector<16x1xf32> to vector<16x256xf32>
    %137 = arith.subf %131, %136 : vector<16x256xf32>
    %138 = arith.mulf %137, %137 : vector<16x256xf32>
    %cst_55 = arith.constant dense<0.000000e+00> : vector<16xf32>
    %139 = vector.multi_reduction <add>, %138, %cst_55 [1] : vector<16x256xf32> to vector<16xf32>
    %140 = vector.shape_cast %139 : vector<16xf32> to vector<16x1xf32>
    %cst_56 = arith.constant 2.560000e+02 : f32
    %141 = vector.broadcast %cst_56 : f32 to vector<16x1xf32>
    %142 = arith.divf %140, %141 : vector<16x1xf32>
    %143 = vector.broadcast %135 : vector<16x1xf32> to vector<16x256xf32>
    %144 = arith.subf %131, %143 : vector<16x256xf32>
    %cst_57 = arith.constant 9.99999974E-6 : f32
    %145 = vector.broadcast %cst_57 : f32 to vector<16x1xf32>
    %146 = arith.addf %142, %145 : vector<16x1xf32>
    %147 = math.rsqrt %146 : vector<16x1xf32>
    %148 = vector.broadcast %147 : vector<16x1xf32> to vector<16x256xf32>
    %149 = arith.mulf %144, %148 : vector<16x256xf32>
    %c0_58 = arith.constant 0 : index
    %c0_59 = arith.constant 0 : index
    %150 = vector.load %arg11[%c0_58, %c0_59] : memref<1x256xf32, #tpu.memory_space<vmem>>, vector<1x256xf32>
    %151 = vector.shape_cast %150 : vector<1x256xf32> to vector<256xf32>
    %152 = vector.shape_cast %151 : vector<256xf32> to vector<1x256xf32>
    %153 = vector.broadcast %152 : vector<1x256xf32> to vector<16x256xf32>
    %154 = arith.mulf %149, %153 : vector<16x256xf32>
    %c0_60 = arith.constant 0 : index
    %c0_61 = arith.constant 0 : index
    %155 = vector.load %arg12[%c0_60, %c0_61] : memref<1x256xf32, #tpu.memory_space<vmem>>, vector<1x256xf32>
    %156 = vector.shape_cast %155 : vector<1x256xf32> to vector<256xf32>
    %157 = vector.shape_cast %156 : vector<256xf32> to vector<1x256xf32>
    %158 = vector.broadcast %157 : vector<1x256xf32> to vector<16x256xf32>
    %159 = arith.addf %154, %158 : vector<16x256xf32>
    %160 = arith.truncf %159 : vector<16x256xf32> to vector<16x256xbf16>
    %c0_62 = arith.constant 0 : index
    %c0_63 = arith.constant 0 : index
    %161 = vector.load %arg13[%c0_62, %c0_63] : memref<256x1024xbf16, #tpu.memory_space<vmem>>, vector<256x1024xbf16>
    %cst_64 = arith.constant dense<0.000000e+00> : vector<16x1024xf32>
    %162 = tpu.matmul %160, %161, %cst_64 {dimension_numbers = #tpu.dot_dimension_numbers<[1], [0], [0], [1], [0, 0, 1, 1], [], []>} : vector<16x256xbf16>, vector<256x1024xbf16>, vector<16x1024xf32> -> vector<16x1024xf32>
    %c0_65 = arith.constant 0 : index
    %c0_66 = arith.constant 0 : index
    %163 = vector.load %arg14[%c0_65, %c0_66] : memref<1x1024xf32, #tpu.memory_space<vmem>>, vector<1x1024xf32>
    %164 = vector.shape_cast %163 : vector<1x1024xf32> to vector<1024xf32>
    %165 = vector.shape_cast %164 : vector<1024xf32> to vector<1x1024xf32>
    %166 = vector.broadcast %165 : vector<1x1024xf32> to vector<16x1024xf32>
    %167 = arith.addf %162, %166 : vector<16x1024xf32>
    %168 = arith.mulf %167, %167 : vector<16x1024xf32>
    %169 = arith.mulf %167, %168 : vector<16x1024xf32>
    %cst_67 = arith.constant 4.471500e-02 : f32
    %170 = vector.broadcast %cst_67 : f32 to vector<16x1024xf32>
    %171 = arith.mulf %170, %169 : vector<16x1024xf32>
    %172 = arith.addf %167, %171 : vector<16x1024xf32>
    %cst_68 = arith.constant 0.797884583 : f32
    %173 = vector.broadcast %cst_68 : f32 to vector<16x1024xf32>
    %174 = arith.mulf %173, %172 : vector<16x1024xf32>
    %175 = math.tanh %174 : vector<16x1024xf32>
    %cst_69 = arith.constant 1.000000e+00 : f32
    %176 = vector.broadcast %cst_69 : f32 to vector<16x1024xf32>
    %177 = arith.addf %176, %175 : vector<16x1024xf32>
    %cst_70 = arith.constant 5.000000e-01 : f32
    %178 = vector.broadcast %cst_70 : f32 to vector<16x1024xf32>
    %179 = arith.mulf %178, %177 : vector<16x1024xf32>
    %180 = arith.mulf %167, %179 : vector<16x1024xf32>
    %181 = arith.truncf %180 : vector<16x1024xf32> to vector<16x1024xbf16>
    %c0_71 = arith.constant 0 : index
    %c0_72 = arith.constant 0 : index
    %182 = vector.load %arg15[%c0_71, %c0_72] : memref<1024x256xbf16, #tpu.memory_space<vmem>>, vector<1024x256xbf16>
    %cst_73 = arith.constant dense<0.000000e+00> : vector<16x256xf32>
    %183 = tpu.matmul %181, %182, %cst_73 {dimension_numbers = #tpu.dot_dimension_numbers<[1], [0], [0], [1], [0, 0, 1, 1], [], []>} : vector<16x1024xbf16>, vector<1024x256xbf16>, vector<16x256xf32> -> vector<16x256xf32>
    %c0_74 = arith.constant 0 : index
    %c0_75 = arith.constant 0 : index
    %184 = vector.load %arg16[%c0_74, %c0_75] : memref<1x256xf32, #tpu.memory_space<vmem>>, vector<1x256xf32>
    %185 = vector.shape_cast %184 : vector<1x256xf32> to vector<256xf32>
    %186 = vector.shape_cast %185 : vector<256xf32> to vector<1x256xf32>
    %187 = vector.broadcast %186 : vector<1x256xf32> to vector<16x256xf32>
    %188 = arith.addf %183, %187 : vector<16x256xf32>
    %189 = arith.addf %131, %188 : vector<16x256xf32>
    %cst_76 = arith.constant dense<0.000000e+00> : vector<16xf32>
    %190 = vector.multi_reduction <add>, %189, %cst_76 [1] : vector<16x256xf32> to vector<16xf32>
    %191 = vector.shape_cast %190 : vector<16xf32> to vector<16x1xf32>
    %cst_77 = arith.constant 2.560000e+02 : f32
    %192 = vector.broadcast %cst_77 : f32 to vector<16x1xf32>
    %193 = arith.divf %191, %192 : vector<16x1xf32>
    %194 = vector.broadcast %193 : vector<16x1xf32> to vector<16x256xf32>
    %195 = arith.subf %189, %194 : vector<16x256xf32>
    %196 = arith.mulf %195, %195 : vector<16x256xf32>
    %cst_78 = arith.constant dense<0.000000e+00> : vector<16xf32>
    %197 = vector.multi_reduction <add>, %196, %cst_78 [1] : vector<16x256xf32> to vector<16xf32>
    %198 = vector.shape_cast %197 : vector<16xf32> to vector<16x1xf32>
    %cst_79 = arith.constant 2.560000e+02 : f32
    %199 = vector.broadcast %cst_79 : f32 to vector<16x1xf32>
    %200 = arith.divf %198, %199 : vector<16x1xf32>
    %201 = vector.broadcast %193 : vector<16x1xf32> to vector<16x256xf32>
    %202 = arith.subf %189, %201 : vector<16x256xf32>
    %cst_80 = arith.constant 9.99999974E-6 : f32
    %203 = vector.broadcast %cst_80 : f32 to vector<16x1xf32>
    %204 = arith.addf %200, %203 : vector<16x1xf32>
    %205 = math.rsqrt %204 : vector<16x1xf32>
    %206 = vector.broadcast %205 : vector<16x1xf32> to vector<16x256xf32>
    %207 = arith.mulf %202, %206 : vector<16x256xf32>
    %c0_81 = arith.constant 0 : index
    %c0_82 = arith.constant 0 : index
    %208 = vector.load %arg17[%c0_81, %c0_82] : memref<1x256xf32, #tpu.memory_space<vmem>>, vector<1x256xf32>
    %209 = vector.shape_cast %208 : vector<1x256xf32> to vector<256xf32>
    %210 = vector.shape_cast %209 : vector<256xf32> to vector<1x256xf32>
    %211 = vector.broadcast %210 : vector<1x256xf32> to vector<16x256xf32>
    %212 = arith.mulf %207, %211 : vector<16x256xf32>
    %c0_83 = arith.constant 0 : index
    %c0_84 = arith.constant 0 : index
    %213 = vector.load %arg18[%c0_83, %c0_84] : memref<1x256xf32, #tpu.memory_space<vmem>>, vector<1x256xf32>
    %214 = vector.shape_cast %213 : vector<1x256xf32> to vector<256xf32>
    %215 = vector.shape_cast %214 : vector<256xf32> to vector<1x256xf32>
    %216 = vector.broadcast %215 : vector<1x256xf32> to vector<16x256xf32>
    %217 = arith.addf %212, %216 : vector<16x256xf32>
    %218 = vector.extract_strided_slice %217 {offsets = [0, 0], sizes = [8, 256], strides = [1, 1]} : vector<16x256xf32> to vector<8x256xf32>
    %cst_85 = arith.constant dense<0.000000e+00> : vector<4x256xf32>
    %219 = tpu.matmul %4, %218, %cst_85 {dimension_numbers = #tpu.dot_dimension_numbers<[1], [0], [0], [1], [0, 0, 1, 1], [], []>} : vector<4x8xf32>, vector<8x256xf32>, vector<4x256xf32> -> vector<4x256xf32>
    %c0_86 = arith.constant 0 : index
    %c0_87 = arith.constant 0 : index
    %c0_88 = arith.constant 0 : index
    %220 = vector.load %arg19[%c0_86, %c0_87, %c0_88] : memref<2x4x256xf32, #tpu.memory_space<vmem>>, vector<1x4x256xf32>
    %221 = vector.shape_cast %220 : vector<1x4x256xf32> to vector<4x256xf32>
    %222 = vector.shape_cast %219 : vector<4x256xf32> to vector<1x4x256xf32>
    tpu.vector_store %arg19[%c0_86, %c0_87, %c0_88], %222 {strides = array<i32>} : memref<2x4x256xf32, #tpu.memory_space<vmem>>, vector<1x4x256xf32>,
    %223 = vector.extract_strided_slice %217 {offsets = [8, 0], sizes = [8, 256], strides = [1, 1]} : vector<16x256xf32> to vector<8x256xf32>
    %cst_89 = arith.constant dense<0.000000e+00> : vector<4x256xf32>
    %224 = tpu.matmul %4, %223, %cst_89 {dimension_numbers = #tpu.dot_dimension_numbers<[1], [0], [0], [1], [0, 0, 1, 1], [], []>} : vector<4x8xf32>, vector<8x256xf32>, vector<4x256xf32> -> vector<4x256xf32>
    %c1_90 = arith.constant 1 : index
    %c0_91 = arith.constant 0 : index
    %c0_92 = arith.constant 0 : index
    %225 = vector.load %arg19[%c1_90, %c0_91, %c0_92] : memref<2x4x256xf32, #tpu.memory_space<vmem>>, vector<1x4x256xf32>
    %226 = vector.shape_cast %225 : vector<1x4x256xf32> to vector<4x256xf32>
    %227 = vector.shape_cast %224 : vector<4x256xf32> to vector<1x4x256xf32>
    tpu.vector_store %arg19[%c1_90, %c0_91, %c0_92], %227 {strides = array<i32>} : memref<2x4x256xf32, #tpu.memory_space<vmem>>, vector<1x4x256xf32>,
    return
  }
  func.func @transform_0(%arg0: i32) -> (i32, i32, i32) {
    %c0_i32 = arith.constant 0 : i32
    %c0_i32_0 = arith.constant 0 : i32
    %c0_i32_1 = arith.constant 0 : i32
    return %arg0, %c0_i32, %c0_i32_0 : i32, i32, i32
  }
  func.func @transform_1(%arg0: i32) -> (i32, i32, i32) {
    %c0_i32 = arith.constant 0 : i32
    %c0_i32_0 = arith.constant 0 : i32
    %c0_i32_1 = arith.constant 0 : i32
    return %arg0, %c0_i32, %c0_i32_0 : i32, i32, i32
  }
  func.func @transform_2(%arg0: i32) -> (i32, i32) {
    %c0_i32 = arith.constant 0 : i32
    %c0_i32_0 = arith.constant 0 : i32
    %c0_i32_1 = arith.constant 0 : i32
    return %c0_i32, %c0_i32_0 : i32, i32
  }
  func.func @transform_3(%arg0: i32) -> (i32, i32) {
    %c0_i32 = arith.constant 0 : i32
    %c0_i32_0 = arith.constant 0 : i32
    %c0_i32_1 = arith.constant 0 : i32
    return %c0_i32, %c0_i32_0 : i32, i32
  }
  func.func @transform_4(%arg0: i32) -> (i32, i32) {
    %c0_i32 = arith.constant 0 : i32
    %c0_i32_0 = arith.constant 0 : i32
    %c0_i32_1 = arith.constant 0 : i32
    return %c0_i32, %c0_i32_0 : i32, i32
  }
  func.func @transform_5(%arg0: i32) -> (i32, i32) {
    %c0_i32 = arith.constant 0 : i32
    %c0_i32_0 = arith.constant 0 : i32
    %c0_i32_1 = arith.constant 0 : i32
    return %c0_i32, %c0_i32_0 : i32, i32
  }
  func.func @transform_6(%arg0: i32) -> (i32, i32) {
    %c0_i32 = arith.constant 0 : i32
    %c0_i32_0 = arith.constant 0 : i32
    %c0_i32_1 = arith.constant 0 : i32
    return %c0_i32, %c0_i32_0 : i32, i32
  }
  func.func @transform_7(%arg0: i32) -> (i32, i32) {
    %c0_i32 = arith.constant 0 : i32
    %c0_i32_0 = arith.constant 0 : i32
    %c0_i32_1 = arith.constant 0 : i32
    return %c0_i32, %c0_i32_0 : i32, i32
  }
  func.func @transform_8(%arg0: i32) -> (i32, i32) {
    %c0_i32 = arith.constant 0 : i32
    %c0_i32_0 = arith.constant 0 : i32
    %c0_i32_1 = arith.constant 0 : i32
    return %c0_i32, %c0_i32_0 : i32, i32
  }
  func.func @transform_9(%arg0: i32) -> (i32, i32) {
    %c0_i32 = arith.constant 0 : i32
    %c0_i32_0 = arith.constant 0 : i32
    %c0_i32_1 = arith.constant 0 : i32
    return %c0_i32, %c0_i32_0 : i32, i32
  }
  func.func @transform_10(%arg0: i32) -> (i32, i32) {
    %c0_i32 = arith.constant 0 : i32
    %c0_i32_0 = arith.constant 0 : i32
    %c0_i32_1 = arith.constant 0 : i32
    return %c0_i32, %c0_i32_0 : i32, i32
  }
  func.func @transform_11(%arg0: i32) -> (i32, i32) {
    %c0_i32 = arith.constant 0 : i32
    %c0_i32_0 = arith.constant 0 : i32
    %c0_i32_1 = arith.constant 0 : i32
    return %c0_i32, %c0_i32_0 : i32, i32
  }
  func.func @transform_12(%arg0: i32) -> (i32, i32) {
    %c0_i32 = arith.constant 0 : i32
    %c0_i32_0 = arith.constant 0 : i32
    %c0_i32_1 = arith.constant 0 : i32
    return %c0_i32, %c0_i32_0 : i32, i32
  }
  func.func @transform_13(%arg0: i32) -> (i32, i32) {
    %c0_i32 = arith.constant 0 : i32
    %c0_i32_0 = arith.constant 0 : i32
    %c0_i32_1 = arith.constant 0 : i32
    return %c0_i32, %c0_i32_0 : i32, i32
  }
  func.func @transform_14(%arg0: i32) -> (i32, i32) {
    %c0_i32 = arith.constant 0 : i32
    %c0_i32_0 = arith.constant 0 : i32
    %c0_i32_1 = arith.constant 0 : i32
    return %c0_i32, %c0_i32_0 : i32, i32
  }
  func.func @transform_15(%arg0: i32) -> (i32, i32) {
    %c0_i32 = arith.constant 0 : i32
    %c0_i32_0 = arith.constant 0 : i32
    %c0_i32_1 = arith.constant 0 : i32
    return %c0_i32, %c0_i32_0 : i32, i32
  }
  func.func @transform_16(%arg0: i32) -> (i32, i32) {
    %c0_i32 = arith.constant 0 : i32
    %c0_i32_0 = arith.constant 0 : i32
    %c0_i32_1 = arith.constant 0 : i32
    return %c0_i32, %c0_i32_0 : i32, i32
  }
  func.func @transform_17(%arg0: i32) -> (i32, i32) {
    %c0_i32 = arith.constant 0 : i32
    %c0_i32_0 = arith.constant 0 : i32
    %c0_i32_1 = arith.constant 0 : i32
    return %c0_i32, %c0_i32_0 : i32, i32
  }
  func.func @transform_18(%arg0: i32) -> (i32, i32, i32) {
    %c0_i32 = arith.constant 0 : i32
    %c0_i32_0 = arith.constant 0 : i32
    %c0_i32_1 = arith.constant 0 : i32
    return %arg0, %c0_i32, %c0_i32_0 : i32, i32, i32
  }
}

</mosaic_0001>

<llo_original>
// kernel: feature_extractor_forward.1
$region0: #{feature_extractor_forward.1}
  #allocation0 [shape = 'u32[]', space=smem, size = 0x4, offset = 0x4, fixed_abs, tag = 'smem constant byte address 0x4 - core index']
  #allocation1 [shape = 'u32[72,128]{1,0:T(1,128)}', space=vmem, size = 0x9000, scoped, tag = 'internal scratch']
  #allocation2 [shape = 'f32[16,256]{1,0:T(8,128)}', space=vmem, size = 0x4000, scoped, tag = 'scratch operand']
  %s0 = inlined_call_operand.vmem [shape: bf16[4,8,256], index: 0, kind: input, shape index: {}]
  %s1 = inlined_call_operand.vmem [shape: f32[4,1,8], index: 1, kind: input, shape index: {}]
  %s2 = inlined_call_operand.vmem [shape: f32[4,8], index: 2, kind: input, shape index: {}]
  %s3 = inlined_call_operand.vmem [shape: f32[8,8], index: 3, kind: input, shape index: {}]
  %s4 = inlined_call_operand.vmem [shape: f32[1,256], index: 4, kind: input, shape index: {}, may-alias: {4,10,16}]
  %s5 = inlined_call_operand.vmem [shape: f32[1,256], index: 5, kind: input, shape index: {}, may-alias: {5,9,11,15,17}]
  %s6 = inlined_call_operand.vmem [shape: bf16[256,768], index: 6, kind: input, shape index: {}]
  %s7 = inlined_call_operand.vmem [shape: f32[1,768], index: 7, kind: input, shape index: {}]
  %s8 = inlined_call_operand.vmem [shape: bf16[256,256], index: 8, kind: input, shape index: {}]
  %s9 = inlined_call_operand.vmem [shape: f32[1,256], index: 9, kind: input, shape index: {}, may-alias: {5,9,11,15,17}]
  %s10 = inlined_call_operand.vmem [shape: f32[1,256], index: 10, kind: input, shape index: {}, may-alias: {4,10,16}]
  %s11 = inlined_call_operand.vmem [shape: f32[1,256], index: 11, kind: input, shape index: {}, may-alias: {5,9,11,15,17}]
  %s12 = inlined_call_operand.vmem [shape: bf16[256,1024], index: 12, kind: input, shape index: {}]
  %s13 = inlined_call_operand.vmem [shape: f32[1,1024], index: 13, kind: input, shape index: {}]
  %s14 = inlined_call_operand.hbm [shape: bf16[1024,256], index: 14, kind: input, shape index: {}]
  %s15 = inlined_call_operand.vmem [shape: f32[1,256], index: 15, kind: input, shape index: {}, may-alias: {5,9,11,15,17}]
  %s16 = inlined_call_operand.vmem [shape: f32[1,256], index: 16, kind: input, shape index: {}, may-alias: {4,10,16}]
  %s17 = inlined_call_operand.vmem [shape: f32[1,256], index: 17, kind: input, shape index: {}, may-alias: {5,9,11,15,17}]
  %s18 = inlined_call_operand.hbm [shape: f32[4,4,256], index: 18, kind: output, shape index: {}]
  %s19 = sld [smem:[#allocation0]]
  $region109: #{feature_extractor_forward.1} parent=0
    _
  %s21 = ssub.s32 1, %s19
  %s22 = scalar_select 0, %s21, %s19
  $region1: #{feature_extractor_forward.1} parent=0
    #allocation3 [shape = 'u8[524288]{0}', space=vmem, size = 0x80000, scoped, tag = 'input window, operand 14, single buffered']
    #allocation4 [shape = 's32[2]{0}', space=sflag, size = 0x8, scoped, tag = 'scoped memory for feature_extractor_forward.1']
    #allocation5 [shape = 's32[2]{0}', space=sflag, size = 0x8, scoped, tag = 'scoped memory for feature_extractor_forward.1']
    #allocation6 [shape = 'u8[16384]{0}', space=vmem, size = 0x4000, scoped, tag = 'output window, operand 0']
    %23 = vsyncpa [#allocation4], 0
    %24 = vsyncpa [#allocation5], 0
    %s25 = scalar_lea.sflag [#allocation5], 1
    %26 = vsyncpa %s25, 0
    loop: start=0, step=1, limit=4
    $region2: #{feature_extractor_forward.1} parent=1 // loop_pre_header
      _
    $region3: #{feature_extractor_forward.1} parent=1 // loop_header
      %s28 = sphi 0, %s32
      %p29 = scmp.ge.s32.totalorder %s28, 4
      %s38 = sphi 0, %s40
      %s41 = sphi 0, %s38
      %s42 = sphi 0, %s41
      %s58 = sphi 0, %s42
      %s64 = sphi 0, %s66
      %s67 = sphi 0, %s64
      %s68 = sphi 0, %s67
      %s84 = sphi 0, %s68
      %s88 = sphi 0, %s88
      %s90 = sphi 0, %s88
      %s91 = sphi 0, %s90
      %s105 = sphi 0, %s91
      %s109 = sphi 0, %s109
      %s111 = sphi 0, %s109
      %s112 = sphi 0, %s111
      %s126 = sphi 0, %s112
      %s130 = sphi 0, %s130
      %s132 = sphi 0, %s130
      %s133 = sphi 0, %s132
      %s147 = sphi 0, %s133
      %s151 = sphi 0, %s151
      %s153 = sphi 0, %s151
      %s154 = sphi 0, %s153
      %s168 = sphi 0, %s154
      %s172 = sphi 0, %s172
      %s174 = sphi 0, %s172
      %s175 = sphi 0, %s174
      %s189 = sphi 0, %s175
      %s193 = sphi 0, %s193
      %s195 = sphi 0, %s193
      %s196 = sphi 0, %s195
      %s210 = sphi 0, %s196
      %s214 = sphi 0, %s214
      %s216 = sphi 0, %s214
      %s217 = sphi 0, %s216
      %s231 = sphi 0, %s217
      %s235 = sphi 0, %s235
      %s237 = sphi 0, %s235
      %s238 = sphi 0, %s237
      %s252 = sphi 0, %s238
      %s256 = sphi 0, %s256
      %s258 = sphi 0, %s256
      %s259 = sphi 0, %s258
      %s273 = sphi 0, %s259
      %s277 = sphi 0, %s277
      %s279 = sphi 0, %s277
      %s280 = sphi 0, %s279
      %s294 = sphi 0, %s280
      %s298 = sphi 0, %s298
      %s300 = sphi 0, %s298
      %s301 = sphi 0, %s300
      %s315 = sphi 0, %s301
      %s319 = sphi 0, %s319
      %s321 = sphi 0, %s319
      %s322 = sphi 0, %s321
      %s336 = sphi 0, %s322
      %s340 = sphi 0, %s340
      %s342 = sphi 0, %s340
      %s343 = sphi 0, %s342
      %s357 = sphi 0, %s343
      %s361 = sphi 0, %s361
      %s363 = sphi 0, %s361
      %s364 = sphi 0, %s363
      %s378 = sphi 0, %s364
      %s382 = sphi 0, %s382
      %s384 = sphi 0, %s382
      %s385 = sphi 0, %s384
      %s399 = sphi 0, %s385
      %s403 = sphi 0, %s403
      %s405 = sphi 0, %s403
      %s406 = sphi 0, %s405
      %s420 = sphi 0, %s406
      %s426 = sphi 0, %s428
      %s429 = sphi 0, %s426
      %s430 = sphi 0, %s429
      %s446 = sphi 0, %s430
    $region4: #{feature_extractor_forward.1} parent=1 // loop_header_branch
      %31 = sbr.rel (%p29) target = $region8
    $region5: #{feature_extractor_forward.1} parent=1 // loop_body
      %s33 = ssub.s32 %s28, 1
      %s34 = ssub.s32 %s28, 2
      %s35 = sadd.s32 %s28, 1
      %s36 = ssub.s32 %s28, %s35
      %p37 = scmp.eq.s32.totalorder %s36, 0
      %s39 = sadd.s32 %s38, 1
      %s40 = scalar_select %p37, %s38, %s39
      %p43 = pneg %p37
      %p44 = scmp.eq.s32.totalorder %s28, 1
      %p45 = por %p43, %p44
      %p46 = scmp.ne.s32.totalorder %s38, %s41
      %p47 = scmp.eq.s32.totalorder %s28, 0
      %p48 = por %p46, %p47
      %p49 = scmp.ne.s32.totalorder %s38, %s41
      %p50 = scmp.eq.s32.totalorder %s33, 1
      %p51 = por %p49, %p50
      %p52 = scmp.ne.s32.totalorder %s41, %s42
      %p53 = scmp.eq.s32.totalorder %s33, 0
      %p54 = por %p52, %p53
      %p55 = scmp.ne.s32.totalorder %s41, %s42
      %p56 = scmp.eq.s32.totalorder %s34, 1
      %p57 = por %p55, %p56
      %p59 = scmp.ne.s32.totalorder %s42, %s58
      %p60 = scmp.eq.s32.totalorder %s34, 0
      %p61 = por %p59, %p60
      %s62 = ssub.s32 %s28, %s35
      %p63 = scmp.eq.s32.totalorder %s62, 0
      %s65 = sadd.s32 %s64, 1
      %s66 = scalar_select %p63, %s64, %s65
      %p69 = pneg %p63
      %p70 = scmp.eq.s32.totalorder %s28, 1
      %p71 = por %p69, %p70
      %p72 = scmp.ne.s32.totalorder %s64, %s67
      %p73 = scmp.eq.s32.totalorder %s28, 0
      %p74 = por %p72, %p73
      %p75 = scmp.ne.s32.totalorder %s64, %s67
      %p76 = scmp.eq.s32.totalorder %s33, 1
      %p77 = por %p75, %p76
      %p78 = scmp.ne.s32.totalorder %s67, %s68
      %p79 = scmp.eq.s32.totalorder %s33, 0
      %p80 = por %p78, %p79
      %p81 = scmp.ne.s32.totalorder %s67, %s68
      %p82 = scmp.eq.s32.totalorder %s34, 1
      %p83 = por %p81, %p82
      %p85 = scmp.ne.s32.totalorder %s68, %s84
      %p86 = scmp.eq.s32.totalorder %s34, 0
      %p87 = por %p85, %p86
      %s89 = sadd.s32 %s88, 1
      %p92 = scmp.eq.s32.totalorder %s28, 1
      %p93 = scmp.ne.s32.totalorder %s88, %s90
      %p94 = scmp.eq.s32.totalorder %s28, 0
      %p95 = por %p93, %p94
      %p96 = scmp.ne.s32.totalorder %s88, %s90
      %p97 = scmp.eq.s32.totalorder %s33, 1
      %p98 = por %p96, %p97
      %p99 = scmp.ne.s32.totalorder %s90, %s91
      %p100 = scmp.eq.s32.totalorder %s33, 0
      %p101 = por %p99, %p100
      %p102 = scmp.ne.s32.totalorder %s90, %s91
      %p103 = scmp.eq.s32.totalorder %s34, 1
      %p104 = por %p102, %p103
      %p106 = scmp.ne.s32.totalorder %s91, %s105
      %p107 = scmp.eq.s32.totalorder %s34, 0
      %p108 = por %p106, %p107
      %s110 = sadd.s32 %s109, 1
      %p113 = scmp.eq.s32.totalorder %s28, 1
      %p114 = scmp.ne.s32.totalorder %s109, %s111
      %p115 = scmp.eq.s32.totalorder %s28, 0
      %p116 = por %p114, %p115
      %p117 = scmp.ne.s32.totalorder %s109, %s111
      %p118 = scmp.eq.s32.totalorder %s33, 1
      %p119 = por %p117, %p118
      %p120 = scmp.ne.s32.totalorder %s111, %s112
      %p121 = scmp.eq.s32.totalorder %s33, 0
      %p122 = por %p120, %p121
      %p123 = scmp.ne.s32.totalorder %s111, %s112
      %p124 = scmp.eq.s32.totalorder %s34, 1
      %p125 = por %p123, %p124
      %p127 = scmp.ne.s32.totalorder %s112, %s126
      %p128 = scmp.eq.s32.totalorder %s34, 0
      %p129 = por %p127, %p128
      %s131 = sadd.s32 %s130, 1
      %p134 = scmp.eq.s32.totalorder %s28, 1
      %p135 = scmp.ne.s32.totalorder %s130, %s132
      %p136 = scmp.eq.s32.totalorder %s28, 0
      %p137 = por %p135, %p136
      %p138 = scmp.ne.s32.totalorder %s130, %s132
      %p139 = scmp.eq.s32.totalorder %s33, 1
      %p140 = por %p138, %p139
      %p141 = scmp.ne.s32.totalorder %s132, %s133
      %p142 = scmp.eq.s32.totalorder %s33, 0
      %p143 = por %p141, %p142
      %p144 = scmp.ne.s32.totalorder %s132, %s133
      %p145 = scmp.eq.s32.totalorder %s34, 1
      %p146 = por %p144, %p145
      %p148 = scmp.ne.s32.totalorder %s133, %s147
      %p149 = scmp.eq.s32.totalorder %s34, 0
      %p150 = por %p148, %p149
      %s152 = sadd.s32 %s151, 1
      %p155 = scmp.eq.s32.totalorder %s28, 1
      %p156 = scmp.ne.s32.totalorder %s151, %s153
      %p157 = scmp.eq.s32.totalorder %s28, 0
      %p158 = por %p156, %p157
      %p159 = scmp.ne.s32.totalorder %s151, %s153
      %p160 = scmp.eq.s32.totalorder %s33, 1
      %p161 = por %p159, %p160
      %p162 = scmp.ne.s32.totalorder %s153, %s154
      %p163 = scmp.eq.s32.totalorder %s33, 0
      %p164 = por %p162, %p163
      %p165 = scmp.ne.s32.totalorder %s153, %s154
      %p166 = scmp.eq.s32.totalorder %s34, 1
      %p167 = por %p165, %p166
      %p169 = scmp.ne.s32.totalorder %s154, %s168
      %p170 = scmp.eq.s32.totalorder %s34, 0
      %p171 = por %p169, %p170
      %s173 = sadd.s32 %s172, 1
      %p176 = scmp.eq.s32.totalorder %s28, 1
      %p177 = scmp.ne.s32.totalorder %s172, %s174
      %p178 = scmp.eq.s32.totalorder %s28, 0
      %p179 = por %p177, %p178
      %p180 = scmp.ne.s32.totalorder %s172, %s174
      %p181 = scmp.eq.s32.totalorder %s33, 1
      %p182 = por %p180, %p181
      %p183 = scmp.ne.s32.totalorder %s174, %s175
      %p184 = scmp.eq.s32.totalorder %s33, 0
      %p185 = por %p183, %p184
      %p186 = scmp.ne.s32.totalorder %s174, %s175
      %p187 = scmp.eq.s32.totalorder %s34, 1
      %p188 = por %p186, %p187
      %p190 = scmp.ne.s32.totalorder %s175, %s189
      %p191 = scmp.eq.s32.totalorder %s34, 0
      %p192 = por %p190, %p191
      %s194 = sadd.s32 %s193, 1
      %p197 = scmp.eq.s32.totalorder %s28, 1
      %p198 = scmp.ne.s32.totalorder %s193, %s195
      %p199 = scmp.eq.s32.totalorder %s28, 0
      %p200 = por %p198, %p199
      %p201 = scmp.ne.s32.totalorder %s193, %s195
      %p202 = scmp.eq.s32.totalorder %s33, 1
      %p203 = por %p201, %p202
      %p204 = scmp.ne.s32.totalorder %s195, %s196
      %p205 = scmp.eq.s32.totalorder %s33, 0
      %p206 = por %p204, %p205
      %p207 = scmp.ne.s32.totalorder %s195, %s196
      %p208 = scmp.eq.s32.totalorder %s34, 1
      %p209 = por %p207, %p208
      %p211 = scmp.ne.s32.totalorder %s196, %s210
      %p212 = scmp.eq.s32.totalorder %s34, 0
      %p213 = por %p211, %p212
      %s215 = sadd.s32 %s214, 1
      %p218 = scmp.eq.s32.totalorder %s28, 1
      %p219 = scmp.ne.s32.totalorder %s214, %s216
      %p220 = scmp.eq.s32.totalorder %s28, 0
      %p221 = por %p219, %p220
      %p222 = scmp.ne.s32.totalorder %s214, %s216
      %p223 = scmp.eq.s32.totalorder %s33, 1
      %p224 = por %p222, %p223
      %p225 = scmp.ne.s32.totalorder %s216, %s217
      %p226 = scmp.eq.s32.totalorder %s33, 0
      %p227 = por %p225, %p226
      %p228 = scmp.ne.s32.totalorder %s216, %s217
      %p229 = scmp.eq.s32.totalorder %s34, 1
      %p230 = por %p228, %p229
      %p232 = scmp.ne.s32.totalorder %s217, %s231
      %p233 = scmp.eq.s32.totalorder %s34, 0
      %p234 = por %p232, %p233
      %s236 = sadd.s32 %s235, 1
      %p239 = scmp.eq.s32.totalorder %s28, 1
      %p240 = scmp.ne.s32.totalorder %s235, %s237
      %p241 = scmp.eq.s32.totalorder %s28, 0
      %p242 = por %p240, %p241
      %p243 = scmp.ne.s32.totalorder %s235, %s237
      %p244 = scmp.eq.s32.totalorder %s33, 1
      %p245 = por %p243, %p244
      %p246 = scmp.ne.s32.totalorder %s237, %s238
      %p247 = scmp.eq.s32.totalorder %s33, 0
      %p248 = por %p246, %p247
      %p249 = scmp.ne.s32.totalorder %s237, %s238
      %p250 = scmp.eq.s32.totalorder %s34, 1
      %p251 = por %p249, %p250
      %p253 = scmp.ne.s32.totalorder %s238, %s252
      %p254 = scmp.eq.s32.totalorder %s34, 0
      %p255 = por %p253, %p254
      %s257 = sadd.s32 %s256, 1
      %p260 = scmp.eq.s32.totalorder %s28, 1
      %p261 = scmp.ne.s32.totalorder %s256, %s258
      %p262 = scmp.eq.s32.totalorder %s28, 0
      %p263 = por %p261, %p262
      %p264 = scmp.ne.s32.totalorder %s256, %s258
      %p265 = scmp.eq.s32.totalorder %s33, 1
      %p266 = por %p264, %p265
      %p267 = scmp.ne.s32.totalorder %s258, %s259
      %p268 = scmp.eq.s32.totalorder %s33, 0
      %p269 = por %p267, %p268
      %p270 = scmp.ne.s32.totalorder %s258, %s259
      %p271 = scmp.eq.s32.totalorder %s34, 1
      %p272 = por %p270, %p271
      %p274 = scmp.ne.s32.totalorder %s259, %s273
      %p275 = scmp.eq.s32.totalorder %s34, 0
      %p276 = por %p274, %p275
      %s278 = sadd.s32 %s277, 1
      %p281 = scmp.eq.s32.totalorder %s28, 1
      %p282 = scmp.ne.s32.totalorder %s277, %s279
      %p283 = scmp.eq.s32.totalorder %s28, 0
      %p284 = por %p282, %p283
      %p285 = scmp.ne.s32.totalorder %s277, %s279
      %p286 = scmp.eq.s32.totalorder %s33, 1
      %p287 = por %p285, %p286
      %p288 = scmp.ne.s32.totalorder %s279, %s280
      %p289 = scmp.eq.s32.totalorder %s33, 0
      %p290 = por %p288, %p289
      %p291 = scmp.ne.s32.totalorder %s279, %s280
      %p292 = scmp.eq.s32.totalorder %s34, 1
      %p293 = por %p291, %p292
      %p295 = scmp.ne.s32.totalorder %s280, %s294
      %p296 = scmp.eq.s32.totalorder %s34, 0
      %p297 = por %p295, %p296
      %s299 = sadd.s32 %s298, 1
      %p302 = scmp.eq.s32.totalorder %s28, 1
      %p303 = scmp.ne.s32.totalorder %s298, %s300
      %p304 = scmp.eq.s32.totalorder %s28, 0
      %p305 = por %p303, %p304
      %p306 = scmp.ne.s32.totalorder %s298, %s300
      %p307 = scmp.eq.s32.totalorder %s33, 1
      %p308 = por %p306, %p307
      %p309 = scmp.ne.s32.totalorder %s300, %s301
      %p310 = scmp.eq.s32.totalorder %s33, 0
      %p311 = por %p309, %p310
      %p312 = scmp.ne.s32.totalorder %s300, %s301
      %p313 = scmp.eq.s32.totalorder %s34, 1
      %p314 = por %p312, %p313
      %p316 = scmp.ne.s32.totalorder %s301, %s315
      %p317 = scmp.eq.s32.totalorder %s34, 0
      %p318 = por %p316, %p317
      %s320 = sadd.s32 %s319, 1
      %p323 = scmp.eq.s32.totalorder %s28, 1
      %p324 = scmp.ne.s32.totalorder %s319, %s321
      %p325 = scmp.eq.s32.totalorder %s28, 0
      %p326 = por %p324, %p325
      %p327 = scmp.ne.s32.totalorder %s319, %s321
      %p328 = scmp.eq.s32.totalorder %s33, 1
      %p329 = por %p327, %p328
      %p330 = scmp.ne.s32.totalorder %s321, %s322
      %p331 = scmp.eq.s32.totalorder %s33, 0
      %p332 = por %p330, %p331
      %p333 = scmp.ne.s32.totalorder %s321, %s322
      %p334 = scmp.eq.s32.totalorder %s34, 1
      %p335 = por %p333, %p334
      %p337 = scmp.ne.s32.totalorder %s322, %s336
      %p338 = scmp.eq.s32.totalorder %s34, 0
      %p339 = por %p337, %p338
      %s341 = sadd.s32 %s340, 1
      %p344 = scmp.eq.s32.totalorder %s28, 1
      %p345 = scmp.ne.s32.totalorder %s340, %s342
      %p346 = scmp.eq.s32.totalorder %s28, 0
      %p347 = por %p345, %p346
      %p348 = scmp.ne.s32.totalorder %s340, %s342
      %p349 = scmp.eq.s32.totalorder %s33, 1
      %p350 = por %p348, %p349
      %p351 = scmp.ne.s32.totalorder %s342, %s343
      %p352 = scmp.eq.s32.totalorder %s33, 0
      %p353 = por %p351, %p352
      %p354 = scmp.ne.s32.totalorder %s342, %s343
      %p355 = scmp.eq.s32.totalorder %s34, 1
      %p356 = por %p354, %p355
      %p358 = scmp.ne.s32.totalorder %s343, %s357
      %p359 = scmp.eq.s32.totalorder %s34, 0
      %p360 = por %p358, %p359
      %s362 = sadd.s32 %s361, 1
      %p365 = scmp.eq.s32.totalorder %s28, 1
      %p366 = scmp.ne.s32.totalorder %s361, %s363
      %p367 = scmp.eq.s32.totalorder %s28, 0
      %p368 = por %p366, %p367
      %p369 = scmp.ne.s32.totalorder %s361, %s363
      %p370 = scmp.eq.s32.totalorder %s33, 1
      %p371 = por %p369, %p370
      %p372 = scmp.ne.s32.totalorder %s363, %s364
      %p373 = scmp.eq.s32.totalorder %s33, 0
      %p374 = por %p372, %p373
      %p375 = scmp.ne.s32.totalorder %s363, %s364
      %p376 = scmp.eq.s32.totalorder %s34, 1
      %p377 = por %p375, %p376
      %p379 = scmp.ne.s32.totalorder %s364, %s378
      %p380 = scmp.eq.s32.totalorder %s34, 0
      %p381 = por %p379, %p380
      %s383 = sadd.s32 %s382, 1
      %p386 = scmp.eq.s32.totalorder %s28, 1
      %p387 = scmp.ne.s32.totalorder %s382, %s384
      %p388 = scmp.eq.s32.totalorder %s28, 0
      %p389 = por %p387, %p388
      %p390 = scmp.ne.s32.totalorder %s382, %s384
      %p391 = scmp.eq.s32.totalorder %s33, 1
      %p392 = por %p390, %p391
      %p393 = scmp.ne.s32.totalorder %s384, %s385
      %p394 = scmp.eq.s32.totalorder %s33, 0
      %p395 = por %p393, %p394
      %p396 = scmp.ne.s32.totalorder %s384, %s385
      %p397 = scmp.eq.s32.totalorder %s34, 1
      %p398 = por %p396, %p397
      %p400 = scmp.ne.s32.totalorder %s385, %s399
      %p401 = scmp.eq.s32.totalorder %s34, 0
      %p402 = por %p400, %p401
      %s404 = sadd.s32 %s403, 1
      %p407 = scmp.eq.s32.totalorder %s28, 1
      %p408 = scmp.ne.s32.totalorder %s403, %s405
      %p409 = scmp.eq.s32.totalorder %s28, 0
      %p410 = por %p408, %p409
      %p411 = scmp.ne.s32.totalorder %s403, %s405
      %p412 = scmp.eq.s32.totalorder %s33, 1
      %p413 = por %p411, %p412
      %p414 = scmp.ne.s32.totalorder %s405, %s406
      %p415 = scmp.eq.s32.totalorder %s33, 0
      %p416 = por %p414, %p415
      %p417 = scmp.ne.s32.totalorder %s405, %s406
      %p418 = scmp.eq.s32.totalorder %s34, 1
      %p419 = por %p417, %p418
      %p421 = scmp.ne.s32.totalorder %s406, %s420
      %p422 = scmp.eq.s32.totalorder %s34, 0
      %p423 = por %p421, %p422
      %s424 = ssub.s32 %s28, %s35
      %p425 = scmp.eq.s32.totalorder %s424, 0
      %s427 = sadd.s32 %s426, 1
      %s428 = scalar_select %p425, %s426, %s427
      %p431 = pneg %p425
      %p432 = scmp.eq.s32.totalorder %s28, 1
      %p433 = por %p431, %p432
      %p434 = scmp.ne.s32.totalorder %s426, %s429
      %p435 = scmp.eq.s32.totalorder %s28, 0
      %p436 = por %p434, %p435
      %p437 = scmp.ne.s32.totalorder %s426, %s429
      %p438 = scmp.eq.s32.totalorder %s33, 1
      %p439 = por %p437, %p438
      %p440 = scmp.ne.s32.totalorder %s429, %s430
      %p441 = scmp.eq.s32.totalorder %s33, 0
      %p442 = por %p440, %p441
      %p443 = scmp.ne.s32.totalorder %s429, %s430
      %p444 = scmp.eq.s32.totalorder %s34, 1
      %p445 = por %p443, %p444
      %p447 = scmp.ne.s32.totalorder %s430, %s446
      %p448 = scmp.eq.s32.totalorder %s34, 0
      %p449 = por %p447, %p448
      %p450 = scmp.le.s32.totalorder 1, %s28
      %p451 = scmp.lt.s32.totalorder %s28, 3
      %p452 = pnand %p450, %p451
      %p453 = pneg %p452
      // Predicated region
      $region9: #{feature_extractor_forward.1} parent=5 // pred_check
        _
      $region10: #{feature_extractor_forward.1} parent=5 // pred_check_branch
        %455 = sbr.rel (%p452) target = $region12
      $region11: #{feature_extractor_forward.1} parent=5 // pred_region
        %s456 = ssub.s32 %s28, 1
        // Predicated region
        $region13: #{feature_extractor_forward.1} parent=11 // pred_check
          %p457 = pneg %p101
        $region14: #{feature_extractor_forward.1} parent=11 // pred_check_branch
          %459 = sbr.rel (%p457) target = $region16
        $region15: #{feature_extractor_forward.1} parent=11 // pred_region
          _
        $region16: #{feature_extractor_forward.1} parent=11 // pred_fallthru
          _
        // Predicated region
        $region17: #{feature_extractor_forward.1} parent=11 // pred_check
          %p460 = pneg %p122
        $region18: #{feature_extractor_forward.1} parent=11 // pred_check_branch
          %462 = sbr.rel (%p460) target = $region20
        $region19: #{feature_extractor_forward.1} parent=11 // pred_region
          _
        $region20: #{feature_extractor_forward.1} parent=11 // pred_fallthru
          _
        // Predicated region
        $region21: #{feature_extractor_forward.1} parent=11 // pred_check
          %p463 = pneg %p143
        $region22: #{feature_extractor_forward.1} parent=11 // pred_check_branch
          %465 = sbr.rel (%p463) target = $region24
        $region23: #{feature_extractor_forward.1} parent=11 // pred_region
          _
        $region24: #{feature_extractor_forward.1} parent=11 // pred_fallthru
          _
        // Predicated region
        $region25: #{feature_extractor_forward.1} parent=11 // pred_check
          %p466 = pneg %p164
        $region26: #{feature_extractor_forward.1} parent=11 // pred_check_branch
          %468 = sbr.rel (%p466) target = $region28
        $region27: #{feature_extractor_forward.1} parent=11 // pred_region
          _
        $region28: #{feature_extractor_forward.1} parent=11 // pred_fallthru
          _
        // Predicated region
        $region29: #{feature_extractor_forward.1} parent=11 // pred_check
          %p469 = pneg %p185
        $region30: #{feature_extractor_forward.1} parent=11 // pred_check_branch
          %471 = sbr.rel (%p469) target = $region32
        $region31: #{feature_extractor_forward.1} parent=11 // pred_region
          _
        $region32: #{feature_extractor_forward.1} parent=11 // pred_fallthru
          _
        // Predicated region
        $region33: #{feature_extractor_forward.1} parent=11 // pred_check
          %p472 = pneg %p206
        $region34: #{feature_extractor_forward.1} parent=11 // pred_check_branch
          %474 = sbr.rel (%p472) target = $region36
        $region35: #{feature_extractor_forward.1} parent=11 // pred_region
          _
        $region36: #{feature_extractor_forward.1} parent=11 // pred_fallthru
          _
        // Predicated region
        $region37: #{feature_extractor_forward.1} parent=11 // pred_check
          %p475 = pneg %p227
        $region38: #{feature_extractor_forward.1} parent=11 // pred_check_branch
          %477 = sbr.rel (%p475) target = $region40
        $region39: #{feature_extractor_forward.1} parent=11 // pred_region
          _
        $region40: #{feature_extractor_forward.1} parent=11 // pred_fallthru
          _
        // Predicated region
        $region41: #{feature_extractor_forward.1} parent=11 // pred_check
          %p478 = pneg %p248
        $region42: #{feature_extractor_forward.1} parent=11 // pred_check_branch
          %480 = sbr.rel (%p478) target = $region44
        $region43: #{feature_extractor_forward.1} parent=11 // pred_region
          _
        $region44: #{feature_extractor_forward.1} parent=11 // pred_fallthru
          _
        // Predicated region
        $region45: #{feature_extractor_forward.1} parent=11 // pred_check
          %p481 = pneg %p269
        $region46: #{feature_extractor_forward.1} parent=11 // pred_check_branch
          %483 = sbr.rel (%p481) target = $region48
        $region47: #{feature_extractor_forward.1} parent=11 // pred_region
          _
        $region48: #{feature_extractor_forward.1} parent=11 // pred_fallthru
          _
        // Predicated region
        $region49: #{feature_extractor_forward.1} parent=11 // pred_check
          %p484 = pneg %p290
        $region50: #{feature_extractor_forward.1} parent=11 // pred_check_branch
          %486 = sbr.rel (%p484) target = $region52
        $region51: #{feature_extractor_forward.1} parent=11 // pred_region
          _
        $region52: #{feature_extractor_forward.1} parent=11 // pred_fallthru
          _
        // Predicated region
        $region53: #{feature_extractor_forward.1} parent=11 // pred_check
          %p487 = pneg %p311
        $region54: #{feature_extractor_forward.1} parent=11 // pred_check_branch
          %489 = sbr.rel (%p487) target = $region56
        $region55: #{feature_extractor_forward.1} parent=11 // pred_region
          _
        $region56: #{feature_extractor_forward.1} parent=11 // pred_fallthru
          _
        // Predicated region
        $region57: #{feature_extractor_forward.1} parent=11 // pred_check
          %p490 = pneg %p332
        $region58: #{feature_extractor_forward.1} parent=11 // pred_check_branch
          %492 = sbr.rel (%p490) target = $region60
        $region59: #{feature_extractor_forward.1} parent=11 // pred_region
          _
        $region60: #{feature_extractor_forward.1} parent=11 // pred_fallthru
          _
        // Predicated region
        $region61: #{feature_extractor_forward.1} parent=11 // pred_check
          %p493 = pneg %p353
        $region62: #{feature_extractor_forward.1} parent=11 // pred_check_branch
          %495 = sbr.rel (%p493) target = $region64
        $region63: #{feature_extractor_forward.1} parent=11 // pred_region
          %497 = vsyncadd [#allocation4], 0
          %s498 = sshll.u32 %s14, 4
          %s499 = int_to_ptr.hbm [resolvable:$true] %s498
          %s500 = sshll.u32 [#allocation3], 4
          %s501 = int_to_ptr.vmem [resolvable:$true] %s500
          %506 = dma.hbm_to_vmem [thread:$0]  %s499, 16384, %s501, [#allocation4], 128, 128, 8
        $region64: #{feature_extractor_forward.1} parent=11 // pred_fallthru
          _
        // Predicated region
        $region65: #{feature_extractor_forward.1} parent=11 // pred_check
          %p507 = pneg %p374
        $region66: #{feature_extractor_forward.1} parent=11 // pred_check_branch
          %509 = sbr.rel (%p507) target = $region68
        $region67: #{feature_extractor_forward.1} parent=11 // pred_region
          _
        $region68: #{feature_extractor_forward.1} parent=11 // pred_fallthru
          _
        // Predicated region
        $region69: #{feature_extractor_forward.1} parent=11 // pred_check
          %p510 = pneg %p395
        $region70: #{feature_extractor_forward.1} parent=11 // pred_check_branch
          %512 = sbr.rel (%p510) target = $region72
        $region71: #{feature_extractor_forward.1} parent=11 // pred_region
          _
        $region72: #{feature_extractor_forward.1} parent=11 // pred_fallthru
          _
        // Predicated region
        $region73: #{feature_extractor_forward.1} parent=11 // pred_check
          %p513 = pneg %p416
        $region74: #{feature_extractor_forward.1} parent=11 // pred_check_branch
          %515 = sbr.rel (%p513) target = $region76
        $region75: #{feature_extractor_forward.1} parent=11 // pred_region
          _
        $region76: #{feature_extractor_forward.1} parent=11 // pred_fallthru
          _
      $region12: #{feature_extractor_forward.1} parent=5 // pred_fallthru
        _
      %p516 = scmp.lt.s32.totalorder %s28, 2
      // Predicated region
      $region77: #{feature_extractor_forward.1} parent=5 // pred_check
        %p517 = pneg %p516
      $region78: #{feature_extractor_forward.1} parent=5 // pred_check_branch
        %519 = sbr.rel (%p517) target = $region80
      $region79: #{feature_extractor_forward.1} parent=5 // pred_region
        // Predicated region
        $region81: #{feature_extractor_forward.1} parent=79 // pred_check
          %p520 = pneg %p48
        $region82: #{feature_extractor_forward.1} parent=79 // pred_check_branch
          %522 = sbr.rel (%p520) target = $region84
        $region83: #{feature_extractor_forward.1} parent=79 // pred_region
          %s523 = smul.u32 2, %s28
          %p524 = scmp.lt.s32.totalorder %s523, 3
          %s525 = scalar_select %p524, %s523, 3
          %s526 = smul.addr %s525, 2
          %s527 = smul.addr %s526, 4
          %s528 = scalar_lea.vmem %s0, %s527
          %s529 = smul.u32 2, %s28
        $region84: #{feature_extractor_forward.1} parent=79 // pred_fallthru
          _
        // Predicated region
        $region85: #{feature_extractor_forward.1} parent=79 // pred_check
          %p530 = pneg %p74
        $region86: #{feature_extractor_forward.1} parent=79 // pred_check_branch
          %532 = sbr.rel (%p530) target = $region88
        $region87: #{feature_extractor_forward.1} parent=79 // pred_region
          %s533 = smul.u32 2, %s28
          %p534 = scmp.lt.s32.totalorder %s533, 3
          %s535 = scalar_select %p534, %s533, 3
          %s536 = scalar_lea.vmem %s1, %s535
          %s537 = smul.u32 2, %s28
        $region88: #{feature_extractor_forward.1} parent=79 // pred_fallthru
          _
      $region80: #{feature_extractor_forward.1} parent=5 // pred_fallthru
        _
      %p538 = scmp.le.s32.totalorder 1, %s28
      %p539 = scmp.lt.s32.totalorder %s28, 3
      %p540 = pnand %p538, %p539
      %p541 = pneg %p540
      // Predicated region
      $region89: #{feature_extractor_forward.1} parent=5 // pred_check
        _
      $region90: #{feature_extractor_forward.1} parent=5 // pred_check_branch
        %543 = sbr.rel (%p540) target = $region92
      $region91: #{feature_extractor_forward.1} parent=5 // pred_region
        %s544 = ssub.s32 %s28, 1
        // Predicated region
        $region93: #{feature_extractor_forward.1} parent=91 // pred_check
          %p545 = pneg %p353
        $region94: #{feature_extractor_forward.1} parent=91 // pred_check_branch
          %547 = sbr.rel (%p545) target = $region96
        $region95: #{feature_extractor_forward.1} parent=91 // pred_region
          %549 = dma.done [#allocation4], 16384
        $region96: #{feature_extractor_forward.1} parent=91 // pred_fallthru
          _
        %s550 = smul.u32 2, %s33
        %p551 = scmp.lt.s32.totalorder %s550, 3
        %s552 = scalar_select %p551, %s550, 3
        %s553 = smul.addr %s552, 2
        %s554 = smul.addr %s553, 4
        %s555 = scalar_lea.vmem %s0, %s554
        %p556 = pneg %p54
        %p557 = pneg %p51
        %s558 = smul.u32 2, %s33
        %p559 = scmp.lt.s32.totalorder %s558, 3
        %s560 = scalar_select %p559, %s558, 3
        %s561 = scalar_lea.vmem %s1, %s560
        %p562 = pneg %p80
        %p563 = pneg %p77
        %p564 = pneg %p101
        %p565 = pneg %p98
        %p566 = pneg %p122
        %p567 = pneg %p119
        %p568 = pneg %p143
        %p569 = pneg %p140
        %p570 = pneg %p164
        %p571 = pneg %p161
        %p572 = pneg %p185
        %p573 = pneg %p182
        %p574 = pneg %p206
        %p575 = pneg %p203
        %p576 = pneg %p227
        %p577 = pneg %p224
        %p578 = pneg %p248
        %p579 = pneg %p245
        %p580 = pneg %p269
        %p581 = pneg %p266
        %p582 = pneg %p290
        %p583 = pneg %p287
        %p584 = pneg %p311
        %p585 = pneg %p308
        %p586 = pneg %p332
        %p587 = pneg %p329
        %p588 = pneg %p353
        %p589 = pneg %p350
        %p590 = pneg %p374
        %p591 = pneg %p371
        %p592 = pneg %p395
        %p593 = pneg %p392
        %p594 = pneg %p416
        %p595 = pneg %p413
        %p596 = pneg %p442
        %p597 = pneg %p439
        %s598 = sand.u32 %s429, 1
        %s599 = scalar_lea.sflag [#allocation5], %s598
        %s600 = sand.u32 %s429, 1
        %s601 = smul.addr %s600, 16
        %s602 = scalar_lea.vmem [#allocation6], %s601
        %s603 = smul.u32 2, %s33
        %p604 = scmp.lt.s32.totalorder %s603, 3
        %s605 = scalar_select %p604, %s603, 3
        %s606 = smul.addr %s605, 2
        %s607 = smul.addr %s606, 4
        %s608 = scalar_lea.vmem %s0, %s607
        %s609 = smul.u32 2, %s33
        %s610 = smul.u32 2, %s33
        %p611 = scmp.lt.s32.totalorder %s610, 3
        %s612 = scalar_select %p611, %s610, 3
        %s613 = scalar_lea.vmem %s1, %s612
        %s614 = smul.u32 2, %s33
        %s615 = smul.u32 2, %s33
        %v617 = vld [vmem:[%s608] sm:$0xff]
        %v618 = vld [vmem:[%s608 + $0x8] sm:$0xff]
        %v619 = vunpack.c.l.bf16 %v617
        %v620 = vunpack.c.h.bf16 %v617
        %v621 = vunpack.c.l.bf16 %v618
        %v622 = vunpack.c.h.bf16 %v618
        %v623 = vld [vmem:[%s3] sm:$0xff]
        %v624 = vld [vmem:[%s2] sm:$0xf]
        %v625 = vadd.f32 %v619, %v620
        %626 = vadd.xlane.f32.xlu0 %v625
        %v627 = vpop.xlane.xlu0 %626
        %v628 = vadd.f32 %v621, %v622
        %629 = vadd.xlane.f32.xlu0 %v628
        %v630 = vpop.xlane.xlu0 %629
        %v631 = vrcp.pop 256.0
        %v632 = vmul.f32 256.0, %v631
        %v633 = vsub.f32 1.0, %v632
        %v634 = vmul.f32 %v631, %v633
        %v635 = vadd.f32 %v631, %v634
        %vm636 = vweird.f32 %v631
        %v637 = vsel %vm636, %v631, %v635
        %v638 = vmul.f32 %v627, %v637
        %v639 = vmul.f32 %v630, %v637
        %v640 = vsub.f32 %v619, %v638
        %v641 = vsub.f32 %v620, %v638
        %v642 = vsub.f32 %v621, %v639
        %v643 = vsub.f32 %v622, %v639
        %v644 = vmul.f32 %v640, %v640
        %v645 = vmul.f32 %v641, %v641
        %v646 = vmul.f32 %v642, %v642
        %v647 = vmul.f32 %v643, %v643
        %v648 = vadd.f32 %v644, %v645
        %649 = vadd.xlane.f32.xlu0 %v648
        %v650 = vpop.xlane.xlu0 %649
        %v651 = vadd.f32 %v646, %v647
        %652 = vadd.xlane.f32.xlu0 %v651
        %v653 = vpop.xlane.xlu0 %652
        %v654 = vmul.f32 %v650, %v637
        %v655 = vmul.f32 %v653, %v637
        %v656 = vadd.f32 %v654, 1e-05
        %v657 = vadd.f32 %v655, 1e-05
        %v658 = vrsqrt.pop %v656
        %v659 = vmul.f32 %v658, %v656
        %v660 = vmul.f32 %v659, %v658
        %v661 = vmul.f32 0.5, %v660
        %v662 = vsub.f32 1.5, %v661
        %v663 = vmul.f32 %v658, %v662
        %vm664 = vweird.f32 %v656
        %vm665 = vweird.f32 %v658
        %vm666 = vmor %vm664, %vm665
        %v667 = vsel %vm666, %v658, %v663
        %v668 = vrsqrt.pop %v657
        %v669 = vmul.f32 %v668, %v657
        %v670 = vmul.f32 %v669, %v668
        %v671 = vmul.f32 0.5, %v670
        %v672 = vsub.f32 1.5, %v671
        %v673 = vmul.f32 %v668, %v672
        %vm674 = vweird.f32 %v657
        %vm675 = vweird.f32 %v668
        %vm676 = vmor %vm674, %vm675
        %v677 = vsel %vm676, %v668, %v673
        %v678 = vmul.f32 %v640, %v667
        %v679 = vmul.f32 %v641, %v667
        %v680 = vmul.f32 %v642, %v677
        %v681 = vmul.f32 %v643, %v677
        %v682 = vld [vmem:[%s4] sm:$0x3]
        %v684 = vperm.slane %v682, 0
        %v685 = vperm.slane %v682, 1
        %v688 = vmul.f32 %v678, %v684
        %v689 = vmul.f32 %v679, %v685
        %v690 = vmul.f32 %v680, %v684
        %v691 = vmul.f32 %v681, %v685
        %v692 = vld [vmem:[%s5] sm:$0x3]
        %v694 = vperm.slane %v692, 0
        %v695 = vperm.slane %v692, 1
        %v698 = vadd.f32 %v688, %v694
        %v699 = vadd.f32 %v689, %v695
        %v700 = vadd.f32 %v690, %v694
        %v701 = vadd.f32 %v691, %v695
        %v702 = vpack.c.bf16 %v700, %v698
        %v703 = vpack.c.bf16 %v701, %v699
        %v704 = vld [vmem:[%s6] sm:$0xff]
        %v705 = vld [vmem:[%s6 + $0x8] sm:$0xff]
        %v706 = vld [vmem:[%s6 + $0x10] sm:$0xff]
        %v707 = vld [vmem:[%s6 + $0x18] sm:$0xff]
        %v708 = vld [vmem:[%s6 + $0x20] sm:$0xff]
        %v709 = vld [vmem:[%s6 + $0x28] sm:$0xff]
        %v710 = vld [vmem:[%s6 + $0x30] sm:$0xff]
        %v711 = vld [vmem:[%s6 + $0x38] sm:$0xff]
        %v712 = vld [vmem:[%s6 + $0x40] sm:$0xff]
        %v713 = vld [vmem:[%s6 + $0x48] sm:$0xff]
        %v714 = vld [vmem:[%s6 + $0x50] sm:$0xff]
        %v715 = vld [vmem:[%s6 + $0x58] sm:$0xff]
        %v716 = vld [vmem:[%s6 + $0x60] sm:$0xff]
        %v717 = vld [vmem:[%s6 + $0x68] sm:$0xff]
        %v718 = vld [vmem:[%s6 + $0x70] sm:$0xff]
        %v719 = vld [vmem:[%s6 + $0x78] sm:$0xff]
        %v720 = vld [vmem:[%s6 + $0x80] sm:$0xff]
        %v721 = vld [vmem:[%s6 + $0x88] sm:$0xff]
        %v722 = vld [vmem:[%s6 + $0x90] sm:$0xff]
        %v723 = vld [vmem:[%s6 + $0x98] sm:$0xff]
        %v724 = vld [vmem:[%s6 + $0xa0] sm:$0xff]
        %v725 = vld [vmem:[%s6 + $0xa8] sm:$0xff]
        %v726 = vld [vmem:[%s6 + $0xb0] sm:$0xff]
        %v727 = vld [vmem:[%s6 + $0xb8] sm:$0xff]
        %v728 = vld [vmem:[%s6 + $0xc0] sm:$0xff]
        %v729 = vld [vmem:[%s6 + $0xc8] sm:$0xff]
        %v730 = vld [vmem:[%s6 + $0xd0] sm:$0xff]
        %v731 = vld [vmem:[%s6 + $0xd8] sm:$0xff]
        %v732 = vld [vmem:[%s6 + $0xe0] sm:$0xff]
        %v733 = vld [vmem:[%s6 + $0xe8] sm:$0xff]
        %v734 = vld [vmem:[%s6 + $0xf0] sm:$0xff]
        %v735 = vld [vmem:[%s6 + $0xf8] sm:$0xff]
        %v736 = vld [vmem:[%s6 + $0x100] sm:$0xff]
        %v737 = vld [vmem:[%s6 + $0x108] sm:$0xff]
        %v738 = vld [vmem:[%s6 + $0x110] sm:$0xff]
        %v739 = vld [vmem:[%s6 + $0x118] sm:$0xff]
        %v740 = vld [vmem:[%s6 + $0x120] sm:$0xff]
        %v741 = vld [vmem:[%s6 + $0x128] sm:$0xff]
        %v742 = vld [vmem:[%s6 + $0x130] sm:$0xff]
        %v743 = vld [vmem:[%s6 + $0x138] sm:$0xff]
        %v744 = vld [vmem:[%s6 + $0x140] sm:$0xff]
        %v745 = vld [vmem:[%s6 + $0x148] sm:$0xff]
        %v746 = vld [vmem:[%s6 + $0x150] sm:$0xff]
        %v747 = vld [vmem:[%s6 + $0x158] sm:$0xff]
        %v748 = vld [vmem:[%s6 + $0x160] sm:$0xff]
        %v749 = vld [vmem:[%s6 + $0x168] sm:$0xff]
        %v750 = vld [vmem:[%s6 + $0x170] sm:$0xff]
        %v751 = vld [vmem:[%s6 + $0x178] sm:$0xff]
        %v752 = vld [vmem:[%s6 + $0x180] sm:$0xff]
        %v753 = vld [vmem:[%s6 + $0x188] sm:$0xff]
        %v754 = vld [vmem:[%s6 + $0x190] sm:$0xff]
        %v755 = vld [vmem:[%s6 + $0x198] sm:$0xff]
        %v756 = vld [vmem:[%s6 + $0x1a0] sm:$0xff]
        %v757 = vld [vmem:[%s6 + $0x1a8] sm:$0xff]
        %v758 = vld [vmem:[%s6 + $0x1b0] sm:$0xff]
        %v759 = vld [vmem:[%s6 + $0x1b8] sm:$0xff]
        %v760 = vld [vmem:[%s6 + $0x1c0] sm:$0xff]
        %v761 = vld [vmem:[%s6 + $0x1c8] sm:$0xff]
        %v762 = vld [vmem:[%s6 + $0x1d0] sm:$0xff]
        %v763 = vld [vmem:[%s6 + $0x1d8] sm:$0xff]
        %v764 = vld [vmem:[%s6 + $0x1e0] sm:$0xff]
        %v765 = vld [vmem:[%s6 + $0x1e8] sm:$0xff]
        %v766 = vld [vmem:[%s6 + $0x1f0] sm:$0xff]
        %v767 = vld [vmem:[%s6 + $0x1f8] sm:$0xff]
        %v768 = vld [vmem:[%s6 + $0x200] sm:$0xff]
        %v769 = vld [vmem:[%s6 + $0x208] sm:$0xff]
        %v770 = vld [vmem:[%s6 + $0x210] sm:$0xff]
        %v771 = vld [vmem:[%s6 + $0x218] sm:$0xff]
        %v772 = vld [vmem:[%s6 + $0x220] sm:$0xff]
        %v773 = vld [vmem:[%s6 + $0x228] sm:$0xff]
        %v774 = vld [vmem:[%s6 + $0x230] sm:$0xff]
        %v775 = vld [vmem:[%s6 + $0x238] sm:$0xff]
        %v776 = vld [vmem:[%s6 + $0x240] sm:$0xff]
        %v777 = vld [vmem:[%s6 + $0x248] sm:$0xff]
        %v778 = vld [vmem:[%s6 + $0x250] sm:$0xff]
        %v779 = vld [vmem:[%s6 + $0x258] sm:$0xff]
        %v780 = vld [vmem:[%s6 + $0x260] sm:$0xff]
        %v781 = vld [vmem:[%s6 + $0x268] sm:$0xff]
        %v782 = vld [vmem:[%s6 + $0x270] sm:$0xff]
        %v783 = vld [vmem:[%s6 + $0x278] sm:$0xff]
        %v784 = vld [vmem:[%s6 + $0x280] sm:$0xff]
        %v785 = vld [vmem:[%s6 + $0x288] sm:$0xff]
        %v786 = vld [vmem:[%s6 + $0x290] sm:$0xff]
        %v787 = vld [vmem:[%s6 + $0x298] sm:$0xff]
        %v788 = vld [vmem:[%s6 + $0x2a0] sm:$0xff]
        %v789 = vld [vmem:[%s6 + $0x2a8] sm:$0xff]
        %v790 = vld [vmem:[%s6 + $0x2b0] sm:$0xff]
        %v791 = vld [vmem:[%s6 + $0x2b8] sm:$0xff]
        %v792 = vld [vmem:[%s6 + $0x2c0] sm:$0xff]
        %v793 = vld [vmem:[%s6 + $0x2c8] sm:$0xff]
        %v794 = vld [vmem:[%s6 + $0x2d0] sm:$0xff]
        %v795 = vld [vmem:[%s6 + $0x2d8] sm:$0xff]
        %v796 = vld [vmem:[%s6 + $0x2e0] sm:$0xff]
        %v797 = vld [vmem:[%s6 + $0x2e8] sm:$0xff]
        %v798 = vld [vmem:[%s6 + $0x2f0] sm:$0xff]
        %v799 = vld [vmem:[%s6 + $0x2f8] sm:$0xff]
        %v800 = vld [vmem:[%s7] sm:$0x3f]
        %v802 = vperm.slane %v800, 0
        %v803 = vperm.slane %v800, 1
        %v804 = vperm.slane %v800, 2
        %v805 = vperm.slane %v800, 3
        %v806 = vperm.slane %v800, 4
        %v807 = vperm.slane %v800, 5
        %v910 = vunpack.c.l.b16 %v704
        %v911 = vunpack.c.h.b16 %v704
        %v912 = vunpack.c.l.b16 %v705
        %v913 = vunpack.c.h.b16 %v705
        %v914 = vunpack.c.l.b16 %v706
        %v915 = vunpack.c.h.b16 %v706
        %v916 = vunpack.c.l.b16 %v707
        %v917 = vunpack.c.h.b16 %v707
        %v918 = vunpack.c.l.b16 %v708
        %v919 = vunpack.c.h.b16 %v708
        %v920 = vunpack.c.l.b16 %v709
        %v921 = vunpack.c.h.b16 %v709
        %v922 = vunpack.c.l.b16 %v710
        %v923 = vunpack.c.h.b16 %v710
        %v924 = vunpack.c.l.b16 %v711
        %v925 = vunpack.c.h.b16 %v711
        %v926 = vunpack.c.l.b16 %v712
        %v927 = vunpack.c.h.b16 %v712
        %v928 = vunpack.c.l.b16 %v713
        %v929 = vunpack.c.h.b16 %v713
        %v930 = vunpack.c.l.b16 %v714
        %v931 = vunpack.c.h.b16 %v714
        %v932 = vunpack.c.l.b16 %v715
        %v933 = vunpack.c.h.b16 %v715
        %v934 = vunpack.c.l.b16 %v716
        %v935 = vunpack.c.h.b16 %v716
        %v936 = vunpack.c.l.b16 %v717
        %v937 = vunpack.c.h.b16 %v717
        %v938 = vunpack.c.l.b16 %v718
        %v939 = vunpack.c.h.b16 %v718
        %v940 = vunpack.c.l.b16 %v719
        %v941 = vunpack.c.h.b16 %v719
        %v942 = vunpack.c.l.b16 %v720
        %v943 = vunpack.c.h.b16 %v720
        %v944 = vunpack.c.l.b16 %v721
        %v945 = vunpack.c.h.b16 %v721
        %v946 = vunpack.c.l.b16 %v722
        %v947 = vunpack.c.h.b16 %v722
        %v948 = vunpack.c.l.b16 %v723
        %v949 = vunpack.c.h.b16 %v723
        %v950 = vunpack.c.l.b16 %v724
        %v951 = vunpack.c.h.b16 %v724
        %v952 = vunpack.c.l.b16 %v725
        %v953 = vunpack.c.h.b16 %v725
        %v954 = vunpack.c.l.b16 %v726
        %v955 = vunpack.c.h.b16 %v726
        %v956 = vunpack.c.l.b16 %v727
        %v957 = vunpack.c.h.b16 %v727
        %v958 = vunpack.c.l.b16 %v728
        %v959 = vunpack.c.h.b16 %v728
        %v960 = vunpack.c.l.b16 %v729
        %v961 = vunpack.c.h.b16 %v729
        %v962 = vunpack.c.l.b16 %v730
        %v963 = vunpack.c.h.b16 %v730
        %v964 = vunpack.c.l.b16 %v731
        %v965 = vunpack.c.h.b16 %v731
        %v966 = vunpack.c.l.b16 %v732
        %v967 = vunpack.c.h.b16 %v732
        %v968 = vunpack.c.l.b16 %v733
        %v969 = vunpack.c.h.b16 %v733
        %v970 = vunpack.c.l.b16 %v734
        %v971 = vunpack.c.h.b16 %v734
        %v972 = vunpack.c.l.b16 %v735
        %v973 = vunpack.c.h.b16 %v735
        %v974 = vunpack.c.l.b16 %v736
        %v975 = vunpack.c.h.b16 %v736
        %v976 = vunpack.c.l.b16 %v737
        %v977 = vunpack.c.h.b16 %v737
        %v978 = vunpack.c.l.b16 %v738
        %v979 = vunpack.c.h.b16 %v738
        %v980 = vunpack.c.l.b16 %v739
        %v981 = vunpack.c.h.b16 %v739
        %v982 = vunpack.c.l.b16 %v740
        %v983 = vunpack.c.h.b16 %v740
        %v984 = vunpack.c.l.b16 %v741
        %v985 = vunpack.c.h.b16 %v741
        %v986 = vunpack.c.l.b16 %v742
        %v987 = vunpack.c.h.b16 %v742
        %v988 = vunpack.c.l.b16 %v743
        %v989 = vunpack.c.h.b16 %v743
        %v990 = vunpack.c.l.b16 %v744
        %v991 = vunpack.c.h.b16 %v744
        %v992 = vunpack.c.l.b16 %v745
        %v993 = vunpack.c.h.b16 %v745
        %v994 = vunpack.c.l.b16 %v746
        %v995 = vunpack.c.h.b16 %v746
        %v996 = vunpack.c.l.b16 %v747
        %v997 = vunpack.c.h.b16 %v747
        %v998 = vunpack.c.l.b16 %v748
        %v999 = vunpack.c.h.b16 %v748
        %v1000 = vunpack.c.l.b16 %v749
        %v1001 = vunpack.c.h.b16 %v749
        %v1002 = vunpack.c.l.b16 %v750
        %v1003 = vunpack.c.h.b16 %v750
        %v1004 = vunpack.c.l.b16 %v751
        %v1005 = vunpack.c.h.b16 %v751
        %v1006 = vunpack.c.l.b16 %v752
        %v1007 = vunpack.c.h.b16 %v752
        %v1008 = vunpack.c.l.b16 %v753
        %v1009 = vunpack.c.h.b16 %v753
        %v1010 = vunpack.c.l.b16 %v754
        %v1011 = vunpack.c.h.b16 %v754
        %v1012 = vunpack.c.l.b16 %v755
        %v1013 = vunpack.c.h.b16 %v755
        %v1014 = vunpack.c.l.b16 %v756
        %v1015 = vunpack.c.h.b16 %v756
        %v1016 = vunpack.c.l.b16 %v757
        %v1017 = vunpack.c.h.b16 %v757
        %v1018 = vunpack.c.l.b16 %v758
        %v1019 = vunpack.c.h.b16 %v758
        %v1020 = vunpack.c.l.b16 %v759
        %v1021 = vunpack.c.h.b16 %v759
        %v1022 = vunpack.c.l.b16 %v760
        %v1023 = vunpack.c.h.b16 %v760
        %v1024 = vunpack.c.l.b16 %v761
        %v1025 = vunpack.c.h.b16 %v761
        %v1026 = vunpack.c.l.b16 %v762
        %v1027 = vunpack.c.h.b16 %v762
        %v1028 = vunpack.c.l.b16 %v763
        %v1029 = vunpack.c.h.b16 %v763
        %v1030 = vunpack.c.l.b16 %v764
        %v1031 = vunpack.c.h.b16 %v764
        %v1032 = vunpack.c.l.b16 %v765
        %v1033 = vunpack.c.h.b16 %v765
        %v1034 = vunpack.c.l.b16 %v766
        %v1035 = vunpack.c.h.b16 %v766
        %v1036 = vunpack.c.l.b16 %v767
        %v1037 = vunpack.c.h.b16 %v767
        %v1038 = vunpack.c.l.b16 %v768
        %v1039 = vunpack.c.h.b16 %v768
        %v1040 = vunpack.c.l.b16 %v769
        %v1041 = vunpack.c.h.b16 %v769
        %v1042 = vunpack.c.l.b16 %v770
        %v1043 = vunpack.c.h.b16 %v770
        %v1044 = vunpack.c.l.b16 %v771
        %v1045 = vunpack.c.h.b16 %v771
        %v1046 = vunpack.c.l.b16 %v772
        %v1047 = vunpack.c.h.b16 %v772
        %v1048 = vunpack.c.l.b16 %v773
        %v1049 = vunpack.c.h.b16 %v773
        %v1050 = vunpack.c.l.b16 %v774
        %v1051 = vunpack.c.h.b16 %v774
        %v1052 = vunpack.c.l.b16 %v775
        %v1053 = vunpack.c.h.b16 %v775
        %v1054 = vunpack.c.l.b16 %v776
        %v1055 = vunpack.c.h.b16 %v776
        %v1056 = vunpack.c.l.b16 %v777
        %v1057 = vunpack.c.h.b16 %v777
        %v1058 = vunpack.c.l.b16 %v778
        %v1059 = vunpack.c.h.b16 %v778
        %v1060 = vunpack.c.l.b16 %v779
        %v1061 = vunpack.c.h.b16 %v779
        %v1062 = vunpack.c.l.b16 %v780
        %v1063 = vunpack.c.h.b16 %v780
        %v1064 = vunpack.c.l.b16 %v781
        %v1065 = vunpack.c.h.b16 %v781
        %v1066 = vunpack.c.l.b16 %v782
        %v1067 = vunpack.c.h.b16 %v782
        %v1068 = vunpack.c.l.b16 %v783
        %v1069 = vunpack.c.h.b16 %v783
        %v1070 = vunpack.c.l.b16 %v784
        %v1071 = vunpack.c.h.b16 %v784
        %v1072 = vunpack.c.l.b16 %v785
        %v1073 = vunpack.c.h.b16 %v785
        %v1074 = vunpack.c.l.b16 %v786
        %v1075 = vunpack.c.h.b16 %v786
        %v1076 = vunpack.c.l.b16 %v787
        %v1077 = vunpack.c.h.b16 %v787
        %v1078 = vunpack.c.l.b16 %v788
        %v1079 = vunpack.c.h.b16 %v788
        %v1080 = vunpack.c.l.b16 %v789
        %v1081 = vunpack.c.h.b16 %v789
        %v1082 = vunpack.c.l.b16 %v790
        %v1083 = vunpack.c.h.b16 %v790
        %v1084 = vunpack.c.l.b16 %v791
        %v1085 = vunpack.c.h.b16 %v791
        %v1086 = vunpack.c.l.b16 %v792
        %v1087 = vunpack.c.h.b16 %v792
        %v1088 = vunpack.c.l.b16 %v793
        %v1089 = vunpack.c.h.b16 %v793
        %v1090 = vunpack.c.l.b16 %v794
        %v1091 = vunpack.c.h.b16 %v794
        %v1092 = vunpack.c.l.b16 %v795
        %v1093 = vunpack.c.h.b16 %v795
        %v1094 = vunpack.c.l.b16 %v796
        %v1095 = vunpack.c.h.b16 %v796
        %v1096 = vunpack.c.l.b16 %v797
        %v1097 = vunpack.c.h.b16 %v797
        %v1098 = vunpack.c.l.b16 %v798
        %v1099 = vunpack.c.h.b16 %v798
        %v1100 = vunpack.c.l.b16 %v799
        %v1101 = vunpack.c.h.b16 %v799
        %v1102 = vpack.c.b16 %v916, %v910
        %v1103 = vpack.c.b16 %v917, %v911
        %v1104 = vpack.c.b16 %v918, %v912
        %v1105 = vpack.c.b16 %v919, %v913
        %v1106 = vpack.c.b16 %v920, %v914
        %v1107 = vpack.c.b16 %v921, %v915
        %v1108 = vpack.c.b16 %v928, %v922
        %v1109 = vpack.c.b16 %v929, %v923
        %v1110 = vpack.c.b16 %v930, %v924
        %v1111 = vpack.c.b16 %v931, %v925
        %v1112 = vpack.c.b16 %v932, %v926
        %v1113 = vpack.c.b16 %v933, %v927
        %v1114 = vpack.c.b16 %v940, %v934
        %v1115 = vpack.c.b16 %v941, %v935
        %v1116 = vpack.c.b16 %v942, %v936
        %v1117 = vpack.c.b16 %v943, %v937
        %v1118 = vpack.c.b16 %v944, %v938
        %v1119 = vpack.c.b16 %v945, %v939
        %v1120 = vpack.c.b16 %v952, %v946
        %v1121 = vpack.c.b16 %v953, %v947
        %v1122 = vpack.c.b16 %v954, %v948
        %v1123 = vpack.c.b16 %v955, %v949
        %v1124 = vpack.c.b16 %v956, %v950
        %v1125 = vpack.c.b16 %v957, %v951
        %v1126 = vpack.c.b16 %v964, %v958
        %v1127 = vpack.c.b16 %v965, %v959
        %v1128 = vpack.c.b16 %v966, %v960
        %v1129 = vpack.c.b16 %v967, %v961
        %v1130 = vpack.c.b16 %v968, %v962
        %v1131 = vpack.c.b16 %v969, %v963
        %v1132 = vpack.c.b16 %v976, %v970
        %v1133 = vpack.c.b16 %v977, %v971
        %v1134 = vpack.c.b16 %v978, %v972
        %v1135 = vpack.c.b16 %v979, %v973
        %v1136 = vpack.c.b16 %v980, %v974
        %v1137 = vpack.c.b16 %v981, %v975
        %v1138 = vpack.c.b16 %v988, %v982
        %v1139 = vpack.c.b16 %v989, %v983
        %v1140 = vpack.c.b16 %v990, %v984
        %v1141 = vpack.c.b16 %v991, %v985
        %v1142 = vpack.c.b16 %v992, %v986
        %v1143 = vpack.c.b16 %v993, %v987
        %v1144 = vpack.c.b16 %v1000, %v994
        %v1145 = vpack.c.b16 %v1001, %v995
        %v1146 = vpack.c.b16 %v1002, %v996
        %v1147 = vpack.c.b16 %v1003, %v997
        %v1148 = vpack.c.b16 %v1004, %v998
        %v1149 = vpack.c.b16 %v1005, %v999
        %v1150 = vpack.c.b16 %v1012, %v1006
        %v1151 = vpack.c.b16 %v1013, %v1007
        %v1152 = vpack.c.b16 %v1014, %v1008
        %v1153 = vpack.c.b16 %v1015, %v1009
        %v1154 = vpack.c.b16 %v1016, %v1010
        %v1155 = vpack.c.b16 %v1017, %v1011
        %v1156 = vpack.c.b16 %v1024, %v1018
        %v1157 = vpack.c.b16 %v1025, %v1019
        %v1158 = vpack.c.b16 %v1026, %v1020
        %v1159 = vpack.c.b16 %v1027, %v1021
        %v1160 = vpack.c.b16 %v1028, %v1022
        %v1161 = vpack.c.b16 %v1029, %v1023
        %v1162 = vpack.c.b16 %v1036, %v1030
        %v1163 = vpack.c.b16 %v1037, %v1031
        %v1164 = vpack.c.b16 %v1038, %v1032
        %v1165 = vpack.c.b16 %v1039, %v1033
        %v1166 = vpack.c.b16 %v1040, %v1034
        %v1167 = vpack.c.b16 %v1041, %v1035
        %v1168 = vpack.c.b16 %v1048, %v1042
        %v1169 = vpack.c.b16 %v1049, %v1043
        %v1170 = vpack.c.b16 %v1050, %v1044
        %v1171 = vpack.c.b16 %v1051, %v1045
        %v1172 = vpack.c.b16 %v1052, %v1046
        %v1173 = vpack.c.b16 %v1053, %v1047
        %v1174 = vpack.c.b16 %v1060, %v1054
        %v1175 = vpack.c.b16 %v1061, %v1055
        %v1176 = vpack.c.b16 %v1062, %v1056
        %v1177 = vpack.c.b16 %v1063, %v1057
        %v1178 = vpack.c.b16 %v1064, %v1058
        %v1179 = vpack.c.b16 %v1065, %v1059
        %v1180 = vpack.c.b16 %v1072, %v1066
        %v1181 = vpack.c.b16 %v1073, %v1067
        %v1182 = vpack.c.b16 %v1074, %v1068
        %v1183 = vpack.c.b16 %v1075, %v1069
        %v1184 = vpack.c.b16 %v1076, %v1070
        %v1185 = vpack.c.b16 %v1077, %v1071
        %v1186 = vpack.c.b16 %v1084, %v1078
        %v1187 = vpack.c.b16 %v1085, %v1079
        %v1188 = vpack.c.b16 %v1086, %v1080
        %v1189 = vpack.c.b16 %v1087, %v1081
        %v1190 = vpack.c.b16 %v1088, %v1082
        %v1191 = vpack.c.b16 %v1089, %v1083
        %v1192 = vpack.c.b16 %v1096, %v1090
        %v1193 = vpack.c.b16 %v1097, %v1091
        %v1194 = vpack.c.b16 %v1098, %v1092
        %v1195 = vpack.c.b16 %v1099, %v1093
        %v1196 = vpack.c.b16 %v1100, %v1094
        %v1197 = vpack.c.b16 %v1101, %v1095
        %1294 = vmatpush.bf16.msra.mxu0 %v1144
        %1295 = vmatpush.bf16.msra.mxu0 %v1138
        %1296 = vmatpush.bf16.msra.mxu0 %v1132
        %1297 = vmatpush.bf16.msra.mxu0 %v1126
        %1298 = vmatpush.bf16.msra.mxu0 %v1120
        %1299 = vmatpush.bf16.msra.mxu0 %v1114
        %1300 = vmatpush.bf16.msra.mxu0 %v1108
        %1301 = vmatpush.bf16.msra.mxu0 %v1102
        %1302 = vmatmul.bf16.gmra.mxu0 %v702
        %v1303 = vpop.f32.mrf.mxu0
        %v1304 = vadd.f32 %v802, %v1303
        %v1305 = vpop.f32.mrf.mxu0
        %v1306 = vadd.f32 %v802, %v1305
        %1307 = vdwg.mxu0
        %1308 = vmatpush.bf16.msra.mxu0 %v1192
        %1309 = vmatpush.bf16.msra.mxu0 %v1186
        %1310 = vmatpush.bf16.msra.mxu0 %v1180
        %1311 = vmatpush.bf16.msra.mxu0 %v1174
        %1312 = vmatpush.bf16.msra.mxu0 %v1168
        %1313 = vmatpush.bf16.msra.mxu0 %v1162
        %1314 = vmatpush.bf16.msra.mxu0 %v1156
        %1315 = vmatpush.bf16.msra.mxu0 %v1150
        %1316 = vmatmul.bf16.gmra.mxu0 %v703
        %v1317 = vpop.f32.mrf.mxu0
        %v1318 = vadd.f32 %v1304, %v1317
        %v1319 = vpop.f32.mrf.mxu0
        %v1320 = vadd.f32 %v1306, %v1319
        %1321 = vdwg.mxu0
        %1322 = vmatpush.bf16.msra.mxu0 %v1145
        %1323 = vmatpush.bf16.msra.mxu0 %v1139
        %1324 = vmatpush.bf16.msra.mxu0 %v1133
        %1325 = vmatpush.bf16.msra.mxu0 %v1127
        %1326 = vmatpush.bf16.msra.mxu0 %v1121
        %1327 = vmatpush.bf16.msra.mxu0 %v1115
        %1328 = vmatpush.bf16.msra.mxu0 %v1109
        %1329 = vmatpush.bf16.msra.mxu0 %v1103
        %1330 = vmatmul.bf16.gmra.mxu0 %v702
        %v1331 = vpop.f32.mrf.mxu0
        %v1332 = vadd.f32 %v803, %v1331
        %v1333 = vpop.f32.mrf.mxu0
        %v1334 = vadd.f32 %v803, %v1333
        %1335 = vdwg.mxu0
        %1336 = vmatpush.bf16.msra.mxu0 %v1193
        %1337 = vmatpush.bf16.msra.mxu0 %v1187
        %1338 = vmatpush.bf16.msra.mxu0 %v1181
        %1339 = vmatpush.bf16.msra.mxu0 %v1175
        %1340 = vmatpush.bf16.msra.mxu0 %v1169
        %1341 = vmatpush.bf16.msra.mxu0 %v1163
        %1342 = vmatpush.bf16.msra.mxu0 %v1157
        %1343 = vmatpush.bf16.msra.mxu0 %v1151
        %1344 = vmatmul.bf16.gmra.mxu0 %v703
        %v1345 = vpop.f32.mrf.mxu0
        %v1346 = vadd.f32 %v1332, %v1345
        %v1347 = vpop.f32.mrf.mxu0
        %v1348 = vadd.f32 %v1334, %v1347
        %1349 = vdwg.mxu0
        %1350 = vmatpush.bf16.msra.mxu0 %v1146
        %1351 = vmatpush.bf16.msra.mxu0 %v1140
        %1352 = vmatpush.bf16.msra.mxu0 %v1134
        %1353 = vmatpush.bf16.msra.mxu0 %v1128
        %1354 = vmatpush.bf16.msra.mxu0 %v1122
        %1355 = vmatpush.bf16.msra.mxu0 %v1116
        %1356 = vmatpush.bf16.msra.mxu0 %v1110
        %1357 = vmatpush.bf16.msra.mxu0 %v1104
        %1358 = vmatmul.bf16.gmra.mxu0 %v702
        %v1359 = vpop.f32.mrf.mxu0
        %v1360 = vadd.f32 %v804, %v1359
        %v1361 = vpop.f32.mrf.mxu0
        %v1362 = vadd.f32 %v804, %v1361
        %1363 = vdwg.mxu0
        %1364 = vmatpush.bf16.msra.mxu0 %v1194
        %1365 = vmatpush.bf16.msra.mxu0 %v1188
        %1366 = vmatpush.bf16.msra.mxu0 %v1182
        %1367 = vmatpush.bf16.msra.mxu0 %v1176
        %1368 = vmatpush.bf16.msra.mxu0 %v1170
        %1369 = vmatpush.bf16.msra.mxu0 %v1164
        %1370 = vmatpush.bf16.msra.mxu0 %v1158
        %1371 = vmatpush.bf16.msra.mxu0 %v1152
        %1372 = vmatmul.bf16.gmra.mxu0 %v703
        %v1373 = vpop.f32.mrf.mxu0
        %v1374 = vadd.f32 %v1360, %v1373
        %v1375 = vpop.f32.mrf.mxu0
        %v1376 = vadd.f32 %v1362, %v1375
        %1377 = vdwg.mxu0
        %1378 = vmatpush.bf16.msra.mxu0 %v1147
        %1379 = vmatpush.bf16.msra.mxu0 %v1141
        %1380 = vmatpush.bf16.msra.mxu0 %v1135
        %1381 = vmatpush.bf16.msra.mxu0 %v1129
        %1382 = vmatpush.bf16.msra.mxu0 %v1123
        %1383 = vmatpush.bf16.msra.mxu0 %v1117
        %1384 = vmatpush.bf16.msra.mxu0 %v1111
        %1385 = vmatpush.bf16.msra.mxu0 %v1105
        %1386 = vmatmul.bf16.gmra.mxu0 %v702
        %v1387 = vpop.f32.mrf.mxu0
        %v1388 = vadd.f32 %v805, %v1387
        %v1389 = vpop.f32.mrf.mxu0
        %v1390 = vadd.f32 %v805, %v1389
        %1391 = vdwg.mxu0
        %1392 = vmatpush.bf16.msra.mxu0 %v1195
        %1393 = vmatpush.bf16.msra.mxu0 %v1189
        %1394 = vmatpush.bf16.msra.mxu0 %v1183
        %1395 = vmatpush.bf16.msra.mxu0 %v1177
        %1396 = vmatpush.bf16.msra.mxu0 %v1171
        %1397 = vmatpush.bf16.msra.mxu0 %v1165
        %1398 = vmatpush.bf16.msra.mxu0 %v1159
        %1399 = vmatpush.bf16.msra.mxu0 %v1153
        %1400 = vmatmul.bf16.gmra.mxu0 %v703
        %v1401 = vpop.f32.mrf.mxu0
        %v1402 = vadd.f32 %v1388, %v1401
        %v1403 = vpop.f32.mrf.mxu0
        %v1404 = vadd.f32 %v1390, %v1403
        %1405 = vdwg.mxu0
        %1406 = vmatpush.bf16.msra.mxu0 %v1148
        %1407 = vmatpush.bf16.msra.mxu0 %v1142
        %1408 = vmatpush.bf16.msra.mxu0 %v1136
        %1409 = vmatpush.bf16.msra.mxu0 %v1130
        %1410 = vmatpush.bf16.msra.mxu0 %v1124
        %1411 = vmatpush.bf16.msra.mxu0 %v1118
        %1412 = vmatpush.bf16.msra.mxu0 %v1112
        %1413 = vmatpush.bf16.msra.mxu0 %v1106
        %1414 = vmatmul.bf16.gmra.mxu0 %v702
        %v1415 = vpop.f32.mrf.mxu0
        %v1416 = vadd.f32 %v806, %v1415
        %v1417 = vpop.f32.mrf.mxu0
        %v1418 = vadd.f32 %v806, %v1417
        %1419 = vdwg.mxu0
        %1420 = vmatpush.bf16.msra.mxu0 %v1196
        %1421 = vmatpush.bf16.msra.mxu0 %v1190
        %1422 = vmatpush.bf16.msra.mxu0 %v1184
        %1423 = vmatpush.bf16.msra.mxu0 %v1178
        %1424 = vmatpush.bf16.msra.mxu0 %v1172
        %1425 = vmatpush.bf16.msra.mxu0 %v1166
        %1426 = vmatpush.bf16.msra.mxu0 %v1160
        %1427 = vmatpush.bf16.msra.mxu0 %v1154
        %1428 = vmatmul.bf16.gmra.mxu0 %v703
        %v1429 = vpop.f32.mrf.mxu0
        %v1430 = vadd.f32 %v1416, %v1429
        %v1431 = vpop.f32.mrf.mxu0
        %v1432 = vadd.f32 %v1418, %v1431
        %1433 = vdwg.mxu0
        %1434 = vmatpush.bf16.msra.mxu0 %v1149
        %1435 = vmatpush.bf16.msra.mxu0 %v1143
        %1436 = vmatpush.bf16.msra.mxu0 %v1137
        %1437 = vmatpush.bf16.msra.mxu0 %v1131
        %1438 = vmatpush.bf16.msra.mxu0 %v1125
        %1439 = vmatpush.bf16.msra.mxu0 %v1119
        %1440 = vmatpush.bf16.msra.mxu0 %v1113
        %1441 = vmatpush.bf16.msra.mxu0 %v1107
        %1442 = vmatmul.bf16.gmra.mxu0 %v702
        %v1443 = vpop.f32.mrf.mxu0
        %v1444 = vadd.f32 %v807, %v1443
        %v1445 = vpop.f32.mrf.mxu0
        %v1446 = vadd.f32 %v807, %v1445
        %1447 = vdwg.mxu0
        %1448 = vmatpush.bf16.msra.mxu0 %v1197
        %1449 = vmatpush.bf16.msra.mxu0 %v1191
        %1450 = vmatpush.bf16.msra.mxu0 %v1185
        %1451 = vmatpush.bf16.msra.mxu0 %v1179
        %1452 = vmatpush.bf16.msra.mxu0 %v1173
        %1453 = vmatpush.bf16.msra.mxu0 %v1167
        %1454 = vmatpush.bf16.msra.mxu0 %v1161
        %1455 = vmatpush.bf16.msra.mxu0 %v1155
        %1456 = vmatmul.bf16.gmra.mxu0 %v703
        %v1457 = vpop.f32.mrf.mxu0
        %v1458 = vadd.f32 %v1444, %v1457
        %v1459 = vpop.f32.mrf.mxu0
        %v1460 = vadd.f32 %v1446, %v1459
        %1461 = vdwg.mxu0
        %v1462 = vpack.c.bf16 %v1346, %v1318
        %v1463 = vpack.c.bf16 %v1402, %v1374
        %v1464 = vpack.c.bf16 %v1458, %v1430
        %v1465 = vpack.c.bf16 %v1348, %v1320
        %v1466 = vpack.c.bf16 %v1404, %v1376
        %v1467 = vpack.c.bf16 %v1460, %v1432
        %v1468 = vld [vmem:[%s613] sm:$0x1]
        %v1470 = vperm.slane %v1468, 0
        %v1472 = vadd.f32 %v623, %v1470
        %1473 = vmatpush.bf16.xpose.msra.mxu0 0
        %1474 = vmatpush.bf16.xpose.msra.mxu0 0
        %1475 = vmatpush.bf16.xpose.msra.mxu0 0
        %1476 = vmatpush.bf16.xpose.msra.mxu0 0
        %1477 = vmatpush.bf16.xpose.msra.mxu0 0
        %1478 = vmatpush.bf16.xpose.msra.mxu0 0
        %1479 = vmatpush.bf16.xpose.msra.mxu0 0
        %1480 = vmatpush.bf16.xpose.msra.mxu0 %v1463
        %1481 = vmatmul.bf16.gmra.mxu0 %v1462
        %v1482 = vpop.f32.mrf.mxu0
        %v1483 = vadd.f32 %v1472, %v1482
        %v1484 = vpop.f32.mrf.mxu0
        %1485 = vdwg.mxu0
        %vm1486 = vcmask 64512
        %v1487 = vsel %vm1486, %v1483, -inf
        %1488 = vmax.xlane.f32.xlu0 %v1487
        %v1489 = vpop.xlane.xlu0 %1488
        %v1490 = vsub.f32 %v1483, %v1489
        %v1491 = vmul.f32 %v1490, 1.442695
        %v1492 = vpow.pop %v1491
        %v1493 = vsel %vm1486, %v1492, 0.0
        %1494 = vadd.xlane.f32.xlu0 %v1493
        %v1495 = vpop.xlane.xlu0 %1494
        %v1496 = vrcp.pop %v1495
        %v1497 = vmul.f32 %v1492, %v1496
        %v1498 = vpack.c.bf16 %v1497, %v1497
        %v1500 = vsel %vm1486, %v1498, 0
        %vm1502 = vcmask 1043456
        %v1504 = vsel %vm1502, %v1464, 0
        %1506 = vmatpush.bf16.msra.mxu0 0
        %1507 = vmatpush.bf16.msra.mxu0 0
        %1508 = vmatpush.bf16.msra.mxu0 0
        %1509 = vmatpush.bf16.msra.mxu0 0
        %1510 = vmatpush.bf16.msra.mxu0 0
        %1511 = vmatpush.bf16.msra.mxu0 0
        %1512 = vmatpush.bf16.msra.mxu0 0
        %1513 = vmatpush.bf16.msra.mxu0 %v1504
        %1514 = vmatmul.bf16.gmra.mxu0 %v1500
        %v1515 = vpop.f32.mrf.mxu0
        %v1516 = vadd.f32 0.0, %v1515
        %v1517 = vpop.f32.mrf.mxu0
        %1518 = vdwg.mxu0
        %1519 = vst [vmem:[#allocation2] sm:$0xff] %v1516
        %v1521 = vunpack.c.h.b16 %v1462
        %v1522 = vpack.c.b16 %v1521, %v1521
        %v1525 = vunpack.c.h.b16 %v1463
        %v1526 = vpack.c.b16 %v1525, %v1525
        %1528 = vmatpush.bf16.xpose.msra.mxu0 0
        %1529 = vmatpush.bf16.xpose.msra.mxu0 0
        %1530 = vmatpush.bf16.xpose.msra.mxu0 0
        %1531 = vmatpush.bf16.xpose.msra.mxu0 0
        %1532 = vmatpush.bf16.xpose.msra.mxu0 0
        %1533 = vmatpush.bf16.xpose.msra.mxu0 0
        %1534 = vmatpush.bf16.xpose.msra.mxu0 0
        %1535 = vmatpush.bf16.xpose.msra.mxu0 %v1526
        %1536 = vmatmul.bf16.gmra.mxu0 %v1522
        %v1537 = vpop.f32.mrf.mxu0
        %v1538 = vadd.f32 %v1472, %v1537
        %v1539 = vpop.f32.mrf.mxu0
        %1540 = vdwg.mxu0
        %v1541 = vsel %vm1486, %v1538, -inf
        %1542 = vmax.xlane.f32.xlu0 %v1541
        %v1543 = vpop.xlane.xlu0 %1542
        %v1544 = vsub.f32 %v1538, %v1543
        %v1545 = vmul.f32 %v1544, 1.442695
        %v1546 = vpow.pop %v1545
        %v1547 = vsel %vm1486, %v1546, 0.0
        %1548 = vadd.xlane.f32.xlu0 %v1547
        %v1549 = vpop.xlane.xlu0 %1548
        %v1550 = vrcp.pop %v1549
        %v1551 = vmul.f32 %v1546, %v1550
        %v1552 = vpack.c.bf16 %v1551, %v1551
        %v1554 = vunpack.c.h.b16 %v1464
        %v1555 = vpack.c.b16 %v1554, %v1554
        %v1557 = vsel %vm1486, %v1552, 0
        %v1560 = vsel %vm1502, %v1555, 0
        %1562 = vmatpush.bf16.msra.mxu0 0
        %1563 = vmatpush.bf16.msra.mxu0 0
        %1564 = vmatpush.bf16.msra.mxu0 0
        %1565 = vmatpush.bf16.msra.mxu0 0
        %1566 = vmatpush.bf16.msra.mxu0 0
        %1567 = vmatpush.bf16.msra.mxu0 0
        %1568 = vmatpush.bf16.msra.mxu0 0
        %1569 = vmatpush.bf16.msra.mxu0 %v1560
        %1570 = vmatmul.bf16.gmra.mxu0 %v1557
        %v1571 = vpop.f32.mrf.mxu0
        %v1572 = vadd.f32 0.0, %v1571
        %v1573 = vpop.f32.mrf.mxu0
        %1574 = vdwg.mxu0
        %1575 = vst [vmem:[#allocation2 + $0x8] sm:$0xff] %v1572
        %s1576 = scalar_lea.vmem %s613, 1
        %v1577 = vld [vmem:[%s1576] sm:$0x1]
        %v1579 = vperm.slane %v1577, 0
        %v1581 = vadd.f32 %v623, %v1579
        %1582 = vmatpush.bf16.xpose.msra.mxu0 0
        %1583 = vmatpush.bf16.xpose.msra.mxu0 0
        %1584 = vmatpush.bf16.xpose.msra.mxu0 0
        %1585 = vmatpush.bf16.xpose.msra.mxu0 0
        %1586 = vmatpush.bf16.xpose.msra.mxu0 0
        %1587 = vmatpush.bf16.xpose.msra.mxu0 0
        %1588 = vmatpush.bf16.xpose.msra.mxu0 0
        %1589 = vmatpush.bf16.xpose.msra.mxu0 %v1466
        %1590 = vmatmul.bf16.gmra.mxu0 %v1465
        %v1591 = vpop.f32.mrf.mxu0
        %v1592 = vadd.f32 %v1581, %v1591
        %v1593 = vpop.f32.mrf.mxu0
        %1594 = vdwg.mxu0
        %v1595 = vsel %vm1486, %v1592, -inf
        %1596 = vmax.xlane.f32.xlu0 %v1595
        %v1597 = vpop.xlane.xlu0 %1596
        %v1598 = vsub.f32 %v1592, %v1597
        %v1599 = vmul.f32 %v1598, 1.442695
        %v1600 = vpow.pop %v1599
        %v1601 = vsel %vm1486, %v1600, 0.0
        %1602 = vadd.xlane.f32.xlu0 %v1601
        %v1603 = vpop.xlane.xlu0 %1602
        %v1604 = vrcp.pop %v1603
        %v1605 = vmul.f32 %v1600, %v1604
        %v1606 = vpack.c.bf16 %v1605, %v1605
        %v1608 = vsel %vm1486, %v1606, 0
        %v1611 = vsel %vm1502, %v1467, 0
        %1613 = vmatpush.bf16.msra.mxu0 0
        %1614 = vmatpush.bf16.msra.mxu0 0
        %1615 = vmatpush.bf16.msra.mxu0 0
        %1616 = vmatpush.bf16.msra.mxu0 0
        %1617 = vmatpush.bf16.msra.mxu0 0
        %1618 = vmatpush.bf16.msra.mxu0 0
        %1619 = vmatpush.bf16.msra.mxu0 0
        %1620 = vmatpush.bf16.msra.mxu0 %v1611
        %1621 = vmatmul.bf16.gmra.mxu0 %v1608
        %v1622 = vpop.f32.mrf.mxu0
        %v1623 = vadd.f32 0.0, %v1622
        %v1624 = vpop.f32.mrf.mxu0
        %1625 = vdwg.mxu0
        %1626 = vst [vmem:[#allocation2 + $0x10] sm:$0xff] %v1623
        %v1628 = vunpack.c.h.b16 %v1465
        %v1629 = vpack.c.b16 %v1628, %v1628
        %v1632 = vunpack.c.h.b16 %v1466
        %v1633 = vpack.c.b16 %v1632, %v1632
        %1635 = vmatpush.bf16.xpose.msra.mxu0 0
        %1636 = vmatpush.bf16.xpose.msra.mxu0 0
        %1637 = vmatpush.bf16.xpose.msra.mxu0 0
        %1638 = vmatpush.bf16.xpose.msra.mxu0 0
        %1639 = vmatpush.bf16.xpose.msra.mxu0 0
        %1640 = vmatpush.bf16.xpose.msra.mxu0 0
        %1641 = vmatpush.bf16.xpose.msra.mxu0 0
        %1642 = vmatpush.bf16.xpose.msra.mxu0 %v1633
        %1643 = vmatmul.bf16.gmra.mxu0 %v1629
        %v1644 = vpop.f32.mrf.mxu0
        %v1645 = vadd.f32 %v1581, %v1644
        %v1646 = vpop.f32.mrf.mxu0
        %1647 = vdwg.mxu0
        %v1648 = vsel %vm1486, %v1645, -inf
        %1649 = vmax.xlane.f32.xlu0 %v1648
        %v1650 = vpop.xlane.xlu0 %1649
        %v1651 = vsub.f32 %v1645, %v1650
        %v1652 = vmul.f32 %v1651, 1.442695
        %v1653 = vpow.pop %v1652
        %v1654 = vsel %vm1486, %v1653, 0.0
        %1655 = vadd.xlane.f32.xlu0 %v1654
        %v1656 = vpop.xlane.xlu0 %1655
        %v1657 = vrcp.pop %v1656
        %v1658 = vmul.f32 %v1653, %v1657
        %v1659 = vpack.c.bf16 %v1658, %v1658
        %v1661 = vunpack.c.h.b16 %v1467
        %v1662 = vpack.c.b16 %v1661, %v1661
        %v1664 = vsel %vm1486, %v1659, 0
        %v1667 = vsel %vm1502, %v1662, 0
        %1669 = vmatpush.bf16.msra.mxu0 0
        %1670 = vmatpush.bf16.msra.mxu0 0
        %1671 = vmatpush.bf16.msra.mxu0 0
        %1672 = vmatpush.bf16.msra.mxu0 0
        %1673 = vmatpush.bf16.msra.mxu0 0
        %1674 = vmatpush.bf16.msra.mxu0 0
        %1675 = vmatpush.bf16.msra.mxu0 0
        %1676 = vmatpush.bf16.msra.mxu0 %v1667
        %1677 = vmatmul.bf16.gmra.mxu0 %v1664
        %v1678 = vpop.f32.mrf.mxu0
        %v1679 = vadd.f32 0.0, %v1678
        %v1680 = vpop.f32.mrf.mxu0
        %1681 = vdwg.mxu0
        %1682 = vst [vmem:[#allocation2 + $0x18] sm:$0xff] %v1679
        %v1683 = vld [vmem:[#allocation2] sm:$0xff]
        %v1684 = vld [vmem:[#allocation2 + $0x8] sm:$0xff]
        %v1685 = vld [vmem:[#allocation2 + $0x10] sm:$0xff]
        %v1686 = vld [vmem:[#allocation2 + $0x18] sm:$0xff]
        %v1687 = vpack.c.bf16 %v1685, %v1683
        %v1688 = vpack.c.bf16 %v1686, %v1684
        %v1689 = vld [vmem:[%s8] sm:$0xff]
        %v1690 = vld [vmem:[%s8 + $0x8] sm:$0xff]
        %v1691 = vld [vmem:[%s8 + $0x10] sm:$0xff]
        %v1692 = vld [vmem:[%s8 + $0x18] sm:$0xff]
        %v1693 = vld [vmem:[%s8 + $0x20] sm:$0xff]
        %v1694 = vld [vmem:[%s8 + $0x28] sm:$0xff]
        %v1695 = vld [vmem:[%s8 + $0x30] sm:$0xff]
        %v1696 = vld [vmem:[%s8 + $0x38] sm:$0xff]
        %v1697 = vld [vmem:[%s8 + $0x40] sm:$0xff]
        %v1698 = vld [vmem:[%s8 + $0x48] sm:$0xff]
        %v1699 = vld [vmem:[%s8 + $0x50] sm:$0xff]
        %v1700 = vld [vmem:[%s8 + $0x58] sm:$0xff]
        %v1701 = vld [vmem:[%s8 + $0x60] sm:$0xff]
        %v1702 = vld [vmem:[%s8 + $0x68] sm:$0xff]
        %v1703 = vld [vmem:[%s8 + $0x70] sm:$0xff]
        %v1704 = vld [vmem:[%s8 + $0x78] sm:$0xff]
        %v1705 = vld [vmem:[%s8 + $0x80] sm:$0xff]
        %v1706 = vld [vmem:[%s8 + $0x88] sm:$0xff]
        %v1707 = vld [vmem:[%s8 + $0x90] sm:$0xff]
        %v1708 = vld [vmem:[%s8 + $0x98] sm:$0xff]
        %v1709 = vld [vmem:[%s8 + $0xa0] sm:$0xff]
        %v1710 = vld [vmem:[%s8 + $0xa8] sm:$0xff]
        %v1711 = vld [vmem:[%s8 + $0xb0] sm:$0xff]
        %v1712 = vld [vmem:[%s8 + $0xb8] sm:$0xff]
        %v1713 = vld [vmem:[%s8 + $0xc0] sm:$0xff]
        %v1714 = vld [vmem:[%s8 + $0xc8] sm:$0xff]
        %v1715 = vld [vmem:[%s8 + $0xd0] sm:$0xff]
        %v1716 = vld [vmem:[%s8 + $0xd8] sm:$0xff]
        %v1717 = vld [vmem:[%s8 + $0xe0] sm:$0xff]
        %v1718 = vld [vmem:[%s8 + $0xe8] sm:$0xff]
        %v1719 = vld [vmem:[%s8 + $0xf0] sm:$0xff]
        %v1720 = vld [vmem:[%s8 + $0xf8] sm:$0xff]
        %v1721 = vld [vmem:[%s9] sm:$0x3]
        %v1723 = vperm.slane %v1721, 0
        %v1724 = vperm.slane %v1721, 1
        %v1759 = vunpack.c.l.b16 %v1689
        %v1760 = vunpack.c.h.b16 %v1689
        %v1761 = vunpack.c.l.b16 %v1690
        %v1762 = vunpack.c.h.b16 %v1690
        %v1763 = vunpack.c.l.b16 %v1691
        %v1764 = vunpack.c.h.b16 %v1691
        %v1765 = vunpack.c.l.b16 %v1692
        %v1766 = vunpack.c.h.b16 %v1692
        %v1767 = vunpack.c.l.b16 %v1693
        %v1768 = vunpack.c.h.b16 %v1693
        %v1769 = vunpack.c.l.b16 %v1694
        %v1770 = vunpack.c.h.b16 %v1694
        %v1771 = vunpack.c.l.b16 %v1695
        %v1772 = vunpack.c.h.b16 %v1695
        %v1773 = vunpack.c.l.b16 %v1696
        %v1774 = vunpack.c.h.b16 %v1696
        %v1775 = vunpack.c.l.b16 %v1697
        %v1776 = vunpack.c.h.b16 %v1697
        %v1777 = vunpack.c.l.b16 %v1698
        %v1778 = vunpack.c.h.b16 %v1698
        %v1779 = vunpack.c.l.b16 %v1699
        %v1780 = vunpack.c.h.b16 %v1699
        %v1781 = vunpack.c.l.b16 %v1700
        %v1782 = vunpack.c.h.b16 %v1700
        %v1783 = vunpack.c.l.b16 %v1701
        %v1784 = vunpack.c.h.b16 %v1701
        %v1785 = vunpack.c.l.b16 %v1702
        %v1786 = vunpack.c.h.b16 %v1702
        %v1787 = vunpack.c.l.b16 %v1703
        %v1788 = vunpack.c.h.b16 %v1703
        %v1789 = vunpack.c.l.b16 %v1704
        %v1790 = vunpack.c.h.b16 %v1704
        %v1791 = vunpack.c.l.b16 %v1705
        %v1792 = vunpack.c.h.b16 %v1705
        %v1793 = vunpack.c.l.b16 %v1706
        %v1794 = vunpack.c.h.b16 %v1706
        %v1795 = vunpack.c.l.b16 %v1707
        %v1796 = vunpack.c.h.b16 %v1707
        %v1797 = vunpack.c.l.b16 %v1708
        %v1798 = vunpack.c.h.b16 %v1708
        %v1799 = vunpack.c.l.b16 %v1709
        %v1800 = vunpack.c.h.b16 %v1709
        %v1801 = vunpack.c.l.b16 %v1710
        %v1802 = vunpack.c.h.b16 %v1710
        %v1803 = vunpack.c.l.b16 %v1711
        %v1804 = vunpack.c.h.b16 %v1711
        %v1805 = vunpack.c.l.b16 %v1712
        %v1806 = vunpack.c.h.b16 %v1712
        %v1807 = vunpack.c.l.b16 %v1713
        %v1808 = vunpack.c.h.b16 %v1713
        %v1809 = vunpack.c.l.b16 %v1714
        %v1810 = vunpack.c.h.b16 %v1714
        %v1811 = vunpack.c.l.b16 %v1715
        %v1812 = vunpack.c.h.b16 %v1715
        %v1813 = vunpack.c.l.b16 %v1716
        %v1814 = vunpack.c.h.b16 %v1716
        %v1815 = vunpack.c.l.b16 %v1717
        %v1816 = vunpack.c.h.b16 %v1717
        %v1817 = vunpack.c.l.b16 %v1718
        %v1818 = vunpack.c.h.b16 %v1718
        %v1819 = vunpack.c.l.b16 %v1719
        %v1820 = vunpack.c.h.b16 %v1719
        %v1821 = vunpack.c.l.b16 %v1720
        %v1822 = vunpack.c.h.b16 %v1720
        %v1823 = vpack.c.b16 %v1761, %v1759
        %v1824 = vpack.c.b16 %v1762, %v1760
        %v1825 = vpack.c.b16 %v1765, %v1763
        %v1826 = vpack.c.b16 %v1766, %v1764
        %v1827 = vpack.c.b16 %v1769, %v1767
        %v1828 = vpack.c.b16 %v1770, %v1768
        %v1829 = vpack.c.b16 %v1773, %v1771
        %v1830 = vpack.c.b16 %v1774, %v1772
        %v1831 = vpack.c.b16 %v1777, %v1775
        %v1832 = vpack.c.b16 %v1778, %v1776
        %v1833 = vpack.c.b16 %v1781, %v1779
        %v1834 = vpack.c.b16 %v1782, %v1780
        %v1835 = vpack.c.b16 %v1785, %v1783
        %v1836 = vpack.c.b16 %v1786, %v1784
        %v1837 = vpack.c.b16 %v1789, %v1787
        %v1838 = vpack.c.b16 %v1790, %v1788
        %v1839 = vpack.c.b16 %v1793, %v1791
        %v1840 = vpack.c.b16 %v1794, %v1792
        %v1841 = vpack.c.b16 %v1797, %v1795
        %v1842 = vpack.c.b16 %v1798, %v1796
        %v1843 = vpack.c.b16 %v1801, %v1799
        %v1844 = vpack.c.b16 %v1802, %v1800
        %v1845 = vpack.c.b16 %v1805, %v1803
        %v1846 = vpack.c.b16 %v1806, %v1804
        %v1847 = vpack.c.b16 %v1809, %v1807
        %v1848 = vpack.c.b16 %v1810, %v1808
        %v1849 = vpack.c.b16 %v1813, %v1811
        %v1850 = vpack.c.b16 %v1814, %v1812
        %v1851 = vpack.c.b16 %v1817, %v1815
        %v1852 = vpack.c.b16 %v1818, %v1816
        %v1853 = vpack.c.b16 %v1821, %v1819
        %v1854 = vpack.c.b16 %v1822, %v1820
        %1887 = vmatpush.bf16.msra.mxu0 %v1837
        %1888 = vmatpush.bf16.msra.mxu0 %v1835
        %1889 = vmatpush.bf16.msra.mxu0 %v1833
        %1890 = vmatpush.bf16.msra.mxu0 %v1831
        %1891 = vmatpush.bf16.msra.mxu0 %v1829
        %1892 = vmatpush.bf16.msra.mxu0 %v1827
        %1893 = vmatpush.bf16.msra.mxu0 %v1825
        %1894 = vmatpush.bf16.msra.mxu0 %v1823
        %1895 = vmatmul.bf16.gmra.mxu0 %v1687
        %v1896 = vpop.f32.mrf.mxu0
        %v1897 = vadd.f32 %v1723, %v1896
        %v1898 = vpop.f32.mrf.mxu0
        %v1899 = vadd.f32 %v1723, %v1898
        %1900 = vdwg.mxu0
        %1901 = vmatpush.bf16.msra.mxu0 %v1853
        %1902 = vmatpush.bf16.msra.mxu0 %v1851
        %1903 = vmatpush.bf16.msra.mxu0 %v1849
        %1904 = vmatpush.bf16.msra.mxu0 %v1847
        %1905 = vmatpush.bf16.msra.mxu0 %v1845
        %1906 = vmatpush.bf16.msra.mxu0 %v1843
        %1907 = vmatpush.bf16.msra.mxu0 %v1841
        %1908 = vmatpush.bf16.msra.mxu0 %v1839
        %1909 = vmatmul.bf16.gmra.mxu0 %v1688
        %v1910 = vpop.f32.mrf.mxu0
        %v1911 = vadd.f32 %v1897, %v1910
        %v1912 = vpop.f32.mrf.mxu0
        %v1913 = vadd.f32 %v1899, %v1912
        %1914 = vdwg.mxu0
        %1915 = vmatpush.bf16.msra.mxu0 %v1838
        %1916 = vmatpush.bf16.msra.mxu0 %v1836
        %1917 = vmatpush.bf16.msra.mxu0 %v1834
        %1918 = vmatpush.bf16.msra.mxu0 %v1832
        %1919 = vmatpush.bf16.msra.mxu0 %v1830
        %1920 = vmatpush.bf16.msra.mxu0 %v1828
        %1921 = vmatpush.bf16.msra.mxu0 %v1826
        %1922 = vmatpush.bf16.msra.mxu0 %v1824
        %1923 = vmatmul.bf16.gmra.mxu0 %v1687
        %v1924 = vpop.f32.mrf.mxu0
        %v1925 = vadd.f32 %v1724, %v1924
        %v1926 = vpop.f32.mrf.mxu0
        %v1927 = vadd.f32 %v1724, %v1926
        %1928 = vdwg.mxu0
        %1929 = vmatpush.bf16.msra.mxu0 %v1854
        %1930 = vmatpush.bf16.msra.mxu0 %v1852
        %1931 = vmatpush.bf16.msra.mxu0 %v1850
        %1932 = vmatpush.bf16.msra.mxu0 %v1848
        %1933 = vmatpush.bf16.msra.mxu0 %v1846
        %1934 = vmatpush.bf16.msra.mxu0 %v1844
        %1935 = vmatpush.bf16.msra.mxu0 %v1842
        %1936 = vmatpush.bf16.msra.mxu0 %v1840
        %1937 = vmatmul.bf16.gmra.mxu0 %v1688
        %v1938 = vpop.f32.mrf.mxu0
        %v1939 = vadd.f32 %v1925, %v1938
        %v1940 = vpop.f32.mrf.mxu0
        %v1941 = vadd.f32 %v1927, %v1940
        %1942 = vdwg.mxu0
        %v1943 = vadd.f32 %v619, %v1911
        %v1944 = vadd.f32 %v620, %v1939
        %v1945 = vadd.f32 %v621, %v1913
        %v1946 = vadd.f32 %v622, %v1941
        %v1947 = vadd.f32 %v1943, %v1944
        %1948 = vadd.xlane.f32.xlu0 %v1947
        %v1949 = vpop.xlane.xlu0 %1948
        %v1950 = vadd.f32 %v1945, %v1946
        %1951 = vadd.xlane.f32.xlu0 %v1950
        %v1952 = vpop.xlane.xlu0 %1951
        %v1953 = vmul.f32 %v1949, %v637
        %v1954 = vmul.f32 %v1952, %v637
        %v1955 = vsub.f32 %v1943, %v1953
        %v1956 = vsub.f32 %v1944, %v1953
        %v1957 = vsub.f32 %v1945, %v1954
        %v1958 = vsub.f32 %v1946, %v1954
        %v1959 = vmul.f32 %v1955, %v1955
        %v1960 = vmul.f32 %v1956, %v1956
        %v1961 = vmul.f32 %v1957, %v1957
        %v1962 = vmul.f32 %v1958, %v1958
        %v1963 = vadd.f32 %v1959, %v1960
        %1964 = vadd.xlane.f32.xlu0 %v1963
        %v1965 = vpop.xlane.xlu0 %1964
        %v1966 = vadd.f32 %v1961, %v1962
        %1967 = vadd.xlane.f32.xlu0 %v1966
        %v1968 = vpop.xlane.xlu0 %1967
        %v1969 = vmul.f32 %v1965, %v637
        %v1970 = vmul.f32 %v1968, %v637
        %v1971 = vadd.f32 %v1969, 1e-05
        %v1972 = vadd.f32 %v1970, 1e-05
        %v1973 = vrsqrt.pop %v1971
        %v1974 = vmul.f32 %v1973, %v1971
        %v1975 = vmul.f32 %v1974, %v1973
        %v1976 = vmul.f32 0.5, %v1975
        %v1977 = vsub.f32 1.5, %v1976
        %v1978 = vmul.f32 %v1973, %v1977
        %vm1979 = vweird.f32 %v1971
        %vm1980 = vweird.f32 %v1973
        %vm1981 = vmor %vm1979, %vm1980
        %v1982 = vsel %vm1981, %v1973, %v1978
        %v1983 = vrsqrt.pop %v1972
        %v1984 = vmul.f32 %v1983, %v1972
        %v1985 = vmul.f32 %v1984, %v1983
        %v1986 = vmul.f32 0.5, %v1985
        %v1987 = vsub.f32 1.5, %v1986
        %v1988 = vmul.f32 %v1983, %v1987
        %vm1989 = vweird.f32 %v1972
        %vm1990 = vweird.f32 %v1983
        %vm1991 = vmor %vm1989, %vm1990
        %v1992 = vsel %vm1991, %v1983, %v1988
        %v1993 = vmul.f32 %v1955, %v1982
        %v1994 = vmul.f32 %v1956, %v1982
        %v1995 = vmul.f32 %v1957, %v1992
        %v1996 = vmul.f32 %v1958, %v1992
        %v1997 = vld [vmem:[%s10] sm:$0x3]
        %v1999 = vperm.slane %v1997, 0
        %v2000 = vperm.slane %v1997, 1
        %v2003 = vmul.f32 %v1993, %v1999
        %v2004 = vmul.f32 %v1994, %v2000
        %v2005 = vmul.f32 %v1995, %v1999
        %v2006 = vmul.f32 %v1996, %v2000
        %v2007 = vld [vmem:[%s11] sm:$0x3]
        %v2009 = vperm.slane %v2007, 0
        %v2010 = vperm.slane %v2007, 1
        %v2013 = vadd.f32 %v2003, %v2009
        %v2014 = vadd.f32 %v2004, %v2010
        %v2015 = vadd.f32 %v2005, %v2009
        %v2016 = vadd.f32 %v2006, %v2010
        %v2017 = vpack.c.bf16 %v2015, %v2013
        %v2018 = vpack.c.bf16 %v2016, %v2014
        %v2019 = vld [vmem:[%s12] sm:$0xff]
        %v2020 = vld [vmem:[%s12 + $0x8] sm:$0xff]
        %v2021 = vld [vmem:[%s12 + $0x10] sm:$0xff]
        %v2022 = vld [vmem:[%s12 + $0x18] sm:$0xff]
        %v2023 = vld [vmem:[%s12 + $0x20] sm:$0xff]
        %v2024 = vld [vmem:[%s12 + $0x28] sm:$0xff]
        %v2025 = vld [vmem:[%s12 + $0x30] sm:$0xff]
        %v2026 = vld [vmem:[%s12 + $0x38] sm:$0xff]
        %v2027 = vld [vmem:[%s12 + $0x40] sm:$0xff]
        %v2028 = vld [vmem:[%s12 + $0x48] sm:$0xff]
        %v2029 = vld [vmem:[%s12 + $0x50] sm:$0xff]
        %v2030 = vld [vmem:[%s12 + $0x58] sm:$0xff]
        %v2031 = vld [vmem:[%s12 + $0x60] sm:$0xff]
        %v2032 = vld [vmem:[%s12 + $0x68] sm:$0xff]
        %v2033 = vld [vmem:[%s12 + $0x70] sm:$0xff]
        %v2034 = vld [vmem:[%s12 + $0x78] sm:$0xff]
        %v2035 = vld [vmem:[%s12 + $0x80] sm:$0xff]
        %v2036 = vld [vmem:[%s12 + $0x88] sm:$0xff]
        %v2037 = vld [vmem:[%s12 + $0x90] sm:$0xff]
        %v2038 = vld [vmem:[%s12 + $0x98] sm:$0xff]
        %v2039 = vld [vmem:[%s12 + $0xa0] sm:$0xff]
        %v2040 = vld [vmem:[%s12 + $0xa8] sm:$0xff]
        %v2041 = vld [vmem:[%s12 + $0xb0] sm:$0xff]
        %v2042 = vld [vmem:[%s12 + $0xb8] sm:$0xff]
        %v2043 = vld [vmem:[%s12 + $0xc0] sm:$0xff]
        %v2044 = vld [vmem:[%s12 + $0xc8] sm:$0xff]
        %v2045 = vld [vmem:[%s12 + $0xd0] sm:$0xff]
        %v2046 = vld [vmem:[%s12 + $0xd8] sm:$0xff]
        %v2047 = vld [vmem:[%s12 + $0xe0] sm:$0xff]
        %v2048 = vld [vmem:[%s12 + $0xe8] sm:$0xff]
        %v2049 = vld [vmem:[%s12 + $0xf0] sm:$0xff]
        %v2050 = vld [vmem:[%s12 + $0xf8] sm:$0xff]
        %v2051 = vld [vmem:[%s12 + $0x100] sm:$0xff]
        %v2052 = vld [vmem:[%s12 + $0x108] sm:$0xff]
        %v2053 = vld [vmem:[%s12 + $0x110] sm:$0xff]
        %v2054 = vld [vmem:[%s12 + $0x118] sm:$0xff]
        %v2055 = vld [vmem:[%s12 + $0x120] sm:$0xff]
        %v2056 = vld [vmem:[%s12 + $0x128] sm:$0xff]
        %v2057 = vld [vmem:[%s12 + $0x130] sm:$0xff]
        %v2058 = vld [vmem:[%s12 + $0x138] sm:$0xff]
        %v2059 = vld [vmem:[%s12 + $0x140] sm:$0xff]
        %v2060 = vld [vmem:[%s12 + $0x148] sm:$0xff]
        %v2061 = vld [vmem:[%s12 + $0x150] sm:$0xff]
        %v2062 = vld [vmem:[%s12 + $0x158] sm:$0xff]
        %v2063 = vld [vmem:[%s12 + $0x160] sm:$0xff]
        %v2064 = vld [vmem:[%s12 + $0x168] sm:$0xff]
        %v2065 = vld [vmem:[%s12 + $0x170] sm:$0xff]
        %v2066 = vld [vmem:[%s12 + $0x178] sm:$0xff]
        %v2067 = vld [vmem:[%s12 + $0x180] sm:$0xff]
        %v2068 = vld [vmem:[%s12 + $0x188] sm:$0xff]
        %v2069 = vld [vmem:[%s12 + $0x190] sm:$0xff]
        %v2070 = vld [vmem:[%s12 + $0x198] sm:$0xff]
        %v2071 = vld [vmem:[%s12 + $0x1a0] sm:$0xff]
        %v2072 = vld [vmem:[%s12 + $0x1a8] sm:$0xff]
        %v2073 = vld [vmem:[%s12 + $0x1b0] sm:$0xff]
        %v2074 = vld [vmem:[%s12 + $0x1b8] sm:$0xff]
        %v2075 = vld [vmem:[%s12 + $0x1c0] sm:$0xff]
        %v2076 = vld [vmem:[%s12 + $0x1c8] sm:$0xff]
        %v2077 = vld [vmem:[%s12 + $0x1d0] sm:$0xff]
        %v2078 = vld [vmem:[%s12 + $0x1d8] sm:$0xff]
        %v2079 = vld [vmem:[%s12 + $0x1e0] sm:$0xff]
        %v2080 = vld [vmem:[%s12 + $0x1e8] sm:$0xff]
        %v2081 = vld [vmem:[%s12 + $0x1f0] sm:$0xff]
        %v2082 = vld [vmem:[%s12 + $0x1f8] sm:$0xff]
        %v2083 = vld [vmem:[%s12 + $0x200] sm:$0xff]
        %v2084 = vld [vmem:[%s12 + $0x208] sm:$0xff]
        %v2085 = vld [vmem:[%s12 + $0x210] sm:$0xff]
        %v2086 = vld [vmem:[%s12 + $0x218] sm:$0xff]
        %v2087 = vld [vmem:[%s12 + $0x220] sm:$0xff]
        %v2088 = vld [vmem:[%s12 + $0x228] sm:$0xff]
        %v2089 = vld [vmem:[%s12 + $0x230] sm:$0xff]
        %v2090 = vld [vmem:[%s12 + $0x238] sm:$0xff]
        %v2091 = vld [vmem:[%s12 + $0x240] sm:$0xff]
        %v2092 = vld [vmem:[%s12 + $0x248] sm:$0xff]
        %v2093 = vld [vmem:[%s12 + $0x250] sm:$0xff]
        %v2094 = vld [vmem:[%s12 + $0x258] sm:$0xff]
        %v2095 = vld [vmem:[%s12 + $0x260] sm:$0xff]
        %v2096 = vld [vmem:[%s12 + $0x268] sm:$0xff]
        %v2097 = vld [vmem:[%s12 + $0x270] sm:$0xff]
        %v2098 = vld [vmem:[%s12 + $0x278] sm:$0xff]
        %v2099 = vld [vmem:[%s12 + $0x280] sm:$0xff]
        %v2100 = vld [vmem:[%s12 + $0x288] sm:$0xff]
        %v2101 = vld [vmem:[%s12 + $0x290] sm:$0xff]
        %v2102 = vld [vmem:[%s12 + $0x298] sm:$0xff]
        %v2103 = vld [vmem:[%s12 + $0x2a0] sm:$0xff]
        %v2104 = vld [vmem:[%s12 + $0x2a8] sm:$0xff]
        %v2105 = vld [vmem:[%s12 + $0x2b0] sm:$0xff]
        %v2106 = vld [vmem:[%s12 + $0x2b8] sm:$0xff]
        %v2107 = vld [vmem:[%s12 + $0x2c0] sm:$0xff]
        %v2108 = vld [vmem:[%s12 + $0x2c8] sm:$0xff]
        %v2109 = vld [vmem:[%s12 + $0x2d0] sm:$0xff]
        %v2110 = vld [vmem:[%s12 + $0x2d8] sm:$0xff]
        %v2111 = vld [vmem:[%s12 + $0x2e0] sm:$0xff]
        %v2112 = vld [vmem:[%s12 + $0x2e8] sm:$0xff]
        %v2113 = vld [vmem:[%s12 + $0x2f0] sm:$0xff]
        %v2114 = vld [vmem:[%s12 + $0x2f8] sm:$0xff]
        %v2115 = vld [vmem:[%s12 + $0x300] sm:$0xff]
        %v2116 = vld [vmem:[%s12 + $0x308] sm:$0xff]
        %v2117 = vld [vmem:[%s12 + $0x310] sm:$0xff]
        %v2118 = vld [vmem:[%s12 + $0x318] sm:$0xff]
        %v2119 = vld [vmem:[%s12 + $0x320] sm:$0xff]
        %v2120 = vld [vmem:[%s12 + $0x328] sm:$0xff]
        %v2121 = vld [vmem:[%s12 + $0x330] sm:$0xff]
        %v2122 = vld [vmem:[%s12 + $0x338] sm:$0xff]
        %v2123 = vld [vmem:[%s12 + $0x340] sm:$0xff]
        %v2124 = vld [vmem:[%s12 + $0x348] sm:$0xff]
        %v2125 = vld [vmem:[%s12 + $0x350] sm:$0xff]
        %v2126 = vld [vmem:[%s12 + $0x358] sm:$0xff]
        %v2127 = vld [vmem:[%s12 + $0x360] sm:$0xff]
        %v2128 = vld [vmem:[%s12 + $0x368] sm:$0xff]
        %v2129 = vld [vmem:[%s12 + $0x370] sm:$0xff]
        %v2130 = vld [vmem:[%s12 + $0x378] sm:$0xff]
        %v2131 = vld [vmem:[%s12 + $0x380] sm:$0xff]
        %v2132 = vld [vmem:[%s12 + $0x388] sm:$0xff]
        %v2133 = vld [vmem:[%s12 + $0x390] sm:$0xff]
        %v2134 = vld [vmem:[%s12 + $0x398] sm:$0xff]
        %v2135 = vld [vmem:[%s12 + $0x3a0] sm:$0xff]
        %v2136 = vld [vmem:[%s12 + $0x3a8] sm:$0xff]
        %v2137 = vld [vmem:[%s12 + $0x3b0] sm:$0xff]
        %v2138 = vld [vmem:[%s12 + $0x3b8] sm:$0xff]
        %v2139 = vld [vmem:[%s12 + $0x3c0] sm:$0xff]
        %v2140 = vld [vmem:[%s12 + $0x3c8] sm:$0xff]
        %v2141 = vld [vmem:[%s12 + $0x3d0] sm:$0xff]
        %v2142 = vld [vmem:[%s12 + $0x3d8] sm:$0xff]
        %v2143 = vld [vmem:[%s12 + $0x3e0] sm:$0xff]
        %v2144 = vld [vmem:[%s12 + $0x3e8] sm:$0xff]
        %v2145 = vld [vmem:[%s12 + $0x3f0] sm:$0xff]
        %v2146 = vld [vmem:[%s12 + $0x3f8] sm:$0xff]
        %v2147 = vld [vmem:[%s13] sm:$0xff]
        %v2149 = vperm.slane %v2147, 0
        %v2150 = vperm.slane %v2147, 1
        %v2151 = vperm.slane %v2147, 2
        %v2152 = vperm.slane %v2147, 3
        %v2153 = vperm.slane %v2147, 4
        %v2154 = vperm.slane %v2147, 5
        %v2155 = vperm.slane %v2147, 6
        %v2156 = vperm.slane %v2147, 7
        %v2293 = vunpack.c.l.b16 %v2019
        %v2294 = vunpack.c.h.b16 %v2019
        %v2295 = vunpack.c.l.b16 %v2020
        %v2296 = vunpack.c.h.b16 %v2020
        %v2297 = vunpack.c.l.b16 %v2021
        %v2298 = vunpack.c.h.b16 %v2021
        %v2299 = vunpack.c.l.b16 %v2022
        %v2300 = vunpack.c.h.b16 %v2022
        %v2301 = vunpack.c.l.b16 %v2023
        %v2302 = vunpack.c.h.b16 %v2023
        %v2303 = vunpack.c.l.b16 %v2024
        %v2304 = vunpack.c.h.b16 %v2024
        %v2305 = vunpack.c.l.b16 %v2025
        %v2306 = vunpack.c.h.b16 %v2025
        %v2307 = vunpack.c.l.b16 %v2026
        %v2308 = vunpack.c.h.b16 %v2026
        %v2309 = vunpack.c.l.b16 %v2027
        %v2310 = vunpack.c.h.b16 %v2027
        %v2311 = vunpack.c.l.b16 %v2028
        %v2312 = vunpack.c.h.b16 %v2028
        %v2313 = vunpack.c.l.b16 %v2029
        %v2314 = vunpack.c.h.b16 %v2029
        %v2315 = vunpack.c.l.b16 %v2030
        %v2316 = vunpack.c.h.b16 %v2030
        %v2317 = vunpack.c.l.b16 %v2031
        %v2318 = vunpack.c.h.b16 %v2031
        %v2319 = vunpack.c.l.b16 %v2032
        %v2320 = vunpack.c.h.b16 %v2032
        %v2321 = vunpack.c.l.b16 %v2033
        %v2322 = vunpack.c.h.b16 %v2033
        %v2323 = vunpack.c.l.b16 %v2034
        %v2324 = vunpack.c.h.b16 %v2034
        %v2325 = vunpack.c.l.b16 %v2035
        %v2326 = vunpack.c.h.b16 %v2035
        %v2327 = vunpack.c.l.b16 %v2036
        %v2328 = vunpack.c.h.b16 %v2036
        %v2329 = vunpack.c.l.b16 %v2037
        %v2330 = vunpack.c.h.b16 %v2037
        %v2331 = vunpack.c.l.b16 %v2038
        %v2332 = vunpack.c.h.b16 %v2038
        %v2333 = vunpack.c.l.b16 %v2039
        %v2334 = vunpack.c.h.b16 %v2039
        %v2335 = vunpack.c.l.b16 %v2040
        %v2336 = vunpack.c.h.b16 %v2040
        %v2337 = vunpack.c.l.b16 %v2041
        %v2338 = vunpack.c.h.b16 %v2041
        %v2339 = vunpack.c.l.b16 %v2042
        %v2340 = vunpack.c.h.b16 %v2042
        %v2341 = vunpack.c.l.b16 %v2043
        %v2342 = vunpack.c.h.b16 %v2043
        %v2343 = vunpack.c.l.b16 %v2044
        %v2344 = vunpack.c.h.b16 %v2044
        %v2345 = vunpack.c.l.b16 %v2045
        %v2346 = vunpack.c.h.b16 %v2045
        %v2347 = vunpack.c.l.b16 %v2046
        %v2348 = vunpack.c.h.b16 %v2046
        %v2349 = vunpack.c.l.b16 %v2047
        %v2350 = vunpack.c.h.b16 %v2047
        %v2351 = vunpack.c.l.b16 %v2048
        %v2352 = vunpack.c.h.b16 %v2048
        %v2353 = vunpack.c.l.b16 %v2049
        %v2354 = vunpack.c.h.b16 %v2049
        %v2355 = vunpack.c.l.b16 %v2050
        %v2356 = vunpack.c.h.b16 %v2050
        %v2357 = vunpack.c.l.b16 %v2051
        %v2358 = vunpack.c.h.b16 %v2051
        %v2359 = vunpack.c.l.b16 %v2052
        %v2360 = vunpack.c.h.b16 %v2052
        %v2361 = vunpack.c.l.b16 %v2053
        %v2362 = vunpack.c.h.b16 %v2053
        %v2363 = vunpack.c.l.b16 %v2054
        %v2364 = vunpack.c.h.b16 %v2054
        %v2365 = vunpack.c.l.b16 %v2055
        %v2366 = vunpack.c.h.b16 %v2055
        %v2367 = vunpack.c.l.b16 %v2056
        %v2368 = vunpack.c.h.b16 %v2056
        %v2369 = vunpack.c.l.b16 %v2057
        %v2370 = vunpack.c.h.b16 %v2057
        %v2371 = vunpack.c.l.b16 %v2058
        %v2372 = vunpack.c.h.b16 %v2058
        %v2373 = vunpack.c.l.b16 %v2059
        %v2374 = vunpack.c.h.b16 %v2059
        %v2375 = vunpack.c.l.b16 %v2060
        %v2376 = vunpack.c.h.b16 %v2060
        %v2377 = vunpack.c.l.b16 %v2061
        %v2378 = vunpack.c.h.b16 %v2061
        %v2379 = vunpack.c.l.b16 %v2062
        %v2380 = vunpack.c.h.b16 %v2062
        %v2381 = vunpack.c.l.b16 %v2063
        %v2382 = vunpack.c.h.b16 %v2063
        %v2383 = vunpack.c.l.b16 %v2064
        %v2384 = vunpack.c.h.b16 %v2064
        %v2385 = vunpack.c.l.b16 %v2065
        %v2386 = vunpack.c.h.b16 %v2065
        %v2387 = vunpack.c.l.b16 %v2066
        %v2388 = vunpack.c.h.b16 %v2066
        %v2389 = vunpack.c.l.b16 %v2067
        %v2390 = vunpack.c.h.b16 %v2067
        %v2391 = vunpack.c.l.b16 %v2068
        %v2392 = vunpack.c.h.b16 %v2068
        %v2393 = vunpack.c.l.b16 %v2069
        %v2394 = vunpack.c.h.b16 %v2069
        %v2395 = vunpack.c.l.b16 %v2070
        %v2396 = vunpack.c.h.b16 %v2070
        %v2397 = vunpack.c.l.b16 %v2071
        %v2398 = vunpack.c.h.b16 %v2071
        %v2399 = vunpack.c.l.b16 %v2072
        %v2400 = vunpack.c.h.b16 %v2072
        %v2401 = vunpack.c.l.b16 %v2073
        %v2402 = vunpack.c.h.b16 %v2073
        %v2403 = vunpack.c.l.b16 %v2074
        %v2404 = vunpack.c.h.b16 %v2074
        %v2405 = vunpack.c.l.b16 %v2075
        %v2406 = vunpack.c.h.b16 %v2075
        %v2407 = vunpack.c.l.b16 %v2076
        %v2408 = vunpack.c.h.b16 %v2076
        %v2409 = vunpack.c.l.b16 %v2077
        %v2410 = vunpack.c.h.b16 %v2077
        %v2411 = vunpack.c.l.b16 %v2078
        %v2412 = vunpack.c.h.b16 %v2078
        %v2413 = vunpack.c.l.b16 %v2079
        %v2414 = vunpack.c.h.b16 %v2079
        %v2415 = vunpack.c.l.b16 %v2080
        %v2416 = vunpack.c.h.b16 %v2080
        %v2417 = vunpack.c.l.b16 %v2081
        %v2418 = vunpack.c.h.b16 %v2081
        %v2419 = vunpack.c.l.b16 %v2082
        %v2420 = vunpack.c.h.b16 %v2082
        %v2421 = vunpack.c.l.b16 %v2083
        %v2422 = vunpack.c.h.b16 %v2083
        %v2423 = vunpack.c.l.b16 %v2084
        %v2424 = vunpack.c.h.b16 %v2084
        %v2425 = vunpack.c.l.b16 %v2085
        %v2426 = vunpack.c.h.b16 %v2085
        %v2427 = vunpack.c.l.b16 %v2086
        %v2428 = vunpack.c.h.b16 %v2086
        %v2429 = vunpack.c.l.b16 %v2087
        %v2430 = vunpack.c.h.b16 %v2087
        %v2431 = vunpack.c.l.b16 %v2088
        %v2432 = vunpack.c.h.b16 %v2088
        %v2433 = vunpack.c.l.b16 %v2089
        %v2434 = vunpack.c.h.b16 %v2089
        %v2435 = vunpack.c.l.b16 %v2090
        %v2436 = vunpack.c.h.b16 %v2090
        %v2437 = vunpack.c.l.b16 %v2091
        %v2438 = vunpack.c.h.b16 %v2091
        %v2439 = vunpack.c.l.b16 %v2092
        %v2440 = vunpack.c.h.b16 %v2092
        %v2441 = vunpack.c.l.b16 %v2093
        %v2442 = vunpack.c.h.b16 %v2093
        %v2443 = vunpack.c.l.b16 %v2094
        %v2444 = vunpack.c.h.b16 %v2094
        %v2445 = vunpack.c.l.b16 %v2095
        %v2446 = vunpack.c.h.b16 %v2095
        %v2447 = vunpack.c.l.b16 %v2096
        %v2448 = vunpack.c.h.b16 %v2096
        %v2449 = vunpack.c.l.b16 %v2097
        %v2450 = vunpack.c.h.b16 %v2097
        %v2451 = vunpack.c.l.b16 %v2098
        %v2452 = vunpack.c.h.b16 %v2098
        %v2453 = vunpack.c.l.b16 %v2099
        %v2454 = vunpack.c.h.b16 %v2099
        %v2455 = vunpack.c.l.b16 %v2100
        %v2456 = vunpack.c.h.b16 %v2100
        %v2457 = vunpack.c.l.b16 %v2101
        %v2458 = vunpack.c.h.b16 %v2101
        %v2459 = vunpack.c.l.b16 %v2102
        %v2460 = vunpack.c.h.b16 %v2102
        %v2461 = vunpack.c.l.b16 %v2103
        %v2462 = vunpack.c.h.b16 %v2103
        %v2463 = vunpack.c.l.b16 %v2104
        %v2464 = vunpack.c.h.b16 %v2104
        %v2465 = vunpack.c.l.b16 %v2105
        %v2466 = vunpack.c.h.b16 %v2105
        %v2467 = vunpack.c.l.b16 %v2106
        %v2468 = vunpack.c.h.b16 %v2106
        %v2469 = vunpack.c.l.b16 %v2107
        %v2470 = vunpack.c.h.b16 %v2107
        %v2471 = vunpack.c.l.b16 %v2108
        %v2472 = vunpack.c.h.b16 %v2108
        %v2473 = vunpack.c.l.b16 %v2109
        %v2474 = vunpack.c.h.b16 %v2109
        %v2475 = vunpack.c.l.b16 %v2110
        %v2476 = vunpack.c.h.b16 %v2110
        %v2477 = vunpack.c.l.b16 %v2111
        %v2478 = vunpack.c.h.b16 %v2111
        %v2479 = vunpack.c.l.b16 %v2112
        %v2480 = vunpack.c.h.b16 %v2112
        %v2481 = vunpack.c.l.b16 %v2113
        %v2482 = vunpack.c.h.b16 %v2113
        %v2483 = vunpack.c.l.b16 %v2114
        %v2484 = vunpack.c.h.b16 %v2114
        %v2485 = vunpack.c.l.b16 %v2115
        %v2486 = vunpack.c.h.b16 %v2115
        %v2487 = vunpack.c.l.b16 %v2116
        %v2488 = vunpack.c.h.b16 %v2116
        %v2489 = vunpack.c.l.b16 %v2117
        %v2490 = vunpack.c.h.b16 %v2117
        %v2491 = vunpack.c.l.b16 %v2118
        %v2492 = vunpack.c.h.b16 %v2118
        %v2493 = vunpack.c.l.b16 %v2119
        %v2494 = vunpack.c.h.b16 %v2119
        %v2495 = vunpack.c.l.b16 %v2120
        %v2496 = vunpack.c.h.b16 %v2120
        %v2497 = vunpack.c.l.b16 %v2121
        %v2498 = vunpack.c.h.b16 %v2121
        %v2499 = vunpack.c.l.b16 %v2122
        %v2500 = vunpack.c.h.b16 %v2122
        %v2501 = vunpack.c.l.b16 %v2123
        %v2502 = vunpack.c.h.b16 %v2123
        %v2503 = vunpack.c.l.b16 %v2124
        %v2504 = vunpack.c.h.b16 %v2124
        %v2505 = vunpack.c.l.b16 %v2125
        %v2506 = vunpack.c.h.b16 %v2125
        %v2507 = vunpack.c.l.b16 %v2126
        %v2508 = vunpack.c.h.b16 %v2126
        %v2509 = vunpack.c.l.b16 %v2127
        %v2510 = vunpack.c.h.b16 %v2127
        %v2511 = vunpack.c.l.b16 %v2128
        %v2512 = vunpack.c.h.b16 %v2128
        %v2513 = vunpack.c.l.b16 %v2129
        %v2514 = vunpack.c.h.b16 %v2129
        %v2515 = vunpack.c.l.b16 %v2130
        %v2516 = vunpack.c.h.b16 %v2130
        %v2517 = vunpack.c.l.b16 %v2131
        %v2518 = vunpack.c.h.b16 %v2131
        %v2519 = vunpack.c.l.b16 %v2132
        %v2520 = vunpack.c.h.b16 %v2132
        %v2521 = vunpack.c.l.b16 %v2133
        %v2522 = vunpack.c.h.b16 %v2133
        %v2523 = vunpack.c.l.b16 %v2134
        %v2524 = vunpack.c.h.b16 %v2134
        %v2525 = vunpack.c.l.b16 %v2135
        %v2526 = vunpack.c.h.b16 %v2135
        %v2527 = vunpack.c.l.b16 %v2136
        %v2528 = vunpack.c.h.b16 %v2136
        %v2529 = vunpack.c.l.b16 %v2137
        %v2530 = vunpack.c.h.b16 %v2137
        %v2531 = vunpack.c.l.b16 %v2138
        %v2532 = vunpack.c.h.b16 %v2138
        %v2533 = vunpack.c.l.b16 %v2139
        %v2534 = vunpack.c.h.b16 %v2139
        %v2535 = vunpack.c.l.b16 %v2140
        %v2536 = vunpack.c.h.b16 %v2140
        %v2537 = vunpack.c.l.b16 %v2141
        %v2538 = vunpack.c.h.b16 %v2141
        %v2539 = vunpack.c.l.b16 %v2142
        %v2540 = vunpack.c.h.b16 %v2142
        %v2541 = vunpack.c.l.b16 %v2143
        %v2542 = vunpack.c.h.b16 %v2143
        %v2543 = vunpack.c.l.b16 %v2144
        %v2544 = vunpack.c.h.b16 %v2144
        %v2545 = vunpack.c.l.b16 %v2145
        %v2546 = vunpack.c.h.b16 %v2145
        %v2547 = vunpack.c.l.b16 %v2146
        %v2548 = vunpack.c.h.b16 %v2146
        %v2549 = vpack.c.b16 %v2301, %v2293
        %v2550 = vpack.c.b16 %v2302, %v2294
        %v2551 = vpack.c.b16 %v2303, %v2295
        %v2552 = vpack.c.b16 %v2304, %v2296
        %v2553 = vpack.c.b16 %v2305, %v2297
        %v2554 = vpack.c.b16 %v2306, %v2298
        %v2555 = vpack.c.b16 %v2307, %v2299
        %v2556 = vpack.c.b16 %v2308, %v2300
        %v2557 = vpack.c.b16 %v2317, %v2309
        %v2558 = vpack.c.b16 %v2318, %v2310
        %v2559 = vpack.c.b16 %v2319, %v2311
        %v2560 = vpack.c.b16 %v2320, %v2312
        %v2561 = vpack.c.b16 %v2321, %v2313
        %v2562 = vpack.c.b16 %v2322, %v2314
        %v2563 = vpack.c.b16 %v2323, %v2315
        %v2564 = vpack.c.b16 %v2324, %v2316
        %v2565 = vpack.c.b16 %v2333, %v2325
        %v2566 = vpack.c.b16 %v2334, %v2326
        %v2567 = vpack.c.b16 %v2335, %v2327
        %v2568 = vpack.c.b16 %v2336, %v2328
        %v2569 = vpack.c.b16 %v2337, %v2329
        %v2570 = vpack.c.b16 %v2338, %v2330
        %v2571 = vpack.c.b16 %v2339, %v2331
        %v2572 = vpack.c.b16 %v2340, %v2332
        %v2573 = vpack.c.b16 %v2349, %v2341
        %v2574 = vpack.c.b16 %v2350, %v2342
        %v2575 = vpack.c.b16 %v2351, %v2343
        %v2576 = vpack.c.b16 %v2352, %v2344
        %v2577 = vpack.c.b16 %v2353, %v2345
        %v2578 = vpack.c.b16 %v2354, %v2346
        %v2579 = vpack.c.b16 %v2355, %v2347
        %v2580 = vpack.c.b16 %v2356, %v2348
        %v2581 = vpack.c.b16 %v2365, %v2357
        %v2582 = vpack.c.b16 %v2366, %v2358
        %v2583 = vpack.c.b16 %v2367, %v2359
        %v2584 = vpack.c.b16 %v2368, %v2360
        %v2585 = vpack.c.b16 %v2369, %v2361
        %v2586 = vpack.c.b16 %v2370, %v2362
        %v2587 = vpack.c.b16 %v2371, %v2363
        %v2588 = vpack.c.b16 %v2372, %v2364
        %v2589 = vpack.c.b16 %v2381, %v2373
        %v2590 = vpack.c.b16 %v2382, %v2374
        %v2591 = vpack.c.b16 %v2383, %v2375
        %v2592 = vpack.c.b16 %v2384, %v2376
        %v2593 = vpack.c.b16 %v2385, %v2377
        %v2594 = vpack.c.b16 %v2386, %v2378
        %v2595 = vpack.c.b16 %v2387, %v2379
        %v2596 = vpack.c.b16 %v2388, %v2380
        %v2597 = vpack.c.b16 %v2397, %v2389
        %v2598 = vpack.c.b16 %v2398, %v2390
        %v2599 = vpack.c.b16 %v2399, %v2391
        %v2600 = vpack.c.b16 %v2400, %v2392
        %v2601 = vpack.c.b16 %v2401, %v2393
        %v2602 = vpack.c.b16 %v2402, %v2394
        %v2603 = vpack.c.b16 %v2403, %v2395
        %v2604 = vpack.c.b16 %v2404, %v2396
        %v2605 = vpack.c.b16 %v2413, %v2405
        %v2606 = vpack.c.b16 %v2414, %v2406
        %v2607 = vpack.c.b16 %v2415, %v2407
        %v2608 = vpack.c.b16 %v2416, %v2408
        %v2609 = vpack.c.b16 %v2417, %v2409
        %v2610 = vpack.c.b16 %v2418, %v2410
        %v2611 = vpack.c.b16 %v2419, %v2411
        %v2612 = vpack.c.b16 %v2420, %v2412
        %v2613 = vpack.c.b16 %v2429, %v2421
        %v2614 = vpack.c.b16 %v2430, %v2422
        %v2615 = vpack.c.b16 %v2431, %v2423
        %v2616 = vpack.c.b16 %v2432, %v2424
        %v2617 = vpack.c.b16 %v2433, %v2425
        %v2618 = vpack.c.b16 %v2434, %v2426
        %v2619 = vpack.c.b16 %v2435, %v2427
        %v2620 = vpack.c.b16 %v2436, %v2428
        %v2621 = vpack.c.b16 %v2445, %v2437
        %v2622 = vpack.c.b16 %v2446, %v2438
        %v2623 = vpack.c.b16 %v2447, %v2439
        %v2624 = vpack.c.b16 %v2448, %v2440
        %v2625 = vpack.c.b16 %v2449, %v2441
        %v2626 = vpack.c.b16 %v2450, %v2442
        %v2627 = vpack.c.b16 %v2451, %v2443
        %v2628 = vpack.c.b16 %v2452, %v2444
        %v2629 = vpack.c.b16 %v2461, %v2453
        %v2630 = vpack.c.b16 %v2462, %v2454
        %v2631 = vpack.c.b16 %v2463, %v2455
        %v2632 = vpack.c.b16 %v2464, %v2456
        %v2633 = vpack.c.b16 %v2465, %v2457
        %v2634 = vpack.c.b16 %v2466, %v2458
        %v2635 = vpack.c.b16 %v2467, %v2459
        %v2636 = vpack.c.b16 %v2468, %v2460
        %v2637 = vpack.c.b16 %v2477, %v2469
        %v2638 = vpack.c.b16 %v2478, %v2470
        %v2639 = vpack.c.b16 %v2479, %v2471
        %v2640 = vpack.c.b16 %v2480, %v2472
        %v2641 = vpack.c.b16 %v2481, %v2473
        %v2642 = vpack.c.b16 %v2482, %v2474
        %v2643 = vpack.c.b16 %v2483, %v2475
        %v2644 = vpack.c.b16 %v2484, %v2476
        %v2645 = vpack.c.b16 %v2493, %v2485
        %v2646 = vpack.c.b16 %v2494, %v2486
        %v2647 = vpack.c.b16 %v2495, %v2487
        %v2648 = vpack.c.b16 %v2496, %v2488
        %v2649 = vpack.c.b16 %v2497, %v2489
        %v2650 = vpack.c.b16 %v2498, %v2490
        %v2651 = vpack.c.b16 %v2499, %v2491
        %v2652 = vpack.c.b16 %v2500, %v2492
        %v2653 = vpack.c.b16 %v2509, %v2501
        %v2654 = vpack.c.b16 %v2510, %v2502
        %v2655 = vpack.c.b16 %v2511, %v2503
        %v2656 = vpack.c.b16 %v2512, %v2504
        %v2657 = vpack.c.b16 %v2513, %v2505
        %v2658 = vpack.c.b16 %v2514, %v2506
        %v2659 = vpack.c.b16 %v2515, %v2507
        %v2660 = vpack.c.b16 %v2516, %v2508
        %v2661 = vpack.c.b16 %v2525, %v2517
        %v2662 = vpack.c.b16 %v2526, %v2518
        %v2663 = vpack.c.b16 %v2527, %v2519
        %v2664 = vpack.c.b16 %v2528, %v2520
        %v2665 = vpack.c.b16 %v2529, %v2521
        %v2666 = vpack.c.b16 %v2530, %v2522
        %v2667 = vpack.c.b16 %v2531, %v2523
        %v2668 = vpack.c.b16 %v2532, %v2524
        %v2669 = vpack.c.b16 %v2541, %v2533
        %v2670 = vpack.c.b16 %v2542, %v2534
        %v2671 = vpack.c.b16 %v2543, %v2535
        %v2672 = vpack.c.b16 %v2544, %v2536
        %v2673 = vpack.c.b16 %v2545, %v2537
        %v2674 = vpack.c.b16 %v2546, %v2538
        %v2675 = vpack.c.b16 %v2547, %v2539
        %v2676 = vpack.c.b16 %v2548, %v2540
        %2805 = vmatpush.bf16.msra.mxu0 %v2605
        %2806 = vmatpush.bf16.msra.mxu0 %v2597
        %2807 = vmatpush.bf16.msra.mxu0 %v2589
        %2808 = vmatpush.bf16.msra.mxu0 %v2581
        %2809 = vmatpush.bf16.msra.mxu0 %v2573
        %2810 = vmatpush.bf16.msra.mxu0 %v2565
        %2811 = vmatpush.bf16.msra.mxu0 %v2557
        %2812 = vmatpush.bf16.msra.mxu0 %v2549
        %2813 = vmatmul.bf16.gmra.mxu0 %v2017
        %v2814 = vpop.f32.mrf.mxu0
        %v2815 = vadd.f32 %v2149, %v2814
        %v2816 = vpop.f32.mrf.mxu0
        %v2817 = vadd.f32 %v2149, %v2816
        %2818 = vdwg.mxu0
        %2819 = vmatpush.bf16.msra.mxu0 %v2669
        %2820 = vmatpush.bf16.msra.mxu0 %v2661
        %2821 = vmatpush.bf16.msra.mxu0 %v2653
        %2822 = vmatpush.bf16.msra.mxu0 %v2645
        %2823 = vmatpush.bf16.msra.mxu0 %v2637
        %2824 = vmatpush.bf16.msra.mxu0 %v2629
        %2825 = vmatpush.bf16.msra.mxu0 %v2621
        %2826 = vmatpush.bf16.msra.mxu0 %v2613
        %2827 = vmatmul.bf16.gmra.mxu0 %v2018
        %v2828 = vpop.f32.mrf.mxu0
        %v2829 = vadd.f32 %v2815, %v2828
        %v2830 = vpop.f32.mrf.mxu0
        %v2831 = vadd.f32 %v2817, %v2830
        %2832 = vdwg.mxu0
        %2833 = vmatpush.bf16.msra.mxu0 %v2606
        %2834 = vmatpush.bf16.msra.mxu0 %v2598
        %2835 = vmatpush.bf16.msra.mxu0 %v2590
        %2836 = vmatpush.bf16.msra.mxu0 %v2582
        %2837 = vmatpush.bf16.msra.mxu0 %v2574
        %2838 = vmatpush.bf16.msra.mxu0 %v2566
        %2839 = vmatpush.bf16.msra.mxu0 %v2558
        %2840 = vmatpush.bf16.msra.mxu0 %v2550
        %2841 = vmatmul.bf16.gmra.mxu0 %v2017
        %v2842 = vpop.f32.mrf.mxu0
        %v2843 = vadd.f32 %v2150, %v2842
        %v2844 = vpop.f32.mrf.mxu0
        %v2845 = vadd.f32 %v2150, %v2844
        %2846 = vdwg.mxu0
        %2847 = vmatpush.bf16.msra.mxu0 %v2670
        %2848 = vmatpush.bf16.msra.mxu0 %v2662
        %2849 = vmatpush.bf16.msra.mxu0 %v2654
        %2850 = vmatpush.bf16.msra.mxu0 %v2646
        %2851 = vmatpush.bf16.msra.mxu0 %v2638
        %2852 = vmatpush.bf16.msra.mxu0 %v2630
        %2853 = vmatpush.bf16.msra.mxu0 %v2622
        %2854 = vmatpush.bf16.msra.mxu0 %v2614
        %2855 = vmatmul.bf16.gmra.mxu0 %v2018
        %v2856 = vpop.f32.mrf.mxu0
        %v2857 = vadd.f32 %v2843, %v2856
        %v2858 = vpop.f32.mrf.mxu0
        %v2859 = vadd.f32 %v2845, %v2858
        %2860 = vdwg.mxu0
        %2861 = vmatpush.bf16.msra.mxu0 %v2607
        %2862 = vmatpush.bf16.msra.mxu0 %v2599
        %2863 = vmatpush.bf16.msra.mxu0 %v2591
        %2864 = vmatpush.bf16.msra.mxu0 %v2583
        %2865 = vmatpush.bf16.msra.mxu0 %v2575
        %2866 = vmatpush.bf16.msra.mxu0 %v2567
        %2867 = vmatpush.bf16.msra.mxu0 %v2559
        %2868 = vmatpush.bf16.msra.mxu0 %v2551
        %2869 = vmatmul.bf16.gmra.mxu0 %v2017
        %v2870 = vpop.f32.mrf.mxu0
        %v2871 = vadd.f32 %v2151, %v2870
        %v2872 = vpop.f32.mrf.mxu0
        %v2873 = vadd.f32 %v2151, %v2872
        %2874 = vdwg.mxu0
        %2875 = vmatpush.bf16.msra.mxu0 %v2671
        %2876 = vmatpush.bf16.msra.mxu0 %v2663
        %2877 = vmatpush.bf16.msra.mxu0 %v2655
        %2878 = vmatpush.bf16.msra.mxu0 %v2647
        %2879 = vmatpush.bf16.msra.mxu0 %v2639
        %2880 = vmatpush.bf16.msra.mxu0 %v2631
        %2881 = vmatpush.bf16.msra.mxu0 %v2623
        %2882 = vmatpush.bf16.msra.mxu0 %v2615
        %2883 = vmatmul.bf16.gmra.mxu0 %v2018
        %v2884 = vpop.f32.mrf.mxu0
        %v2885 = vadd.f32 %v2871, %v2884
        %v2886 = vpop.f32.mrf.mxu0
        %v2887 = vadd.f32 %v2873, %v2886
        %2888 = vdwg.mxu0
        %2889 = vmatpush.bf16.msra.mxu0 %v2608
        %2890 = vmatpush.bf16.msra.mxu0 %v2600
        %2891 = vmatpush.bf16.msra.mxu0 %v2592
        %2892 = vmatpush.bf16.msra.mxu0 %v2584
        %2893 = vmatpush.bf16.msra.mxu0 %v2576
        %2894 = vmatpush.bf16.msra.mxu0 %v2568
        %2895 = vmatpush.bf16.msra.mxu0 %v2560
        %2896 = vmatpush.bf16.msra.mxu0 %v2552
        %2897 = vmatmul.bf16.gmra.mxu0 %v2017
        %v2898 = vpop.f32.mrf.mxu0
        %v2899 = vadd.f32 %v2152, %v2898
        %v2900 = vpop.f32.mrf.mxu0
        %v2901 = vadd.f32 %v2152, %v2900
        %2902 = vdwg.mxu0
        %2903 = vmatpush.bf16.msra.mxu0 %v2672
        %2904 = vmatpush.bf16.msra.mxu0 %v2664
        %2905 = vmatpush.bf16.msra.mxu0 %v2656
        %2906 = vmatpush.bf16.msra.mxu0 %v2648
        %2907 = vmatpush.bf16.msra.mxu0 %v2640
        %2908 = vmatpush.bf16.msra.mxu0 %v2632
        %2909 = vmatpush.bf16.msra.mxu0 %v2624
        %2910 = vmatpush.bf16.msra.mxu0 %v2616
        %2911 = vmatmul.bf16.gmra.mxu0 %v2018
        %v2912 = vpop.f32.mrf.mxu0
        %v2913 = vadd.f32 %v2899, %v2912
        %v2914 = vpop.f32.mrf.mxu0
        %v2915 = vadd.f32 %v2901, %v2914
        %2916 = vdwg.mxu0
        %2917 = vmatpush.bf16.msra.mxu0 %v2609
        %2918 = vmatpush.bf16.msra.mxu0 %v2601
        %2919 = vmatpush.bf16.msra.mxu0 %v2593
        %2920 = vmatpush.bf16.msra.mxu0 %v2585
        %2921 = vmatpush.bf16.msra.mxu0 %v2577
        %2922 = vmatpush.bf16.msra.mxu0 %v2569
        %2923 = vmatpush.bf16.msra.mxu0 %v2561
        %2924 = vmatpush.bf16.msra.mxu0 %v2553
        %2925 = vmatmul.bf16.gmra.mxu0 %v2017
        %v2926 = vpop.f32.mrf.mxu0
        %v2927 = vadd.f32 %v2153, %v2926
        %v2928 = vpop.f32.mrf.mxu0
        %v2929 = vadd.f32 %v2153, %v2928
        %2930 = vdwg.mxu0
        %2931 = vmatpush.bf16.msra.mxu0 %v2673
        %2932 = vmatpush.bf16.msra.mxu0 %v2665
        %2933 = vmatpush.bf16.msra.mxu0 %v2657
        %2934 = vmatpush.bf16.msra.mxu0 %v2649
        %2935 = vmatpush.bf16.msra.mxu0 %v2641
        %2936 = vmatpush.bf16.msra.mxu0 %v2633
        %2937 = vmatpush.bf16.msra.mxu0 %v2625
        %2938 = vmatpush.bf16.msra.mxu0 %v2617
        %2939 = vmatmul.bf16.gmra.mxu0 %v2018
        %v2940 = vpop.f32.mrf.mxu0
        %v2941 = vadd.f32 %v2927, %v2940
        %v2942 = vpop.f32.mrf.mxu0
        %v2943 = vadd.f32 %v2929, %v2942
        %2944 = vdwg.mxu0
        %2945 = vmatpush.bf16.msra.mxu0 %v2610
        %2946 = vmatpush.bf16.msra.mxu0 %v2602
        %2947 = vmatpush.bf16.msra.mxu0 %v2594
        %2948 = vmatpush.bf16.msra.mxu0 %v2586
        %2949 = vmatpush.bf16.msra.mxu0 %v2578
        %2950 = vmatpush.bf16.msra.mxu0 %v2570
        %2951 = vmatpush.bf16.msra.mxu0 %v2562
        %2952 = vmatpush.bf16.msra.mxu0 %v2554
        %2953 = vmatmul.bf16.gmra.mxu0 %v2017
        %v2954 = vpop.f32.mrf.mxu0
        %v2955 = vadd.f32 %v2154, %v2954
        %v2956 = vpop.f32.mrf.mxu0
        %v2957 = vadd.f32 %v2154, %v2956
        %2958 = vdwg.mxu0
        %2959 = vmatpush.bf16.msra.mxu0 %v2674
        %2960 = vmatpush.bf16.msra.mxu0 %v2666
        %2961 = vmatpush.bf16.msra.mxu0 %v2658
        %2962 = vmatpush.bf16.msra.mxu0 %v2650
        %2963 = vmatpush.bf16.msra.mxu0 %v2642
        %2964 = vmatpush.bf16.msra.mxu0 %v2634
        %2965 = vmatpush.bf16.msra.mxu0 %v2626
        %2966 = vmatpush.bf16.msra.mxu0 %v2618
        %2967 = vmatmul.bf16.gmra.mxu0 %v2018
        %v2968 = vpop.f32.mrf.mxu0
        %v2969 = vadd.f32 %v2955, %v2968
        %v2970 = vpop.f32.mrf.mxu0
        %v2971 = vadd.f32 %v2957, %v2970
        %2972 = vdwg.mxu0
        %2973 = vmatpush.bf16.msra.mxu0 %v2611
        %2974 = vmatpush.bf16.msra.mxu0 %v2603
        %2975 = vmatpush.bf16.msra.mxu0 %v2595
        %2976 = vmatpush.bf16.msra.mxu0 %v2587
        %2977 = vmatpush.bf16.msra.mxu0 %v2579
        %2978 = vmatpush.bf16.msra.mxu0 %v2571
        %2979 = vmatpush.bf16.msra.mxu0 %v2563
        %2980 = vmatpush.bf16.msra.mxu0 %v2555
        %2981 = vmatmul.bf16.gmra.mxu0 %v2017
        %v2982 = vpop.f32.mrf.mxu0
        %v2983 = vadd.f32 %v2155, %v2982
        %v2984 = vpop.f32.mrf.mxu0
        %v2985 = vadd.f32 %v2155, %v2984
        %2986 = vdwg.mxu0
        %2987 = vmatpush.bf16.msra.mxu0 %v2675
        %2988 = vmatpush.bf16.msra.mxu0 %v2667
        %2989 = vmatpush.bf16.msra.mxu0 %v2659
        %2990 = vmatpush.bf16.msra.mxu0 %v2651
        %2991 = vmatpush.bf16.msra.mxu0 %v2643
        %2992 = vmatpush.bf16.msra.mxu0 %v2635
        %2993 = vmatpush.bf16.msra.mxu0 %v2627
        %2994 = vmatpush.bf16.msra.mxu0 %v2619
        %2995 = vmatmul.bf16.gmra.mxu0 %v2018
        %v2996 = vpop.f32.mrf.mxu0
        %v2997 = vadd.f32 %v2983, %v2996
        %v2998 = vpop.f32.mrf.mxu0
        %v2999 = vadd.f32 %v2985, %v2998
        %3000 = vdwg.mxu0
        %3001 = vmatpush.bf16.msra.mxu0 %v2612
        %3002 = vmatpush.bf16.msra.mxu0 %v2604
        %3003 = vmatpush.bf16.msra.mxu0 %v2596
        %3004 = vmatpush.bf16.msra.mxu0 %v2588
        %3005 = vmatpush.bf16.msra.mxu0 %v2580
        %3006 = vmatpush.bf16.msra.mxu0 %v2572
        %3007 = vmatpush.bf16.msra.mxu0 %v2564
        %3008 = vmatpush.bf16.msra.mxu0 %v2556
        %3009 = vmatmul.bf16.gmra.mxu0 %v2017
        %v3010 = vpop.f32.mrf.mxu0
        %v3011 = vadd.f32 %v2156, %v3010
        %v3012 = vpop.f32.mrf.mxu0
        %v3013 = vadd.f32 %v2156, %v3012
        %3014 = vdwg.mxu0
        %3015 = vmatpush.bf16.msra.mxu0 %v2676
        %3016 = vmatpush.bf16.msra.mxu0 %v2668
        %3017 = vmatpush.bf16.msra.mxu0 %v2660
        %3018 = vmatpush.bf16.msra.mxu0 %v2652
        %3019 = vmatpush.bf16.msra.mxu0 %v2644
        %3020 = vmatpush.bf16.msra.mxu0 %v2636
        %3021 = vmatpush.bf16.msra.mxu0 %v2628
        %3022 = vmatpush.bf16.msra.mxu0 %v2620
        %3023 = vmatmul.bf16.gmra.mxu0 %v2018
        %v3024 = vpop.f32.mrf.mxu0
        %v3025 = vadd.f32 %v3011, %v3024
        %v3026 = vpop.f32.mrf.mxu0
        %v3027 = vadd.f32 %v3013, %v3026
        %3028 = vdwg.mxu0
        %v3029 = vmul.f32 %v2829, %v2829
        %v3030 = vmul.f32 %v2857, %v2857
        %v3031 = vmul.f32 %v2885, %v2885
        %v3032 = vmul.f32 %v2913, %v2913
        %v3033 = vmul.f32 %v2941, %v2941
        %v3034 = vmul.f32 %v2969, %v2969
        %v3035 = vmul.f32 %v2997, %v2997
        %v3036 = vmul.f32 %v3025, %v3025
        %v3037 = vmul.f32 %v2831, %v2831
        %v3038 = vmul.f32 %v2859, %v2859
        %v3039 = vmul.f32 %v2887, %v2887
        %v3040 = vmul.f32 %v2915, %v2915
        %v3041 = vmul.f32 %v2943, %v2943
        %v3042 = vmul.f32 %v2971, %v2971
        %v3043 = vmul.f32 %v2999, %v2999
        %v3044 = vmul.f32 %v3027, %v3027
        %v3045 = vmul.f32 %v2829, %v3029
        %v3046 = vmul.f32 %v2857, %v3030
        %v3047 = vmul.f32 %v2885, %v3031
        %v3048 = vmul.f32 %v2913, %v3032
        %v3049 = vmul.f32 %v2941, %v3033
        %v3050 = vmul.f32 %v2969, %v3034
        %v3051 = vmul.f32 %v2997, %v3035
        %v3052 = vmul.f32 %v3025, %v3036
        %v3053 = vmul.f32 %v2831, %v3037
        %v3054 = vmul.f32 %v2859, %v3038
        %v3055 = vmul.f32 %v2887, %v3039
        %v3056 = vmul.f32 %v2915, %v3040
        %v3057 = vmul.f32 %v2943, %v3041
        %v3058 = vmul.f32 %v2971, %v3042
        %v3059 = vmul.f32 %v2999, %v3043
        %v3060 = vmul.f32 %v3027, %v3044
        %v3061 = vmul.f32 %v3045, 0.044715
        %v3062 = vmul.f32 %v3046, 0.044715
        %v3063 = vmul.f32 %v3047, 0.044715
        %v3064 = vmul.f32 %v3048, 0.044715
        %v3065 = vmul.f32 %v3049, 0.044715
        %v3066 = vmul.f32 %v3050, 0.044715
        %v3067 = vmul.f32 %v3051, 0.044715
        %v3068 = vmul.f32 %v3052, 0.044715
        %v3069 = vmul.f32 %v3053, 0.044715
        %v3070 = vmul.f32 %v3054, 0.044715
        %v3071 = vmul.f32 %v3055, 0.044715
        %v3072 = vmul.f32 %v3056, 0.044715
        %v3073 = vmul.f32 %v3057, 0.044715
        %v3074 = vmul.f32 %v3058, 0.044715
        %v3075 = vmul.f32 %v3059, 0.044715
        %v3076 = vmul.f32 %v3060, 0.044715
        %v3077 = vadd.f32 %v2829, %v3061
        %v3078 = vadd.f32 %v2857, %v3062
        %v3079 = vadd.f32 %v2885, %v3063
        %v3080 = vadd.f32 %v2913, %v3064
        %v3081 = vadd.f32 %v2941, %v3065
        %v3082 = vadd.f32 %v2969, %v3066
        %v3083 = vadd.f32 %v2997, %v3067
        %v3084 = vadd.f32 %v3025, %v3068
        %v3085 = vadd.f32 %v2831, %v3069
        %v3086 = vadd.f32 %v2859, %v3070
        %v3087 = vadd.f32 %v2887, %v3071
        %v3088 = vadd.f32 %v2915, %v3072
        %v3089 = vadd.f32 %v2943, %v3073
        %v3090 = vadd.f32 %v2971, %v3074
        %v3091 = vadd.f32 %v2999, %v3075
        %v3092 = vadd.f32 %v3027, %v3076
        %v3093 = vmul.f32 %v3077, 0.7978846
        %v3094 = vmul.f32 %v3078, 0.7978846
        %v3095 = vmul.f32 %v3079, 0.7978846
        %v3096 = vmul.f32 %v3080, 0.7978846
        %v3097 = vmul.f32 %v3081, 0.7978846
        %v3098 = vmul.f32 %v3082, 0.7978846
        %v3099 = vmul.f32 %v3083, 0.7978846
        %v3100 = vmul.f32 %v3084, 0.7978846
        %v3101 = vmul.f32 %v3085, 0.7978846
        %v3102 = vmul.f32 %v3086, 0.7978846
        %v3103 = vmul.f32 %v3087, 0.7978846
        %v3104 = vmul.f32 %v3088, 0.7978846
        %v3105 = vmul.f32 %v3089, 0.7978846
        %v3106 = vmul.f32 %v3090, 0.7978846
        %v3107 = vmul.f32 %v3091, 0.7978846
        %v3108 = vmul.f32 %v3092, 0.7978846
        %v3109 = vtanh.pop %v3093
        %v3110 = vtanh.pop %v3094
        %v3111 = vtanh.pop %v3095
        %v3112 = vtanh.pop %v3096
        %v3113 = vtanh.pop %v3097
        %v3114 = vtanh.pop %v3098
        %v3115 = vtanh.pop %v3099
        %v3116 = vtanh.pop %v3100
        %v3117 = vtanh.pop %v3101
        %v3118 = vtanh.pop %v3102
        %v3119 = vtanh.pop %v3103
        %v3120 = vtanh.pop %v3104
        %v3121 = vtanh.pop %v3105
        %v3122 = vtanh.pop %v3106
        %v3123 = vtanh.pop %v3107
        %v3124 = vtanh.pop %v3108
        %v3125 = vadd.f32 %v3109, 1.0
        %v3126 = vadd.f32 %v3110, 1.0
        %v3127 = vadd.f32 %v3111, 1.0
        %v3128 = vadd.f32 %v3112, 1.0
        %v3129 = vadd.f32 %v3113, 1.0
        %v3130 = vadd.f32 %v3114, 1.0
        %v3131 = vadd.f32 %v3115, 1.0
        %v3132 = vadd.f32 %v3116, 1.0
        %v3133 = vadd.f32 %v3117, 1.0
        %v3134 = vadd.f32 %v3118, 1.0
        %v3135 = vadd.f32 %v3119, 1.0
        %v3136 = vadd.f32 %v3120, 1.0
        %v3137 = vadd.f32 %v3121, 1.0
        %v3138 = vadd.f32 %v3122, 1.0
        %v3139 = vadd.f32 %v3123, 1.0
        %v3140 = vadd.f32 %v3124, 1.0
        %v3141 = vmul.f32 %v3125, 0.5
        %v3142 = vmul.f32 %v3126, 0.5
        %v3143 = vmul.f32 %v3127, 0.5
        %v3144 = vmul.f32 %v3128, 0.5
        %v3145 = vmul.f32 %v3129, 0.5
        %v3146 = vmul.f32 %v3130, 0.5
        %v3147 = vmul.f32 %v3131, 0.5
        %v3148 = vmul.f32 %v3132, 0.5
        %v3149 = vmul.f32 %v3133, 0.5
        %v3150 = vmul.f32 %v3134, 0.5
        %v3151 = vmul.f32 %v3135, 0.5
        %v3152 = vmul.f32 %v3136, 0.5
        %v3153 = vmul.f32 %v3137, 0.5
        %v3154 = vmul.f32 %v3138, 0.5
        %v3155 = vmul.f32 %v3139, 0.5
        %v3156 = vmul.f32 %v3140, 0.5
        %v3157 = vmul.f32 %v2829, %v3141
        %v3158 = vmul.f32 %v2857, %v3142
        %v3159 = vmul.f32 %v2885, %v3143
        %v3160 = vmul.f32 %v2913, %v3144
        %v3161 = vmul.f32 %v2941, %v3145
        %v3162 = vmul.f32 %v2969, %v3146
        %v3163 = vmul.f32 %v2997, %v3147
        %v3164 = vmul.f32 %v3025, %v3148
        %v3165 = vmul.f32 %v2831, %v3149
        %v3166 = vmul.f32 %v2859, %v3150
        %v3167 = vmul.f32 %v2887, %v3151
        %v3168 = vmul.f32 %v2915, %v3152
        %v3169 = vmul.f32 %v2943, %v3153
        %v3170 = vmul.f32 %v2971, %v3154
        %v3171 = vmul.f32 %v2999, %v3155
        %v3172 = vmul.f32 %v3027, %v3156
        %v3173 = vpack.c.bf16 %v3165, %v3157
        %v3174 = vpack.c.bf16 %v3166, %v3158
        %v3175 = vpack.c.bf16 %v3167, %v3159
        %v3176 = vpack.c.bf16 %v3168, %v3160
        %v3177 = vpack.c.bf16 %v3169, %v3161
        %v3178 = vpack.c.bf16 %v3170, %v3162
        %v3179 = vpack.c.bf16 %v3171, %v3163
        %v3180 = vpack.c.bf16 %v3172, %v3164
        %v3181 = vld [vmem:[#allocation3] sm:$0xff]
        %v3182 = vld [vmem:[#allocation3 + $0x8] sm:$0xff]
        %v3183 = vld [vmem:[#allocation3 + $0x10] sm:$0xff]
        %v3184 = vld [vmem:[#allocation3 + $0x18] sm:$0xff]
        %v3185 = vld [vmem:[#allocation3 + $0x20] sm:$0xff]
        %v3186 = vld [vmem:[#allocation3 + $0x28] sm:$0xff]
        %v3187 = vld [vmem:[#allocation3 + $0x30] sm:$0xff]
        %v3188 = vld [vmem:[#allocation3 + $0x38] sm:$0xff]
        %v3189 = vld [vmem:[#allocation3 + $0x40] sm:$0xff]
        %v3190 = vld [vmem:[#allocation3 + $0x48] sm:$0xff]
        %v3191 = vld [vmem:[#allocation3 + $0x50] sm:$0xff]
        %v3192 = vld [vmem:[#allocation3 + $0x58] sm:$0xff]
        %v3193 = vld [vmem:[#allocation3 + $0x60] sm:$0xff]
        %v3194 = vld [vmem:[#allocation3 + $0x68] sm:$0xff]
        %v3195 = vld [vmem:[#allocation3 + $0x70] sm:$0xff]
        %v3196 = vld [vmem:[#allocation3 + $0x78] sm:$0xff]
        %v3197 = vld [vmem:[#allocation3 + $0x80] sm:$0xff]
        %v3198 = vld [vmem:[#allocation3 + $0x88] sm:$0xff]
        %v3199 = vld [vmem:[#allocation3 + $0x90] sm:$0xff]
        %v3200 = vld [vmem:[#allocation3 + $0x98] sm:$0xff]
        %v3201 = vld [vmem:[#allocation3 + $0xa0] sm:$0xff]
        %v3202 = vld [vmem:[#allocation3 + $0xa8] sm:$0xff]
        %v3203 = vld [vmem:[#allocation3 + $0xb0] sm:$0xff]
        %v3204 = vld [vmem:[#allocation3 + $0xb8] sm:$0xff]
        %v3205 = vld [vmem:[#allocation3 + $0xc0] sm:$0xff]
        %v3206 = vld [vmem:[#allocation3 + $0xc8] sm:$0xff]
        %v3207 = vld [vmem:[#allocation3 + $0xd0] sm:$0xff]
        %v3208 = vld [vmem:[#allocation3 + $0xd8] sm:$0xff]
        %v3209 = vld [vmem:[#allocation3 + $0xe0] sm:$0xff]
        %v3210 = vld [vmem:[#allocation3 + $0xe8] sm:$0xff]
        %v3211 = vld [vmem:[#allocation3 + $0xf0] sm:$0xff]
        %v3212 = vld [vmem:[#allocation3 + $0xf8] sm:$0xff]
        %v3213 = vld [vmem:[#allocation3 + $0x100] sm:$0xff]
        %v3214 = vld [vmem:[#allocation3 + $0x108] sm:$0xff]
        %v3215 = vld [vmem:[#allocation3 + $0x110] sm:$0xff]
        %v3216 = vld [vmem:[#allocation3 + $0x118] sm:$0xff]
        %v3217 = vld [vmem:[#allocation3 + $0x120] sm:$0xff]
        %v3218 = vld [vmem:[#allocation3 + $0x128] sm:$0xff]
        %v3219 = vld [vmem:[#allocation3 + $0x130] sm:$0xff]
        %v3220 = vld [vmem:[#allocation3 + $0x138] sm:$0xff]
        %v3221 = vld [vmem:[#allocation3 + $0x140] sm:$0xff]
        %v3222 = vld [vmem:[#allocation3 + $0x148] sm:$0xff]
        %v3223 = vld [vmem:[#allocation3 + $0x150] sm:$0xff]
        %v3224 = vld [vmem:[#allocation3 + $0x158] sm:$0xff]
        %v3225 = vld [vmem:[#allocation3 + $0x160] sm:$0xff]
        %v3226 = vld [vmem:[#allocation3 + $0x168] sm:$0xff]
        %v3227 = vld [vmem:[#allocation3 + $0x170] sm:$0xff]
        %v3228 = vld [vmem:[#allocation3 + $0x178] sm:$0xff]
        %v3229 = vld [vmem:[#allocation3 + $0x180] sm:$0xff]
        %v3230 = vld [vmem:[#allocation3 + $0x188] sm:$0xff]
        %v3231 = vld [vmem:[#allocation3 + $0x190] sm:$0xff]
        %v3232 = vld [vmem:[#allocation3 + $0x198] sm:$0xff]
        %v3233 = vld [vmem:[#allocation3 + $0x1a0] sm:$0xff]
        %v3234 = vld [vmem:[#allocation3 + $0x1a8] sm:$0xff]
        %v3235 = vld [vmem:[#allocation3 + $0x1b0] sm:$0xff]
        %v3236 = vld [vmem:[#allocation3 + $0x1b8] sm:$0xff]
        %v3237 = vld [vmem:[#allocation3 + $0x1c0] sm:$0xff]
        %v3238 = vld [vmem:[#allocation3 + $0x1c8] sm:$0xff]
        %v3239 = vld [vmem:[#allocation3 + $0x1d0] sm:$0xff]
        %v3240 = vld [vmem:[#allocation3 + $0x1d8] sm:$0xff]
        %v3241 = vld [vmem:[#allocation3 + $0x1e0] sm:$0xff]
        %v3242 = vld [vmem:[#allocation3 + $0x1e8] sm:$0xff]
        %v3243 = vld [vmem:[#allocation3 + $0x1f0] sm:$0xff]
        %v3244 = vld [vmem:[#allocation3 + $0x1f8] sm:$0xff]
        %v3245 = vld [vmem:[#allocation3 + $0x200] sm:$0xff]
        %v3246 = vld [vmem:[#allocation3 + $0x208] sm:$0xff]
        %v3247 = vld [vmem:[#allocation3 + $0x210] sm:$0xff]
        %v3248 = vld [vmem:[#allocation3 + $0x218] sm:$0xff]
        %v3249 = vld [vmem:[#allocation3 + $0x220] sm:$0xff]
        %v3250 = vld [vmem:[#allocation3 + $0x228] sm:$0xff]
        %v3251 = vld [vmem:[#allocation3 + $0x230] sm:$0xff]
        %v3252 = vld [vmem:[#allocation3 + $0x238] sm:$0xff]
        %v3253 = vld [vmem:[#allocation3 + $0x240] sm:$0xff]
        %v3254 = vld [vmem:[#allocation3 + $0x248] sm:$0xff]
        %v3255 = vld [vmem:[#allocation3 + $0x250] sm:$0xff]
        %v3256 = vld [vmem:[#allocation3 + $0x258] sm:$0xff]
        %v3257 = vld [vmem:[#allocation3 + $0x260] sm:$0xff]
        %v3258 = vld [vmem:[#allocation3 + $0x268] sm:$0xff]
        %v3259 = vld [vmem:[#allocation3 + $0x270] sm:$0xff]
        %v3260 = vld [vmem:[#allocation3 + $0x278] sm:$0xff]
        %v3261 = vld [vmem:[#allocation3 + $0x280] sm:$0xff]
        %v3262 = vld [vmem:[#allocation3 + $0x288] sm:$0xff]
        %v3263 = vld [vmem:[#allocation3 + $0x290] sm:$0xff]
        %v3264 = vld [vmem:[#allocation3 + $0x298] sm:$0xff]
        %v3265 = vld [vmem:[#allocation3 + $0x2a0] sm:$0xff]
        %v3266 = vld [vmem:[#allocation3 + $0x2a8] sm:$0xff]
        %v3267 = vld [vmem:[#allocation3 + $0x2b0] sm:$0xff]
        %v3268 = vld [vmem:[#allocation3 + $0x2b8] sm:$0xff]
        %v3269 = vld [vmem:[#allocation3 + $0x2c0] sm:$0xff]
        %v3270 = vld [vmem:[#allocation3 + $0x2c8] sm:$0xff]
        %v3271 = vld [vmem:[#allocation3 + $0x2d0] sm:$0xff]
        %v3272 = vld [vmem:[#allocation3 + $0x2d8] sm:$0xff]
        %v3273 = vld [vmem:[#allocation3 + $0x2e0] sm:$0xff]
        %v3274 = vld [vmem:[#allocation3 + $0x2e8] sm:$0xff]
        %v3275 = vld [vmem:[#allocation3 + $0x2f0] sm:$0xff]
        %v3276 = vld [vmem:[#allocation3 + $0x2f8] sm:$0xff]
        %v3277 = vld [vmem:[#allocation3 + $0x300] sm:$0xff]
        %v3278 = vld [vmem:[#allocation3 + $0x308] sm:$0xff]
        %v3279 = vld [vmem:[#allocation3 + $0x310] sm:$0xff]
        %v3280 = vld [vmem:[#allocation3 + $0x318] sm:$0xff]
        %v3281 = vld [vmem:[#allocation3 + $0x320] sm:$0xff]
        %v3282 = vld [vmem:[#allocation3 + $0x328] sm:$0xff]
        %v3283 = vld [vmem:[#allocation3 + $0x330] sm:$0xff]
        %v3284 = vld [vmem:[#allocation3 + $0x338] sm:$0xff]
        %v3285 = vld [vmem:[#allocation3 + $0x340] sm:$0xff]
        %v3286 = vld [vmem:[#allocation3 + $0x348] sm:$0xff]
        %v3287 = vld [vmem:[#allocation3 + $0x350] sm:$0xff]
        %v3288 = vld [vmem:[#allocation3 + $0x358] sm:$0xff]
        %v3289 = vld [vmem:[#allocation3 + $0x360] sm:$0xff]
        %v3290 = vld [vmem:[#allocation3 + $0x368] sm:$0xff]
        %v3291 = vld [vmem:[#allocation3 + $0x370] sm:$0xff]
        %v3292 = vld [vmem:[#allocation3 + $0x378] sm:$0xff]
        %v3293 = vld [vmem:[#allocation3 + $0x380] sm:$0xff]
        %v3294 = vld [vmem:[#allocation3 + $0x388] sm:$0xff]
        %v3295 = vld [vmem:[#allocation3 + $0x390] sm:$0xff]
        %v3296 = vld [vmem:[#allocation3 + $0x398] sm:$0xff]
        %v3297 = vld [vmem:[#allocation3 + $0x3a0] sm:$0xff]
        %v3298 = vld [vmem:[#allocation3 + $0x3a8] sm:$0xff]
        %v3299 = vld [vmem:[#allocation3 + $0x3b0] sm:$0xff]
        %v3300 = vld [vmem:[#allocation3 + $0x3b8] sm:$0xff]
        %v3301 = vld [vmem:[#allocation3 + $0x3c0] sm:$0xff]
        %v3302 = vld [vmem:[#allocation3 + $0x3c8] sm:$0xff]
        %v3303 = vld [vmem:[#allocation3 + $0x3d0] sm:$0xff]
        %v3304 = vld [vmem:[#allocation3 + $0x3d8] sm:$0xff]
        %v3305 = vld [vmem:[#allocation3 + $0x3e0] sm:$0xff]
        %v3306 = vld [vmem:[#allocation3 + $0x3e8] sm:$0xff]
        %v3307 = vld [vmem:[#allocation3 + $0x3f0] sm:$0xff]
        %v3308 = vld [vmem:[#allocation3 + $0x3f8] sm:$0xff]
        %v3309 = vld [vmem:[%s15] sm:$0x3]
        %v3311 = vperm.slane %v3309, 0
        %v3312 = vperm.slane %v3309, 1
        %v3443 = vunpack.c.l.b16 %v3181
        %v3444 = vunpack.c.h.b16 %v3181
        %v3445 = vunpack.c.l.b16 %v3182
        %v3446 = vunpack.c.h.b16 %v3182
        %v3447 = vunpack.c.l.b16 %v3183
        %v3448 = vunpack.c.h.b16 %v3183
        %v3449 = vunpack.c.l.b16 %v3184
        %v3450 = vunpack.c.h.b16 %v3184
        %v3451 = vunpack.c.l.b16 %v3185
        %v3452 = vunpack.c.h.b16 %v3185
        %v3453 = vunpack.c.l.b16 %v3186
        %v3454 = vunpack.c.h.b16 %v3186
        %v3455 = vunpack.c.l.b16 %v3187
        %v3456 = vunpack.c.h.b16 %v3187
        %v3457 = vunpack.c.l.b16 %v3188
        %v3458 = vunpack.c.h.b16 %v3188
        %v3459 = vunpack.c.l.b16 %v3189
        %v3460 = vunpack.c.h.b16 %v3189
        %v3461 = vunpack.c.l.b16 %v3190
        %v3462 = vunpack.c.h.b16 %v3190
        %v3463 = vunpack.c.l.b16 %v3191
        %v3464 = vunpack.c.h.b16 %v3191
        %v3465 = vunpack.c.l.b16 %v3192
        %v3466 = vunpack.c.h.b16 %v3192
        %v3467 = vunpack.c.l.b16 %v3193
        %v3468 = vunpack.c.h.b16 %v3193
        %v3469 = vunpack.c.l.b16 %v3194
        %v3470 = vunpack.c.h.b16 %v3194
        %v3471 = vunpack.c.l.b16 %v3195
        %v3472 = vunpack.c.h.b16 %v3195
        %v3473 = vunpack.c.l.b16 %v3196
        %v3474 = vunpack.c.h.b16 %v3196
        %v3475 = vunpack.c.l.b16 %v3197
        %v3476 = vunpack.c.h.b16 %v3197
        %v3477 = vunpack.c.l.b16 %v3198
        %v3478 = vunpack.c.h.b16 %v3198
        %v3479 = vunpack.c.l.b16 %v3199
        %v3480 = vunpack.c.h.b16 %v3199
        %v3481 = vunpack.c.l.b16 %v3200
        %v3482 = vunpack.c.h.b16 %v3200
        %v3483 = vunpack.c.l.b16 %v3201
        %v3484 = vunpack.c.h.b16 %v3201
        %v3485 = vunpack.c.l.b16 %v3202
        %v3486 = vunpack.c.h.b16 %v3202
        %v3487 = vunpack.c.l.b16 %v3203
        %v3488 = vunpack.c.h.b16 %v3203
        %v3489 = vunpack.c.l.b16 %v3204
        %v3490 = vunpack.c.h.b16 %v3204
        %v3491 = vunpack.c.l.b16 %v3205
        %v3492 = vunpack.c.h.b16 %v3205
        %v3493 = vunpack.c.l.b16 %v3206
        %v3494 = vunpack.c.h.b16 %v3206
        %v3495 = vunpack.c.l.b16 %v3207
        %v3496 = vunpack.c.h.b16 %v3207
        %v3497 = vunpack.c.l.b16 %v3208
        %v3498 = vunpack.c.h.b16 %v3208
        %v3499 = vunpack.c.l.b16 %v3209
        %v3500 = vunpack.c.h.b16 %v3209
        %v3501 = vunpack.c.l.b16 %v3210
        %v3502 = vunpack.c.h.b16 %v3210
        %v3503 = vunpack.c.l.b16 %v3211
        %v3504 = vunpack.c.h.b16 %v3211
        %v3505 = vunpack.c.l.b16 %v3212
        %v3506 = vunpack.c.h.b16 %v3212
        %v3507 = vunpack.c.l.b16 %v3213
        %v3508 = vunpack.c.h.b16 %v3213
        %v3509 = vunpack.c.l.b16 %v3214
        %v3510 = vunpack.c.h.b16 %v3214
        %v3511 = vunpack.c.l.b16 %v3215
        %v3512 = vunpack.c.h.b16 %v3215
        %v3513 = vunpack.c.l.b16 %v3216
        %v3514 = vunpack.c.h.b16 %v3216
        %v3515 = vunpack.c.l.b16 %v3217
        %v3516 = vunpack.c.h.b16 %v3217
        %v3517 = vunpack.c.l.b16 %v3218
        %v3518 = vunpack.c.h.b16 %v3218
        %v3519 = vunpack.c.l.b16 %v3219
        %v3520 = vunpack.c.h.b16 %v3219
        %v3521 = vunpack.c.l.b16 %v3220
        %v3522 = vunpack.c.h.b16 %v3220
        %v3523 = vunpack.c.l.b16 %v3221
        %v3524 = vunpack.c.h.b16 %v3221
        %v3525 = vunpack.c.l.b16 %v3222
        %v3526 = vunpack.c.h.b16 %v3222
        %v3527 = vunpack.c.l.b16 %v3223
        %v3528 = vunpack.c.h.b16 %v3223
        %v3529 = vunpack.c.l.b16 %v3224
        %v3530 = vunpack.c.h.b16 %v3224
        %v3531 = vunpack.c.l.b16 %v3225
        %v3532 = vunpack.c.h.b16 %v3225
        %v3533 = vunpack.c.l.b16 %v3226
        %v3534 = vunpack.c.h.b16 %v3226
        %v3535 = vunpack.c.l.b16 %v3227
        %v3536 = vunpack.c.h.b16 %v3227
        %v3537 = vunpack.c.l.b16 %v3228
        %v3538 = vunpack.c.h.b16 %v3228
        %v3539 = vunpack.c.l.b16 %v3229
        %v3540 = vunpack.c.h.b16 %v3229
        %v3541 = vunpack.c.l.b16 %v3230
        %v3542 = vunpack.c.h.b16 %v3230
        %v3543 = vunpack.c.l.b16 %v3231
        %v3544 = vunpack.c.h.b16 %v3231
        %v3545 = vunpack.c.l.b16 %v3232
        %v3546 = vunpack.c.h.b16 %v3232
        %v3547 = vunpack.c.l.b16 %v3233
        %v3548 = vunpack.c.h.b16 %v3233
        %v3549 = vunpack.c.l.b16 %v3234
        %v3550 = vunpack.c.h.b16 %v3234
        %v3551 = vunpack.c.l.b16 %v3235
        %v3552 = vunpack.c.h.b16 %v3235
        %v3553 = vunpack.c.l.b16 %v3236
        %v3554 = vunpack.c.h.b16 %v3236
        %v3555 = vunpack.c.l.b16 %v3237
        %v3556 = vunpack.c.h.b16 %v3237
        %v3557 = vunpack.c.l.b16 %v3238
        %v3558 = vunpack.c.h.b16 %v3238
        %v3559 = vunpack.c.l.b16 %v3239
        %v3560 = vunpack.c.h.b16 %v3239
        %v3561 = vunpack.c.l.b16 %v3240
        %v3562 = vunpack.c.h.b16 %v3240
        %v3563 = vunpack.c.l.b16 %v3241
        %v3564 = vunpack.c.h.b16 %v3241
        %v3565 = vunpack.c.l.b16 %v3242
        %v3566 = vunpack.c.h.b16 %v3242
        %v3567 = vunpack.c.l.b16 %v3243
        %v3568 = vunpack.c.h.b16 %v3243
        %v3569 = vunpack.c.l.b16 %v3244
        %v3570 = vunpack.c.h.b16 %v3244
        %v3571 = vunpack.c.l.b16 %v3245
        %v3572 = vunpack.c.h.b16 %v3245
        %v3573 = vunpack.c.l.b16 %v3246
        %v3574 = vunpack.c.h.b16 %v3246
        %v3575 = vunpack.c.l.b16 %v3247
        %v3576 = vunpack.c.h.b16 %v3247
        %v3577 = vunpack.c.l.b16 %v3248
        %v3578 = vunpack.c.h.b16 %v3248
        %v3579 = vunpack.c.l.b16 %v3249
        %v3580 = vunpack.c.h.b16 %v3249
        %v3581 = vunpack.c.l.b16 %v3250
        %v3582 = vunpack.c.h.b16 %v3250
        %v3583 = vunpack.c.l.b16 %v3251
        %v3584 = vunpack.c.h.b16 %v3251
        %v3585 = vunpack.c.l.b16 %v3252
        %v3586 = vunpack.c.h.b16 %v3252
        %v3587 = vunpack.c.l.b16 %v3253
        %v3588 = vunpack.c.h.b16 %v3253
        %v3589 = vunpack.c.l.b16 %v3254
        %v3590 = vunpack.c.h.b16 %v3254
        %v3591 = vunpack.c.l.b16 %v3255
        %v3592 = vunpack.c.h.b16 %v3255
        %v3593 = vunpack.c.l.b16 %v3256
        %v3594 = vunpack.c.h.b16 %v3256
        %v3595 = vunpack.c.l.b16 %v3257
        %v3596 = vunpack.c.h.b16 %v3257
        %v3597 = vunpack.c.l.b16 %v3258
        %v3598 = vunpack.c.h.b16 %v3258
        %v3599 = vunpack.c.l.b16 %v3259
        %v3600 = vunpack.c.h.b16 %v3259
        %v3601 = vunpack.c.l.b16 %v3260
        %v3602 = vunpack.c.h.b16 %v3260
        %v3603 = vunpack.c.l.b16 %v3261
        %v3604 = vunpack.c.h.b16 %v3261
        %v3605 = vunpack.c.l.b16 %v3262
        %v3606 = vunpack.c.h.b16 %v3262
        %v3607 = vunpack.c.l.b16 %v3263
        %v3608 = vunpack.c.h.b16 %v3263
        %v3609 = vunpack.c.l.b16 %v3264
        %v3610 = vunpack.c.h.b16 %v3264
        %v3611 = vunpack.c.l.b16 %v3265
        %v3612 = vunpack.c.h.b16 %v3265
        %v3613 = vunpack.c.l.b16 %v3266
        %v3614 = vunpack.c.h.b16 %v3266
        %v3615 = vunpack.c.l.b16 %v3267
        %v3616 = vunpack.c.h.b16 %v3267
        %v3617 = vunpack.c.l.b16 %v3268
        %v3618 = vunpack.c.h.b16 %v3268
        %v3619 = vunpack.c.l.b16 %v3269
        %v3620 = vunpack.c.h.b16 %v3269
        %v3621 = vunpack.c.l.b16 %v3270
        %v3622 = vunpack.c.h.b16 %v3270
        %v3623 = vunpack.c.l.b16 %v3271
        %v3624 = vunpack.c.h.b16 %v3271
        %v3625 = vunpack.c.l.b16 %v3272
        %v3626 = vunpack.c.h.b16 %v3272
        %v3627 = vunpack.c.l.b16 %v3273
        %v3628 = vunpack.c.h.b16 %v3273
        %v3629 = vunpack.c.l.b16 %v3274
        %v3630 = vunpack.c.h.b16 %v3274
        %v3631 = vunpack.c.l.b16 %v3275
        %v3632 = vunpack.c.h.b16 %v3275
        %v3633 = vunpack.c.l.b16 %v3276
        %v3634 = vunpack.c.h.b16 %v3276
        %v3635 = vunpack.c.l.b16 %v3277
        %v3636 = vunpack.c.h.b16 %v3277
        %v3637 = vunpack.c.l.b16 %v3278
        %v3638 = vunpack.c.h.b16 %v3278
        %v3639 = vunpack.c.l.b16 %v3279
        %v3640 = vunpack.c.h.b16 %v3279
        %v3641 = vunpack.c.l.b16 %v3280
        %v3642 = vunpack.c.h.b16 %v3280
        %v3643 = vunpack.c.l.b16 %v3281
        %v3644 = vunpack.c.h.b16 %v3281
        %v3645 = vunpack.c.l.b16 %v3282
        %v3646 = vunpack.c.h.b16 %v3282
        %v3647 = vunpack.c.l.b16 %v3283
        %v3648 = vunpack.c.h.b16 %v3283
        %v3649 = vunpack.c.l.b16 %v3284
        %v3650 = vunpack.c.h.b16 %v3284
        %v3651 = vunpack.c.l.b16 %v3285
        %v3652 = vunpack.c.h.b16 %v3285
        %v3653 = vunpack.c.l.b16 %v3286
        %v3654 = vunpack.c.h.b16 %v3286
        %v3655 = vunpack.c.l.b16 %v3287
        %v3656 = vunpack.c.h.b16 %v3287
        %v3657 = vunpack.c.l.b16 %v3288
        %v3658 = vunpack.c.h.b16 %v3288
        %v3659 = vunpack.c.l.b16 %v3289
        %v3660 = vunpack.c.h.b16 %v3289
        %v3661 = vunpack.c.l.b16 %v3290
        %v3662 = vunpack.c.h.b16 %v3290
        %v3663 = vunpack.c.l.b16 %v3291
        %v3664 = vunpack.c.h.b16 %v3291
        %v3665 = vunpack.c.l.b16 %v3292
        %v3666 = vunpack.c.h.b16 %v3292
        %v3667 = vunpack.c.l.b16 %v3293
        %v3668 = vunpack.c.h.b16 %v3293
        %v3669 = vunpack.c.l.b16 %v3294
        %v3670 = vunpack.c.h.b16 %v3294
        %v3671 = vunpack.c.l.b16 %v3295
        %v3672 = vunpack.c.h.b16 %v3295
        %v3673 = vunpack.c.l.b16 %v3296
        %v3674 = vunpack.c.h.b16 %v3296
        %v3675 = vunpack.c.l.b16 %v3297
        %v3676 = vunpack.c.h.b16 %v3297
        %v3677 = vunpack.c.l.b16 %v3298
        %v3678 = vunpack.c.h.b16 %v3298
        %v3679 = vunpack.c.l.b16 %v3299
        %v3680 = vunpack.c.h.b16 %v3299
        %v3681 = vunpack.c.l.b16 %v3300
        %v3682 = vunpack.c.h.b16 %v3300
        %v3683 = vunpack.c.l.b16 %v3301
        %v3684 = vunpack.c.h.b16 %v3301
        %v3685 = vunpack.c.l.b16 %v3302
        %v3686 = vunpack.c.h.b16 %v3302
        %v3687 = vunpack.c.l.b16 %v3303
        %v3688 = vunpack.c.h.b16 %v3303
        %v3689 = vunpack.c.l.b16 %v3304
        %v3690 = vunpack.c.h.b16 %v3304
        %v3691 = vunpack.c.l.b16 %v3305
        %v3692 = vunpack.c.h.b16 %v3305
        %v3693 = vunpack.c.l.b16 %v3306
        %v3694 = vunpack.c.h.b16 %v3306
        %v3695 = vunpack.c.l.b16 %v3307
        %v3696 = vunpack.c.h.b16 %v3307
        %v3697 = vunpack.c.l.b16 %v3308
        %v3698 = vunpack.c.h.b16 %v3308
        %v3699 = vpack.c.b16 %v3445, %v3443
        %v3700 = vpack.c.b16 %v3446, %v3444
        %v3701 = vpack.c.b16 %v3449, %v3447
        %v3702 = vpack.c.b16 %v3450, %v3448
        %v3703 = vpack.c.b16 %v3453, %v3451
        %v3704 = vpack.c.b16 %v3454, %v3452
        %v3705 = vpack.c.b16 %v3457, %v3455
        %v3706 = vpack.c.b16 %v3458, %v3456
        %v3707 = vpack.c.b16 %v3461, %v3459
        %v3708 = vpack.c.b16 %v3462, %v3460
        %v3709 = vpack.c.b16 %v3465, %v3463
        %v3710 = vpack.c.b16 %v3466, %v3464
        %v3711 = vpack.c.b16 %v3469, %v3467
        %v3712 = vpack.c.b16 %v3470, %v3468
        %v3713 = vpack.c.b16 %v3473, %v3471
        %v3714 = vpack.c.b16 %v3474, %v3472
        %v3715 = vpack.c.b16 %v3477, %v3475
        %v3716 = vpack.c.b16 %v3478, %v3476
        %v3717 = vpack.c.b16 %v3481, %v3479
        %v3718 = vpack.c.b16 %v3482, %v3480
        %v3719 = vpack.c.b16 %v3485, %v3483
        %v3720 = vpack.c.b16 %v3486, %v3484
        %v3721 = vpack.c.b16 %v3489, %v3487
        %v3722 = vpack.c.b16 %v3490, %v3488
        %v3723 = vpack.c.b16 %v3493, %v3491
        %v3724 = vpack.c.b16 %v3494, %v3492
        %v3725 = vpack.c.b16 %v3497, %v3495
        %v3726 = vpack.c.b16 %v3498, %v3496
        %v3727 = vpack.c.b16 %v3501, %v3499
        %v3728 = vpack.c.b16 %v3502, %v3500
        %v3729 = vpack.c.b16 %v3505, %v3503
        %v3730 = vpack.c.b16 %v3506, %v3504
        %v3731 = vpack.c.b16 %v3509, %v3507
        %v3732 = vpack.c.b16 %v3510, %v3508
        %v3733 = vpack.c.b16 %v3513, %v3511
        %v3734 = vpack.c.b16 %v3514, %v3512
        %v3735 = vpack.c.b16 %v3517, %v3515
        %v3736 = vpack.c.b16 %v3518, %v3516
        %v3737 = vpack.c.b16 %v3521, %v3519
        %v3738 = vpack.c.b16 %v3522, %v3520
        %v3739 = vpack.c.b16 %v3525, %v3523
        %v3740 = vpack.c.b16 %v3526, %v3524
        %v3741 = vpack.c.b16 %v3529, %v3527
        %v3742 = vpack.c.b16 %v3530, %v3528
        %v3743 = vpack.c.b16 %v3533, %v3531
        %v3744 = vpack.c.b16 %v3534, %v3532
        %v3745 = vpack.c.b16 %v3537, %v3535
        %v3746 = vpack.c.b16 %v3538, %v3536
        %v3747 = vpack.c.b16 %v3541, %v3539
        %v3748 = vpack.c.b16 %v3542, %v3540
        %v3749 = vpack.c.b16 %v3545, %v3543
        %v3750 = vpack.c.b16 %v3546, %v3544
        %v3751 = vpack.c.b16 %v3549, %v3547
        %v3752 = vpack.c.b16 %v3550, %v3548
        %v3753 = vpack.c.b16 %v3553, %v3551
        %v3754 = vpack.c.b16 %v3554, %v3552
        %v3755 = vpack.c.b16 %v3557, %v3555
        %v3756 = vpack.c.b16 %v3558, %v3556
        %v3757 = vpack.c.b16 %v3561, %v3559
        %v3758 = vpack.c.b16 %v3562, %v3560
        %v3759 = vpack.c.b16 %v3565, %v3563
        %v3760 = vpack.c.b16 %v3566, %v3564
        %v3761 = vpack.c.b16 %v3569, %v3567
        %v3762 = vpack.c.b16 %v3570, %v3568
        %v3763 = vpack.c.b16 %v3573, %v3571
        %v3764 = vpack.c.b16 %v3574, %v3572
        %v3765 = vpack.c.b16 %v3577, %v3575
        %v3766 = vpack.c.b16 %v3578, %v3576
        %v3767 = vpack.c.b16 %v3581, %v3579
        %v3768 = vpack.c.b16 %v3582, %v3580
        %v3769 = vpack.c.b16 %v3585, %v3583
        %v3770 = vpack.c.b16 %v3586, %v3584
        %v3771 = vpack.c.b16 %v3589, %v3587
        %v3772 = vpack.c.b16 %v3590, %v3588
        %v3773 = vpack.c.b16 %v3593, %v3591
        %v3774 = vpack.c.b16 %v3594, %v3592
        %v3775 = vpack.c.b16 %v3597, %v3595
        %v3776 = vpack.c.b16 %v3598, %v3596
        %v3777 = vpack.c.b16 %v3601, %v3599
        %v3778 = vpack.c.b16 %v3602, %v3600
        %v3779 = vpack.c.b16 %v3605, %v3603
        %v3780 = vpack.c.b16 %v3606, %v3604
        %v3781 = vpack.c.b16 %v3609, %v3607
        %v3782 = vpack.c.b16 %v3610, %v3608
        %v3783 = vpack.c.b16 %v3613, %v3611
        %v3784 = vpack.c.b16 %v3614, %v3612
        %v3785 = vpack.c.b16 %v3617, %v3615
        %v3786 = vpack.c.b16 %v3618, %v3616
        %v3787 = vpack.c.b16 %v3621, %v3619
        %v3788 = vpack.c.b16 %v3622, %v3620
        %v3789 = vpack.c.b16 %v3625, %v3623
        %v3790 = vpack.c.b16 %v3626, %v3624
        %v3791 = vpack.c.b16 %v3629, %v3627
        %v3792 = vpack.c.b16 %v3630, %v3628
        %v3793 = vpack.c.b16 %v3633, %v3631
        %v3794 = vpack.c.b16 %v3634, %v3632
        %v3795 = vpack.c.b16 %v3637, %v3635
        %v3796 = vpack.c.b16 %v3638, %v3636
        %v3797 = vpack.c.b16 %v3641, %v3639
        %v3798 = vpack.c.b16 %v3642, %v3640
        %v3799 = vpack.c.b16 %v3645, %v3643
        %v3800 = vpack.c.b16 %v3646, %v3644
        %v3801 = vpack.c.b16 %v3649, %v3647
        %v3802 = vpack.c.b16 %v3650, %v3648
        %v3803 = vpack.c.b16 %v3653, %v3651
        %v3804 = vpack.c.b16 %v3654, %v3652
        %v3805 = vpack.c.b16 %v3657, %v3655
        %v3806 = vpack.c.b16 %v3658, %v3656
        %v3807 = vpack.c.b16 %v3661, %v3659
        %v3808 = vpack.c.b16 %v3662, %v3660
        %v3809 = vpack.c.b16 %v3665, %v3663
        %v3810 = vpack.c.b16 %v3666, %v3664
        %v3811 = vpack.c.b16 %v3669, %v3667
        %v3812 = vpack.c.b16 %v3670, %v3668
        %v3813 = vpack.c.b16 %v3673, %v3671
        %v3814 = vpack.c.b16 %v3674, %v3672
        %v3815 = vpack.c.b16 %v3677, %v3675
        %v3816 = vpack.c.b16 %v3678, %v3676
        %v3817 = vpack.c.b16 %v3681, %v3679
        %v3818 = vpack.c.b16 %v3682, %v3680
        %v3819 = vpack.c.b16 %v3685, %v3683
        %v3820 = vpack.c.b16 %v3686, %v3684
        %v3821 = vpack.c.b16 %v3689, %v3687
        %v3822 = vpack.c.b16 %v3690, %v3688
        %v3823 = vpack.c.b16 %v3693, %v3691
        %v3824 = vpack.c.b16 %v3694, %v3692
        %v3825 = vpack.c.b16 %v3697, %v3695
        %v3826 = vpack.c.b16 %v3698, %v3696
        %3955 = vmatpush.bf16.msra.mxu0 %v3713
        %3956 = vmatpush.bf16.msra.mxu0 %v3711
        %3957 = vmatpush.bf16.msra.mxu0 %v3709
        %3958 = vmatpush.bf16.msra.mxu0 %v3707
        %3959 = vmatpush.bf16.msra.mxu0 %v3705
        %3960 = vmatpush.bf16.msra.mxu0 %v3703
        %3961 = vmatpush.bf16.msra.mxu0 %v3701
        %3962 = vmatpush.bf16.msra.mxu0 %v3699
        %3963 = vmatmul.bf16.gmra.mxu0 %v3173
        %v3964 = vpop.f32.mrf.mxu0
        %v3965 = vadd.f32 %v3311, %v3964
        %v3966 = vpop.f32.mrf.mxu0
        %v3967 = vadd.f32 %v3311, %v3966
        %3968 = vdwg.mxu0
        %3969 = vmatpush.bf16.msra.mxu0 %v3729
        %3970 = vmatpush.bf16.msra.mxu0 %v3727
        %3971 = vmatpush.bf16.msra.mxu0 %v3725
        %3972 = vmatpush.bf16.msra.mxu0 %v3723
        %3973 = vmatpush.bf16.msra.mxu0 %v3721
        %3974 = vmatpush.bf16.msra.mxu0 %v3719
        %3975 = vmatpush.bf16.msra.mxu0 %v3717
        %3976 = vmatpush.bf16.msra.mxu0 %v3715
        %3977 = vmatmul.bf16.gmra.mxu0 %v3174
        %v3978 = vpop.f32.mrf.mxu0
        %v3979 = vadd.f32 %v3965, %v3978
        %v3980 = vpop.f32.mrf.mxu0
        %v3981 = vadd.f32 %v3967, %v3980
        %3982 = vdwg.mxu0
        %3983 = vmatpush.bf16.msra.mxu0 %v3745
        %3984 = vmatpush.bf16.msra.mxu0 %v3743
        %3985 = vmatpush.bf16.msra.mxu0 %v3741
        %3986 = vmatpush.bf16.msra.mxu0 %v3739
        %3987 = vmatpush.bf16.msra.mxu0 %v3737
        %3988 = vmatpush.bf16.msra.mxu0 %v3735
        %3989 = vmatpush.bf16.msra.mxu0 %v3733
        %3990 = vmatpush.bf16.msra.mxu0 %v3731
        %3991 = vmatmul.bf16.gmra.mxu0 %v3175
        %v3992 = vpop.f32.mrf.mxu0
        %v3993 = vadd.f32 %v3979, %v3992
        %v3994 = vpop.f32.mrf.mxu0
        %v3995 = vadd.f32 %v3981, %v3994
        %3996 = vdwg.mxu0
        %3997 = vmatpush.bf16.msra.mxu0 %v3761
        %3998 = vmatpush.bf16.msra.mxu0 %v3759
        %3999 = vmatpush.bf16.msra.mxu0 %v3757
        %4000 = vmatpush.bf16.msra.mxu0 %v3755
        %4001 = vmatpush.bf16.msra.mxu0 %v3753
        %4002 = vmatpush.bf16.msra.mxu0 %v3751
        %4003 = vmatpush.bf16.msra.mxu0 %v3749
        %4004 = vmatpush.bf16.msra.mxu0 %v3747
        %4005 = vmatmul.bf16.gmra.mxu0 %v3176
        %v4006 = vpop.f32.mrf.mxu0
        %v4007 = vadd.f32 %v3993, %v4006
        %v4008 = vpop.f32.mrf.mxu0
        %v4009 = vadd.f32 %v3995, %v4008
        %4010 = vdwg.mxu0
        %4011 = vmatpush.bf16.msra.mxu0 %v3777
        %4012 = vmatpush.bf16.msra.mxu0 %v3775
        %4013 = vmatpush.bf16.msra.mxu0 %v3773
        %4014 = vmatpush.bf16.msra.mxu0 %v3771
        %4015 = vmatpush.bf16.msra.mxu0 %v3769
        %4016 = vmatpush.bf16.msra.mxu0 %v3767
        %4017 = vmatpush.bf16.msra.mxu0 %v3765
        %4018 = vmatpush.bf16.msra.mxu0 %v3763
        %4019 = vmatmul.bf16.gmra.mxu0 %v3177
        %v4020 = vpop.f32.mrf.mxu0
        %v4021 = vadd.f32 %v4007, %v4020
        %v4022 = vpop.f32.mrf.mxu0
        %v4023 = vadd.f32 %v4009, %v4022
        %4024 = vdwg.mxu0
        %4025 = vmatpush.bf16.msra.mxu0 %v3793
        %4026 = vmatpush.bf16.msra.mxu0 %v3791
        %4027 = vmatpush.bf16.msra.mxu0 %v3789
        %4028 = vmatpush.bf16.msra.mxu0 %v3787
        %4029 = vmatpush.bf16.msra.mxu0 %v3785
        %4030 = vmatpush.bf16.msra.mxu0 %v3783
        %4031 = vmatpush.bf16.msra.mxu0 %v3781
        %4032 = vmatpush.bf16.msra.mxu0 %v3779
        %4033 = vmatmul.bf16.gmra.mxu0 %v3178
        %v4034 = vpop.f32.mrf.mxu0
        %v4035 = vadd.f32 %v4021, %v4034
        %v4036 = vpop.f32.mrf.mxu0
        %v4037 = vadd.f32 %v4023, %v4036
        %4038 = vdwg.mxu0
        %4039 = vmatpush.bf16.msra.mxu0 %v3809
        %4040 = vmatpush.bf16.msra.mxu0 %v3807
        %4041 = vmatpush.bf16.msra.mxu0 %v3805
        %4042 = vmatpush.bf16.msra.mxu0 %v3803
        %4043 = vmatpush.bf16.msra.mxu0 %v3801
        %4044 = vmatpush.bf16.msra.mxu0 %v3799
        %4045 = vmatpush.bf16.msra.mxu0 %v3797
        %4046 = vmatpush.bf16.msra.mxu0 %v3795
        %4047 = vmatmul.bf16.gmra.mxu0 %v3179
        %v4048 = vpop.f32.mrf.mxu0
        %v4049 = vadd.f32 %v4035, %v4048
        %v4050 = vpop.f32.mrf.mxu0
        %v4051 = vadd.f32 %v4037, %v4050
        %4052 = vdwg.mxu0
        %4053 = vmatpush.bf16.msra.mxu0 %v3825
        %4054 = vmatpush.bf16.msra.mxu0 %v3823
        %4055 = vmatpush.bf16.msra.mxu0 %v3821
        %4056 = vmatpush.bf16.msra.mxu0 %v3819
        %4057 = vmatpush.bf16.msra.mxu0 %v3817
        %4058 = vmatpush.bf16.msra.mxu0 %v3815
        %4059 = vmatpush.bf16.msra.mxu0 %v3813
        %4060 = vmatpush.bf16.msra.mxu0 %v3811
        %4061 = vmatmul.bf16.gmra.mxu0 %v3180
        %v4062 = vpop.f32.mrf.mxu0
        %v4063 = vadd.f32 %v4049, %v4062
        %v4064 = vpop.f32.mrf.mxu0
        %v4065 = vadd.f32 %v4051, %v4064
        %4066 = vdwg.mxu0
        %4067 = vmatpush.bf16.msra.mxu0 %v3714
        %4068 = vmatpush.bf16.msra.mxu0 %v3712
        %4069 = vmatpush.bf16.msra.mxu0 %v3710
        %4070 = vmatpush.bf16.msra.mxu0 %v3708
        %4071 = vmatpush.bf16.msra.mxu0 %v3706
        %4072 = vmatpush.bf16.msra.mxu0 %v3704
        %4073 = vmatpush.bf16.msra.mxu0 %v3702
        %4074 = vmatpush.bf16.msra.mxu0 %v3700
        %4075 = vmatmul.bf16.gmra.mxu0 %v3173
        %v4076 = vpop.f32.mrf.mxu0
        %v4077 = vadd.f32 %v3312, %v4076
        %v4078 = vpop.f32.mrf.mxu0
        %v4079 = vadd.f32 %v3312, %v4078
        %4080 = vdwg.mxu0
        %4081 = vmatpush.bf16.msra.mxu0 %v3730
        %4082 = vmatpush.bf16.msra.mxu0 %v3728
        %4083 = vmatpush.bf16.msra.mxu0 %v3726
        %4084 = vmatpush.bf16.msra.mxu0 %v3724
        %4085 = vmatpush.bf16.msra.mxu0 %v3722
        %4086 = vmatpush.bf16.msra.mxu0 %v3720
        %4087 = vmatpush.bf16.msra.mxu0 %v3718
        %4088 = vmatpush.bf16.msra.mxu0 %v3716
        %4089 = vmatmul.bf16.gmra.mxu0 %v3174
        %v4090 = vpop.f32.mrf.mxu0
        %v4091 = vadd.f32 %v4077, %v4090
        %v4092 = vpop.f32.mrf.mxu0
        %v4093 = vadd.f32 %v4079, %v4092
        %4094 = vdwg.mxu0
        %4095 = vmatpush.bf16.msra.mxu0 %v3746
        %4096 = vmatpush.bf16.msra.mxu0 %v3744
        %4097 = vmatpush.bf16.msra.mxu0 %v3742
        %4098 = vmatpush.bf16.msra.mxu0 %v3740
        %4099 = vmatpush.bf16.msra.mxu0 %v3738
        %4100 = vmatpush.bf16.msra.mxu0 %v3736
        %4101 = vmatpush.bf16.msra.mxu0 %v3734
        %4102 = vmatpush.bf16.msra.mxu0 %v3732
        %4103 = vmatmul.bf16.gmra.mxu0 %v3175
        %v4104 = vpop.f32.mrf.mxu0
        %v4105 = vadd.f32 %v4091, %v4104
        %v4106 = vpop.f32.mrf.mxu0
        %v4107 = vadd.f32 %v4093, %v4106
        %4108 = vdwg.mxu0
        %4109 = vmatpush.bf16.msra.mxu0 %v3762
        %4110 = vmatpush.bf16.msra.mxu0 %v3760
        %4111 = vmatpush.bf16.msra.mxu0 %v3758
        %4112 = vmatpush.bf16.msra.mxu0 %v3756
        %4113 = vmatpush.bf16.msra.mxu0 %v3754
        %4114 = vmatpush.bf16.msra.mxu0 %v3752
        %4115 = vmatpush.bf16.msra.mxu0 %v3750
        %4116 = vmatpush.bf16.msra.mxu0 %v3748
        %4117 = vmatmul.bf16.gmra.mxu0 %v3176
        %v4118 = vpop.f32.mrf.mxu0
        %v4119 = vadd.f32 %v4105, %v4118
        %v4120 = vpop.f32.mrf.mxu0
        %v4121 = vadd.f32 %v4107, %v4120
        %4122 = vdwg.mxu0
        %4123 = vmatpush.bf16.msra.mxu0 %v3778
        %4124 = vmatpush.bf16.msra.mxu0 %v3776
        %4125 = vmatpush.bf16.msra.mxu0 %v3774
        %4126 = vmatpush.bf16.msra.mxu0 %v3772
        %4127 = vmatpush.bf16.msra.mxu0 %v3770
        %4128 = vmatpush.bf16.msra.mxu0 %v3768
        %4129 = vmatpush.bf16.msra.mxu0 %v3766
        %4130 = vmatpush.bf16.msra.mxu0 %v3764
        %4131 = vmatmul.bf16.gmra.mxu0 %v3177
        %v4132 = vpop.f32.mrf.mxu0
        %v4133 = vadd.f32 %v4119, %v4132
        %v4134 = vpop.f32.mrf.mxu0
        %v4135 = vadd.f32 %v4121, %v4134
        %4136 = vdwg.mxu0
        %4137 = vmatpush.bf16.msra.mxu0 %v3794
        %4138 = vmatpush.bf16.msra.mxu0 %v3792
        %4139 = vmatpush.bf16.msra.mxu0 %v3790
        %4140 = vmatpush.bf16.msra.mxu0 %v3788
        %4141 = vmatpush.bf16.msra.mxu0 %v3786
        %4142 = vmatpush.bf16.msra.mxu0 %v3784
        %4143 = vmatpush.bf16.msra.mxu0 %v3782
        %4144 = vmatpush.bf16.msra.mxu0 %v3780
        %4145 = vmatmul.bf16.gmra.mxu0 %v3178
        %v4146 = vpop.f32.mrf.mxu0
        %v4147 = vadd.f32 %v4133, %v4146
        %v4148 = vpop.f32.mrf.mxu0
        %v4149 = vadd.f32 %v4135, %v4148
        %4150 = vdwg.mxu0
        %4151 = vmatpush.bf16.msra.mxu0 %v3810
        %4152 = vmatpush.bf16.msra.mxu0 %v3808
        %4153 = vmatpush.bf16.msra.mxu0 %v3806
        %4154 = vmatpush.bf16.msra.mxu0 %v3804
        %4155 = vmatpush.bf16.msra.mxu0 %v3802
        %4156 = vmatpush.bf16.msra.mxu0 %v3800
        %4157 = vmatpush.bf16.msra.mxu0 %v3798
        %4158 = vmatpush.bf16.msra.mxu0 %v3796
        %4159 = vmatmul.bf16.gmra.mxu0 %v3179
        %v4160 = vpop.f32.mrf.mxu0
        %v4161 = vadd.f32 %v4147, %v4160
        %v4162 = vpop.f32.mrf.mxu0
        %v4163 = vadd.f32 %v4149, %v4162
        %4164 = vdwg.mxu0
        %4165 = vmatpush.bf16.msra.mxu0 %v3826
        %4166 = vmatpush.bf16.msra.mxu0 %v3824
        %4167 = vmatpush.bf16.msra.mxu0 %v3822
        %4168 = vmatpush.bf16.msra.mxu0 %v3820
        %4169 = vmatpush.bf16.msra.mxu0 %v3818
        %4170 = vmatpush.bf16.msra.mxu0 %v3816
        %4171 = vmatpush.bf16.msra.mxu0 %v3814
        %4172 = vmatpush.bf16.msra.mxu0 %v3812
        %4173 = vmatmul.bf16.gmra.mxu0 %v3180
        %v4174 = vpop.f32.mrf.mxu0
        %v4175 = vadd.f32 %v4161, %v4174
        %v4176 = vpop.f32.mrf.mxu0
        %v4177 = vadd.f32 %v4163, %v4176
        %4178 = vdwg.mxu0
        %v4179 = vadd.f32 %v1943, %v4063
        %v4180 = vadd.f32 %v1944, %v4175
        %v4181 = vadd.f32 %v1945, %v4065
        %v4182 = vadd.f32 %v1946, %v4177
        %v4183 = vadd.f32 %v4179, %v4180
        %4184 = vadd.xlane.f32.xlu0 %v4183
        %v4185 = vpop.xlane.xlu0 %4184
        %v4186 = vadd.f32 %v4181, %v4182
        %4187 = vadd.xlane.f32.xlu0 %v4186
        %v4188 = vpop.xlane.xlu0 %4187
        %v4189 = vmul.f32 %v4185, %v637
        %v4190 = vmul.f32 %v4188, %v637
        %v4191 = vsub.f32 %v4179, %v4189
        %v4192 = vsub.f32 %v4180, %v4189
        %v4193 = vsub.f32 %v4181, %v4190
        %v4194 = vsub.f32 %v4182, %v4190
        %v4195 = vmul.f32 %v4191, %v4191
        %v4196 = vmul.f32 %v4192, %v4192
        %v4197 = vmul.f32 %v4193, %v4193
        %v4198 = vmul.f32 %v4194, %v4194
        %v4199 = vadd.f32 %v4195, %v4196
        %4200 = vadd.xlane.f32.xlu0 %v4199
        %v4201 = vpop.xlane.xlu0 %4200
        %v4202 = vadd.f32 %v4197, %v4198
        %4203 = vadd.xlane.f32.xlu0 %v4202
        %v4204 = vpop.xlane.xlu0 %4203
        %v4205 = vmul.f32 %v4201, %v637
        %v4206 = vmul.f32 %v4204, %v637
        %v4207 = vadd.f32 %v4205, 1e-05
        %v4208 = vadd.f32 %v4206, 1e-05
        %v4209 = vrsqrt.pop %v4207
        %v4210 = vmul.f32 %v4209, %v4207
        %v4211 = vmul.f32 %v4210, %v4209
        %v4212 = vmul.f32 0.5, %v4211
        %v4213 = vsub.f32 1.5, %v4212
        %v4214 = vmul.f32 %v4209, %v4213
        %vm4215 = vweird.f32 %v4207
        %vm4216 = vweird.f32 %v4209
        %vm4217 = vmor %vm4215, %vm4216
        %v4218 = vsel %vm4217, %v4209, %v4214
        %v4219 = vrsqrt.pop %v4208
        %v4220 = vmul.f32 %v4219, %v4208
        %v4221 = vmul.f32 %v4220, %v4219
        %v4222 = vmul.f32 0.5, %v4221
        %v4223 = vsub.f32 1.5, %v4222
        %v4224 = vmul.f32 %v4219, %v4223
        %vm4225 = vweird.f32 %v4208
        %vm4226 = vweird.f32 %v4219
        %vm4227 = vmor %vm4225, %vm4226
        %v4228 = vsel %vm4227, %v4219, %v4224
        %v4229 = vmul.f32 %v4191, %v4218
        %v4230 = vmul.f32 %v4192, %v4218
        %v4231 = vmul.f32 %v4193, %v4228
        %v4232 = vmul.f32 %v4194, %v4228
        %v4233 = vld [vmem:[%s16] sm:$0x3]
        %v4235 = vperm.slane %v4233, 0
        %v4236 = vperm.slane %v4233, 1
        %v4239 = vmul.f32 %v4229, %v4235
        %v4240 = vmul.f32 %v4230, %v4236
        %v4241 = vmul.f32 %v4231, %v4235
        %v4242 = vmul.f32 %v4232, %v4236
        %v4243 = vld [vmem:[%s17] sm:$0x3]
        %v4245 = vperm.slane %v4243, 0
        %v4246 = vperm.slane %v4243, 1
        %v4249 = vadd.f32 %v4239, %v4245
        %v4250 = vadd.f32 %v4240, %v4246
        %v4251 = vadd.f32 %v4241, %v4245
        %v4252 = vadd.f32 %v4242, %v4246
        %v4254 = vsel %vm1486, %v624, 0
        %4256 = vmatpush.msra.mxu0 0.0
        %4257 = vmatpush.msra.mxu0 0.0
        %4258 = vmatpush.msra.mxu0 0.0
        %4259 = vmatpush.msra.mxu0 0.0
        %4260 = vmatpush.msra.mxu0 0.0
        %4261 = vmatpush.msra.mxu0 0.0
        %4262 = vmatpush.msra.mxu0 0.0
        %4263 = vmatpush.msra.mxu0 0.0
        %4264 = vmatpush.msra.mxu0 0.0
        %4265 = vmatpush.msra.mxu0 0.0
        %4266 = vmatpush.msra.mxu0 0.0
        %4267 = vmatpush.msra.mxu0 0.0
        %4268 = vmatpush.msra.mxu0 0.0
        %4269 = vmatpush.msra.mxu0 0.0
        %4270 = vmatpush.msra.mxu0 0.0
        %4271 = vmatpush.msra.mxu0 %v4249
        %4272 = vmatmul.f32.gmra.mxu0 %v4254
        %v4273 = vpop.f32.mrf.mxu0
        %v4274 = vadd.f32 0.0, %v4273
        %4275 = vdwg.mxu0
        %4276 = vmatpush.msra.mxu0 0.0
        %4277 = vmatpush.msra.mxu0 0.0
        %4278 = vmatpush.msra.mxu0 0.0
        %4279 = vmatpush.msra.mxu0 0.0
        %4280 = vmatpush.msra.mxu0 0.0
        %4281 = vmatpush.msra.mxu0 0.0
        %4282 = vmatpush.msra.mxu0 0.0
        %4283 = vmatpush.msra.mxu0 0.0
        %4284 = vmatpush.msra.mxu0 0.0
        %4285 = vmatpush.msra.mxu0 0.0
        %4286 = vmatpush.msra.mxu0 0.0
        %4287 = vmatpush.msra.mxu0 0.0
        %4288 = vmatpush.msra.mxu0 0.0
        %4289 = vmatpush.msra.mxu0 0.0
        %4290 = vmatpush.msra.mxu0 0.0
        %4291 = vmatpush.msra.mxu0 %v4250
        %4292 = vmatmul.f32.gmra.mxu0 %v4254
        %v4293 = vpop.f32.mrf.mxu0
        %v4294 = vadd.f32 0.0, %v4293
        %4295 = vdwg.mxu0
        %v4298 = vrot.slane %v4294, 4
        %v4299 = vsel %vm1502, %v4274, %v4298
        %4301 = vst [vmem:[%s602] sm:$0xff] %v4299
        %4302 = vmatpush.msra.mxu0 0.0
        %4303 = vmatpush.msra.mxu0 0.0
        %4304 = vmatpush.msra.mxu0 0.0
        %4305 = vmatpush.msra.mxu0 0.0
        %4306 = vmatpush.msra.mxu0 0.0
        %4307 = vmatpush.msra.mxu0 0.0
        %4308 = vmatpush.msra.mxu0 0.0
        %4309 = vmatpush.msra.mxu0 0.0
        %4310 = vmatpush.msra.mxu0 0.0
        %4311 = vmatpush.msra.mxu0 0.0
        %4312 = vmatpush.msra.mxu0 0.0
        %4313 = vmatpush.msra.mxu0 0.0
        %4314 = vmatpush.msra.mxu0 0.0
        %4315 = vmatpush.msra.mxu0 0.0
        %4316 = vmatpush.msra.mxu0 0.0
        %4317 = vmatpush.msra.mxu0 %v4251
        %4318 = vmatmul.f32.gmra.mxu0 %v4254
        %v4319 = vpop.f32.mrf.mxu0
        %v4320 = vadd.f32 0.0, %v4319
        %4321 = vdwg.mxu0
        %4322 = vmatpush.msra.mxu0 0.0
        %4323 = vmatpush.msra.mxu0 0.0
        %4324 = vmatpush.msra.mxu0 0.0
        %4325 = vmatpush.msra.mxu0 0.0
        %4326 = vmatpush.msra.mxu0 0.0
        %4327 = vmatpush.msra.mxu0 0.0
        %4328 = vmatpush.msra.mxu0 0.0
        %4329 = vmatpush.msra.mxu0 0.0
        %4330 = vmatpush.msra.mxu0 0.0
        %4331 = vmatpush.msra.mxu0 0.0
        %4332 = vmatpush.msra.mxu0 0.0
        %4333 = vmatpush.msra.mxu0 0.0
        %4334 = vmatpush.msra.mxu0 0.0
        %4335 = vmatpush.msra.mxu0 0.0
        %4336 = vmatpush.msra.mxu0 0.0
        %4337 = vmatpush.msra.mxu0 %v4252
        %4338 = vmatmul.f32.gmra.mxu0 %v4254
        %v4339 = vpop.f32.mrf.mxu0
        %v4340 = vadd.f32 0.0, %v4339
        %4341 = vdwg.mxu0
        %v4344 = vrot.slane %v4340, 4
        %v4345 = vsel %vm1502, %v4320, %v4344
        %s4347 = scalar_lea.vmem %s602, 8 [#allocation6]
        %4348 = vst [vmem:[%s4347] sm:$0xff] %v4345
        %s4349 = sand.u32 %s429, 1
        %s4350 = scalar_lea.sflag [#allocation5], %s4349
        %s4351 = sand.u32 %s429, 1
        %s4352 = smul.addr %s4351, 16
        %s4353 = scalar_lea.vmem [#allocation6], %s4352
        // Predicated region
        $region97: #{feature_extractor_forward.1} parent=91 // pred_check
          %p4354 = pneg %p439
        $region98: #{feature_extractor_forward.1} parent=91 // pred_check_branch
          %4356 = sbr.rel (%p4354) target = $region100
        $region99: #{feature_extractor_forward.1} parent=91 // pred_region
          %s4357 = smul.u32 2, %s33
          %4359 = vsyncadd %s4350, 0
          %s4360 = smul.addr %s4357, 2
          %s4361 = smul.addr %s4360, 4
          %s4362 = scalar_lea.hbm %s18, %s4361
          %s4363 = sshll.u32 %s4353, 4
          %s4364 = int_to_ptr.vmem [resolvable:$true] %s4363
          %s4365 = sshll.u32 %s4362, 4
          %s4366 = int_to_ptr.hbm [resolvable:$true] %s4365
          %4371 = dma.vmem_to_hbm [thread:$0]  %s4364, 256, %s4366, %s4350, 128, 128, 8
        $region100: #{feature_extractor_forward.1} parent=91 // pred_fallthru
          _
      $region92: #{feature_extractor_forward.1} parent=5 // pred_fallthru
        _
      %p4372 = scmp.le.s32.totalorder 2, %s28
      // Predicated region
      $region101: #{feature_extractor_forward.1} parent=5 // pred_check
        %p4373 = pneg %p4372
      $region102: #{feature_extractor_forward.1} parent=5 // pred_check_branch
        %4375 = sbr.rel (%p4373) target = $region104
      $region103: #{feature_extractor_forward.1} parent=5 // pred_region
        %s4376 = ssub.s32 %s28, 2
        // Predicated region
        $region105: #{feature_extractor_forward.1} parent=103 // pred_check
          %p4377 = pneg %p445
        $region106: #{feature_extractor_forward.1} parent=103 // pred_check_branch
          %4379 = sbr.rel (%p4377) target = $region108
        $region107: #{feature_extractor_forward.1} parent=103 // pred_region
          %s4380 = sand.u32 %s430, 1
          %s4381 = scalar_lea.sflag [#allocation5], %s4380
          %s4382 = sand.u32 %s430, 1
          %s4383 = smul.addr %s4382, 16
          %s4384 = scalar_lea.vmem [#allocation6], %s4383
          %4386 = dma.done %s4381, 256
        $region108: #{feature_extractor_forward.1} parent=103 // pred_fallthru
          _
      $region104: #{feature_extractor_forward.1} parent=5 // pred_fallthru
        _
    $region6: #{feature_extractor_forward.1} parent=1 // loop_footer
      %s32 = sadd.s32 1, %s28
    $region7: #{feature_extractor_forward.1} parent=1 // loop_footer_branch
      %27 = sbr.rel target = $region3
    $region8: #{feature_extractor_forward.1} parent=1 // loop_exit
      _
    %4387 = vsyncpa [#allocation4], 1
    %s4388 = scalar_lea.sflag [#allocation4], 1
    %4389 = vsyncpa %s4388, 1
    %4390 = vsyncpa [#allocation5], 1
    %s4391 = scalar_lea.sflag [#allocation5], 1
    %4392 = vsyncpa %s4391, 1

</llo_original>
